<compile_context>
chip_gen: v6e
topology: v6e:2x2x1
jax: 0.10.0
libtpu: 0.0.40
codegen_flags: <defaults>
</compile_context>

<pallas_src>
import functools
import math

import jax
import jax.numpy as jnp
from jax import lax
from jax.experimental import pallas as pl
from jax.experimental.pallas import tpu as pltpu


# ----------------------------- helpers ---------------------------------------
def _rms_norm(x, scale, eps=1e-6):
    x32 = x.astype(jnp.float32)
    inv = lax.rsqrt(jnp.mean(x32 * x32, axis=-1, keepdims=True) + eps)
    return (x32 * inv) * scale


def _softmax_rows(s):
    s = s - jnp.max(s, axis=-1, keepdims=True)
    e = jnp.exp(s)
    return e * pl.reciprocal(jnp.sum(e, axis=-1, keepdims=True), approx=True)


# ----------------------------- Pallas kernel ----------------------------------
def transformer_block_kernel(
    lam_ref,    # SMEM (2,) f32 : [lambda_full, lambda_init]
    x_ref,      # VMEM (T, C)        full sequence for this batch row
    wq_ref,     # VMEM (nh, C, hd2)  bf16  per-head [q1|q2] proj (pre-scaled 1/sqrt(h_dim))
    wk_ref,     # VMEM (nh, C, hd2)  bf16  per-head [k1|k2] proj
    wv_ref,     # VMEM (nh, C, hd2)  bf16  per-head v proj
    wproj_ref,  # VMEM (nh, hd2, C)  bf16  per-head output proj rows
    rms1_ref,   # VMEM (1, C)   f32
    rmsh_ref,   # VMEM (1, hd2) f32
    rms2_ref,   # VMEM (1, C)   f32
    w13_ref,    # VMEM (C, 2H)  bf16  [w1 | w3]
    w2_ref,     # VMEM (H, C)   bf16
    out_ref,    # VMEM (TQ, C)
    k_scr,      # VMEM scratch (nh, T, hd2) bf16  (persists across qi steps)
    v_scr,      # VMEM scratch (nh, T, hd2) bf16
    *,
    n_head: int,
    h_dim: int,
    tq: int,
):
    T, C = x_ref.shape
    H = w2_ref.shape[0]
    qi = pl.program_id(1)

    # ---- K/V projection once per batch row (qi is the inner sequential axis) ----
    @pl.when(qi == 0)
    def _():
        xf_n = _rms_norm(x_ref[...], rms1_ref[...]).astype(jnp.bfloat16)      # (T, C)

        def kv_body(h, carry):
            k_scr[h] = jnp.dot(xf_n, wk_ref[h],
                               preferred_element_type=jnp.float32).astype(jnp.bfloat16)
            v_scr[h] = jnp.dot(xf_n, wv_ref[h],
                               preferred_element_type=jnp.float32).astype(jnp.bfloat16)
            return carry

        lax.fori_loop(0, n_head, kv_body, 0)

    # ---- per query-tile ----
    lam_full = lam_ref[0]
    post_scale = 1.0 - lam_ref[1]

    row0 = pl.multiple_of(qi * tq, tq)
    xq = x_ref[pl.ds(row0, tq), :].astype(jnp.float32)           # (TQ, C) residual source
    xq_n = _rms_norm(xq, rms1_ref[...]).astype(jnp.bfloat16)

    def head_body(h, y):
        # per-head Q projection (softmax scale already folded into wq)
        qh = jnp.dot(xq_n, wq_ref[h],
                     preferred_element_type=jnp.float32).astype(jnp.bfloat16)  # (TQ, hd2)
        kh = k_scr[h]                                                          # (T, hd2)
        s1 = lax.dot_general(qh[:, :h_dim], kh[:, :h_dim],
                             (((1,), (1,)), ((), ())),
                             preferred_element_type=jnp.float32)               # (TQ, T)
        s2 = lax.dot_general(qh[:, h_dim:], kh[:, h_dim:],
                             (((1,), (1,)), ((), ())),
                             preferred_element_type=jnp.float32)
        # fused differential probabilities -> single PV matmul
        p = _softmax_rows(s1) - lam_full * _softmax_rows(s2)
        a = jnp.dot(p.astype(jnp.bfloat16), v_scr[h],
                    preferred_element_type=jnp.float32)                        # (TQ, hd2)
        a = (_rms_norm(a, rmsh_ref[...]) * post_scale).astype(jnp.bfloat16)
        # per-head output-projection contribution (no (TQ,C) attn concat needed)
        return y + jnp.dot(a, wproj_ref[h], preferred_element_type=jnp.float32)

    y = lax.fori_loop(0, n_head, head_body, jnp.zeros((tq, C), jnp.float32))

    x1 = xq + y                                                  # first residual (f32)

    # normed MLP: RMSNorm + SwiGLU, fused w1||w3 projection
    xm = _rms_norm(x1, rms2_ref[...]).astype(jnp.bfloat16)
    h13 = jnp.dot(xm, w13_ref[...], preferred_element_type=jnp.float32)        # (TQ, 2H)
    h1 = h13[:, :H]
    h3 = h13[:, H:]
    g = (h1 * jax.nn.sigmoid(h1)) * h3
    mlp = jnp.dot(g.astype(jnp.bfloat16), w2_ref[...],
                  preferred_element_type=jnp.float32)

    out_ref[...] = (x1 + mlp).astype(out_ref.dtype)


# ------------------------------- wrapper --------------------------------------
def _vmem_capacity_bytes():
    try:
        cap = getattr(pltpu.get_tpu_info(), "vmem_capacity_bytes", None)
        if cap:
            return int(cap)
    except Exception:
        pass
    return 64 << 20          # conservative fallback (v7x per-core VMEM)


def _pick_tq(T, q_tile):
    hi = min(q_tile, T)
    for cand in range(hi, 7, -1):
        if T % cand == 0 and cand % 8 == 0:      # (8,128) sublane constraint on out block
            return cand
    return T                                      # awkward T: one full-length tile


def _vmem_limit_bytes(T, TQ, C, H, n_head, hd2, x_itemsize, weight_buffers, cap):
    bf16, f32 = 2, 4
    pad = lambda n, m: ((n + m - 1) // m) * m
    weights = (4 * C * C + 3 * C * H) * bf16 * weight_buffers    # wq+wk+wv+wproj, w13+w2
    scales = (2 * C + hd2) * f32 * 2
    x_blk = T * C * x_itemsize * 2                                # double-buffered
    out_blk = TQ * C * x_itemsize * 2
    kv_scr = 2 * n_head * pad(T, 16) * pad(hd2, 128) * bf16
    kv_tmp = T * C * bf16 + 2 * pad(T, 8) * pad(hd2, 128) * f32   # qi==0 temporaries
    step_tmp = (4 * TQ * T + 4 * TQ * C + 3 * TQ * H) * f32       # one head live at a time
    est = weights + scales + x_blk + out_blk + kv_scr + kv_tmp + step_tmp
    return max(32 << 20, min(int(1.25 * est) + (4 << 20), int(0.9 * cap)))


def prepare_params(params):
    """One-time weight cast / permutation for the kernel; cache and reuse across calls."""
    C = params["wqkv"].shape[0]
    n_head = int(params["n_head"])
    h_dim = int(params["h_dim"])
    hd2 = 2 * h_dim
    H = int(params["w1"].shape[1])

    wqkv = params["wqkv"].astype(jnp.float32)
    wq = wqkv[:, :C] * (1.0 / math.sqrt(h_dim))   # fold softmax scale into wq
    wk = wqkv[:, C:2 * C]
    wv = wqkv[:, 2 * C:]

    def qk_heads(w):
        # columns [grp0(head0..), grp1(head0..)] -> (n_head, C, 2*h_dim), head h = [grp0_h | grp1_h]
        w = w.reshape(C, 2, n_head, h_dim)
        return jnp.transpose(w, (2, 0, 1, 3)).reshape(n_head, C, hd2)

    wq_h = qk_heads(wq).astype(jnp.bfloat16)
    wk_h = qk_heads(wk).astype(jnp.bfloat16)
    wv_h = jnp.transpose(wv.reshape(C, n_head, hd2), (1, 0, 2)).astype(jnp.bfloat16)
    wproj_h = params["wproj"].astype(jnp.float32).reshape(n_head, hd2, C).astype(jnp.bfloat16)

    w13 = jnp.concatenate([params["w1"], params["w3"]], axis=1).astype(jnp.bfloat16)
    w2 = params["w2"].astype(jnp.bfloat16)

    lam_full = (jnp.exp(jnp.sum(params["lambda_q1"] * params["lambda_k1"]))
                - jnp.exp(jnp.sum(params["lambda_q2"] * params["lambda_k2"]))
                + params["lambda_init"])
    lam = jnp.stack([lam_full, jnp.float32(params["lambda_init"])]).astype(jnp.float32)

    return {
        "n_head": n_head, "h_dim": h_dim, "C": int(C), "H": H, "lam": lam,
        "wq": wq_h, "wk": wk_h, "wv": wv_h, "wproj": wproj_h,
        "rms1": params["rms1_scale"].astype(jnp.float32),
        "rmsh": params["rmsh_scale"].astype(jnp.float32),
        "rms2": params["rms2_scale"].astype(jnp.float32),
        "w13": w13, "w2": w2,
    }


def transformer_block(x, prep, *, q_tile=None):
    B, T, C = x.shape
    n_head, h_dim, H = prep["n_head"], prep["h_dim"], prep["H"]
    hd2 = 2 * h_dim
    assert C == prep["C"]

    cap = _vmem_capacity_bytes()
    if q_tile is None:
        q_tile = 256 if cap <= (64 << 20) else 512    # smaller TQ on 64 MiB parts (v7x)
    TQ = _pick_tq(T, q_tile)
    grid = (B, T // TQ)

    kernel = functools.partial(transformer_block_kernel,
                               n_head=n_head, h_dim=h_dim, tq=TQ)

    def build(single_buffer_weights):
        def w_spec(shape):
            idx = lambda b, qi: (0,) * len(shape)
            if single_buffer_weights:
                # constant across the grid -> a single resident VMEM copy
                return pl.BlockSpec(shape, idx, pipeline_mode=pl.Buffered(1))
            return pl.BlockSpec(shape, idx)

        vmem_bytes = _vmem_limit_bytes(
            T, TQ, C, H, n_head, hd2, x.dtype.itemsize,
            weight_buffers=1 if single_buffer_weights else 2, cap=cap)

        return pl.pallas_call(
            kernel,
            out_shape=jax.ShapeDtypeStruct((B, T, C), x.dtype),
            grid=grid,
            in_specs=[
                pl.BlockSpec(memory_space=pltpu.MemorySpace.SMEM),      # lam scalars
                pl.BlockSpec((None, T, C), lambda b, qi: (b, 0, 0)),    # x (full sequence)
                w_spec((n_head, C, hd2)),                               # wq (head-major)
                w_spec((n_head, C, hd2)),                               # wk
                w_spec((n_head, C, hd2)),                               # wv
                w_spec((n_head, hd2, C)),                               # wproj
                pl.BlockSpec((1, C), lambda b, qi: (0, 0)),             # rms1 scale
                pl.BlockSpec((1, hd2), lambda b, qi: (0, 0)),           # rms_head scale
                pl.BlockSpec((1, C), lambda b, qi: (0, 0)),             # rms2 scale
                w_spec((C, 2 * H)),                                     # w1 || w3
                w_spec((H, C)),                                         # w2
            ],
            out_specs=pl.BlockSpec((None, TQ, C), lambda b, qi: (b, qi, 0)),
            scratch_shapes=[pltpu.VMEM((n_head, T, hd2), jnp.bfloat16),   # K scratch
                            pltpu.VMEM((n_head, T, hd2), jnp.bfloat16)],  # V scratch
            compiler_params=pltpu.CompilerParams(
                # B parallel (megacore shards on B), qi sequential so the
                # qi==0 KV-recompute guard is always seen first per batch row.
                dimension_semantics=("parallel", "arbitrary"),
                vmem_limit_bytes=vmem_bytes),
        )

    args = (prep["lam"], x, prep["wq"], prep["wk"], prep["wv"], prep["wproj"],
            prep["rms1"], prep["rmsh"], prep["rms2"], prep["w13"], prep["w2"])
    try:
        return build(True)(*args)
    except Exception:
        # pl.Buffered(1) (single resident weight copy) may be unsupported in
        # some jax/Mosaic builds; retry once with default double-buffered
        # weights and a correspondingly larger VMEM limit.  Any genuine error
        # will re-raise from this second build.
        return build(False)(*args)


# --------------------------- pure-JAX reference (f32) --------------------------
def reference_block(x, p):
    eps = 1e-6

    def rms(v, s):
        v32 = v.astype(jnp.float32)
        return v32 * lax.rsqrt(jnp.mean(v32 * v32, -1, keepdims=True) + eps) * s

    B, T, C = x.shape
    nh, hd = p["n_head"], p["h_dim"]
    xn = rms(x, p["rms1_scale"][0])
    qkv = xn @ p["wqkv"]
    q, k, v = qkv[..., :C], qkv[..., C:2 * C], qkv[..., 2 * C:]
    q = q.reshape(B, T, 2 * nh, hd).transpose(0, 2, 1, 3)
    k = k.reshape(B, T, 2 * nh, hd).transpose(0, 2, 1, 3)
    v = v.reshape(B, T, nh, 2 * hd).transpose(0, 2, 1, 3)
    q1, q2 = q[:, :nh], q[:, nh:]
    k1, k2 = k[:, :nh], k[:, nh:]

    def sdpa(qh, kh, vh):
        s = jnp.einsum("bhtd,bhsd->bhts", qh, kh) / math.sqrt(hd)
        pr = jax.nn.softmax(s, axis=-1)
        return jnp.einsum("bhts,bhsd->bhtd", pr, vh)

    a1 = sdpa(q1, k1, v)
    a2 = sdpa(q2, k2, v)
    lam_full = (jnp.exp(jnp.sum(p["lambda_q1"] * p["lambda_k1"]))
                - jnp.exp(jnp.sum(p["lambda_q2"] * p["lambda_k2"]))
                + p["lambda_init"])
    a = a1 - lam_full * a2
    a = rms(a, p["rmsh_scale"][0]) * (1.0 - p["lambda_init"])
    a = a.transpose(0, 2, 1, 3).reshape(B, T, C)
    x1 = x + a @ p["wproj"]
    xm = rms(x1, p["rms2_scale"][0])
    h1 = xm @ p["w1"]
    h3 = xm @ p["w3"]
    mlp = (h1 * jax.nn.sigmoid(h1) * h3) @ p["w2"]
    return x1 + mlp


# ------------------------------ main / test -------------------------------------
def make_params(key, n_dim, n_head, depth=0):
    C_per_head = n_dim // n_head
    h_dim = C_per_head // 2
    H = 4 * n_dim
    ks = jax.random.split(key, 12)

    def w(k, shape, scale=0.1):
        return (scale * jax.random.normal(k, shape)).astype(jnp.float32)

    lambda_init = 0.8 - 0.6 * math.exp(-0.3 * depth)
    return {
        "n_head": n_head,
        "h_dim": h_dim,
        "lambda_init": lambda_init,
        "wqkv": w(ks[0], (n_dim, 3 * n_dim)),
        "wproj": w(ks[1], (n_dim, n_dim)),
        "rms1_scale": (1.0 + 0.05 * jax.random.normal(ks[2], (1, n_dim))).astype(jnp.float32),
        "rmsh_scale": (1.0 + 0.05 * jax.random.normal(ks[3], (1, 2 * h_dim))).astype(jnp.float32),
        "rms2_scale": (1.0 + 0.05 * jax.random.normal(ks[4], (1, n_dim))).astype(jnp.float32),
        "w1": w(ks[5], (n_dim, H)),
        "w3": w(ks[6], (n_dim, H)),
        "w2": w(ks[7], (H, n_dim)),
        "lambda_q1": w(ks[8], (h_dim,)),
        "lambda_k1": w(ks[9], (h_dim,)),
        "lambda_q2": w(ks[10], (h_dim,)),
        "lambda_k2": w(ks[11], (h_dim,)),
    }


if __name__ == "__main__":
    B, T = 2, 8
    n_dim, n_head = 32, 4          # -> per-head C=8, h_dim=4 (even, as the config requires)

    key = jax.random.PRNGKey(0)
    kx, kp = jax.random.split(key)
    x = jax.random.normal(kx, (B, T, n_dim), dtype=jnp.float32)
    params = make_params(kp, n_dim, n_head, depth=0)

    prep = prepare_params(params)   # one-time weight cast/permute; reuse across calls
    out = jax.block_until_ready(transformer_block(x, prep))
    ref = jax.block_until_ready(reference_block(x, params))

    assert out.shape == (B, T, n_dim)
    # kernel uses bf16 MXU operands (f32 accumulation) -> loosened tolerance
    max_err = float(jnp.max(jnp.abs(out - ref)))
    rel_err = float(jnp.linalg.norm(out - ref) / jnp.linalg.norm(ref))
    assert max_err < 0.15 and rel_err < 0.03, f"mismatch vs reference: max={max_err}, rel={rel_err}"
    print("KERNEL_OK")
</pallas_src>

<mosaic_0001>
module attributes {stable_mosaic.version = 11 : i64} {
  func.func @transformer_block_kernel(%arg0: i32, %arg1: i32, %arg2: memref<2xf32, #tpu.memory_space<smem>>, %arg3: memref<1x8x32xf32, #tpu.memory_space<vmem>>, %arg4: memref<4x32x8xbf16, #tpu.memory_space<vmem>>, %arg5: memref<4x32x8xbf16, #tpu.memory_space<vmem>>, %arg6: memref<4x32x8xbf16, #tpu.memory_space<vmem>>, %arg7: memref<4x8x32xbf16, #tpu.memory_space<vmem>>, %arg8: memref<1x32xf32, #tpu.memory_space<vmem>>, %arg9: memref<1x8xf32, #tpu.memory_space<vmem>>, %arg10: memref<1x32xf32, #tpu.memory_space<vmem>>, %arg11: memref<32x256xbf16, #tpu.memory_space<vmem>>, %arg12: memref<128x32xbf16, #tpu.memory_space<vmem>>, %arg13: memref<1x8x32xf32, #tpu.memory_space<vmem>>, %arg14: memref<4x8x8xbf16, #tpu.memory_space<vmem>>, %arg15: memref<4x8x8xbf16, #tpu.memory_space<vmem>>) attributes {dimension_semantics = [#tpu.dimension_semantics<parallel>, #tpu.dimension_semantics<arbitrary>], iteration_bounds = array<i64: 2, 1>, scalar_prefetch = 0 : i64, scratch_operands = 2 : i64, tpu.core_type = #tpu.core_type<tc>, window_params = [{transform_indices = @transform_0, window_bounds = array<i64: 2>}, {transform_indices = @transform_1, window_bounds = array<i64: 1, 8, 32>}, {pipeline_mode = #tpu.pipeline_mode<synchronous>, transform_indices = @transform_2, window_bounds = array<i64: 4, 32, 8>}, {pipeline_mode = #tpu.pipeline_mode<synchronous>, transform_indices = @transform_3, window_bounds = array<i64: 4, 32, 8>}, {pipeline_mode = #tpu.pipeline_mode<synchronous>, transform_indices = @transform_4, window_bounds = array<i64: 4, 32, 8>}, {pipeline_mode = #tpu.pipeline_mode<synchronous>, transform_indices = @transform_5, window_bounds = array<i64: 4, 8, 32>}, {pipeline_mode = #tpu.pipeline_mode<synchronous>, transform_indices = @transform_6, window_bounds = array<i64: 1, 32>}, {pipeline_mode = #tpu.pipeline_mode<synchronous>, transform_indices = @transform_7, window_bounds = array<i64: 1, 8>}, {pipeline_mode = #tpu.pipeline_mode<synchronous>, transform_indices = @transform_8, window_bounds = array<i64: 1, 32>}, {pipeline_mode = #tpu.pipeline_mode<synchronous>, transform_indices = @transform_9, window_bounds = array<i64: 32, 256>}, {pipeline_mode = #tpu.pipeline_mode<synchronous>, transform_indices = @transform_10, window_bounds = array<i64: 128, 32>}, {transform_indices = @transform_11, window_bounds = array<i64: 1, 8, 32>}]} {
    %c0_i32 = arith.constant 0 : i32
    %0 = arith.cmpi eq, %arg1, %c0_i32 : i32
    %1 = arith.extui %0 : i1 to i32
    %c0_i32_0 = arith.constant 0 : i32
    %2 = arith.cmpi ne, %1, %c0_i32_0 : i32
    scf.if %2 {
      %c0_26 = arith.constant 0 : index
      %c0_27 = arith.constant 0 : index
      %c0_28 = arith.constant 0 : index
      %61 = vector.load %arg3[%c0_26, %c0_27, %c0_28] : memref<1x8x32xf32, #tpu.memory_space<vmem>>, vector<1x8x32xf32>
      %62 = vector.shape_cast %61 : vector<1x8x32xf32> to vector<8x32xf32>
      %c0_29 = arith.constant 0 : index
      %c0_30 = arith.constant 0 : index
      %63 = vector.load %arg8[%c0_29, %c0_30] : memref<1x32xf32, #tpu.memory_space<vmem>>, vector<1x32xf32>
      %64 = arith.mulf %62, %62 : vector<8x32xf32>
      %cst_31 = arith.constant dense<0.000000e+00> : vector<8xf32>
      %65 = vector.multi_reduction <add>, %64, %cst_31 [1] : vector<8x32xf32> to vector<8xf32>
      %66 = vector.shape_cast %65 : vector<8xf32> to vector<8x1xf32>
      %cst_32 = arith.constant 3.200000e+01 : f32
      %67 = vector.broadcast %cst_32 : f32 to vector<8x1xf32>
      %68 = arith.divf %66, %67 : vector<8x1xf32>
      %cst_33 = arith.constant 9.99999997E-7 : f32
      %69 = vector.broadcast %cst_33 : f32 to vector<8x1xf32>
      %70 = arith.addf %68, %69 : vector<8x1xf32>
      %71 = math.rsqrt %70 : vector<8x1xf32>
      %72 = vector.broadcast %71 : vector<8x1xf32> to vector<8x32xf32>
      %73 = arith.mulf %62, %72 : vector<8x32xf32>
      %74 = vector.broadcast %63 : vector<1x32xf32> to vector<8x32xf32>
      %75 = arith.mulf %73, %74 : vector<8x32xf32>
      %76 = arith.truncf %75 : vector<8x32xf32> to vector<8x32xbf16>
      %c0_i32_34 = arith.constant 0 : i32
      %c4_i32_35 = arith.constant 4 : i32
      %77 = arith.addi %c0_i32_34, %c4_i32_35 : i32
      %c1_i32_36 = arith.constant 1 : i32
      scf.for %arg16 = %c0_i32_34 to %77 step %c1_i32_36  : i32 {
        %78 = arith.index_cast %arg16 : i32 to index
        %c0_38 = arith.constant 0 : index
        %c0_39 = arith.constant 0 : index
        %79 = vector.load %arg5[%78, %c0_38, %c0_39] : memref<4x32x8xbf16, #tpu.memory_space<vmem>>, vector<1x32x8xbf16>
        %80 = vector.shape_cast %79 : vector<1x32x8xbf16> to vector<32x8xbf16>
        %cst_40 = arith.constant dense<0.000000e+00> : vector<8x8xf32>
        %81 = tpu.matmul %76, %80, %cst_40 {dimension_numbers = #tpu.dot_dimension_numbers<[1], [0], [0], [1], [0, 0, 1, 1], [], []>} : vector<8x32xbf16>, vector<32x8xbf16>, vector<8x8xf32> -> vector<8x8xf32>
        %82 = arith.truncf %81 : vector<8x8xf32> to vector<8x8xbf16>
        %83 = arith.index_cast %arg16 : i32 to index
        %c0_41 = arith.constant 0 : index
        %c0_42 = arith.constant 0 : index
        %84 = vector.load %arg14[%83, %c0_41, %c0_42] : memref<4x8x8xbf16, #tpu.memory_space<vmem>>, vector<1x8x8xbf16>
        %85 = vector.shape_cast %84 : vector<1x8x8xbf16> to vector<8x8xbf16>
        %86 = vector.shape_cast %82 : vector<8x8xbf16> to vector<1x8x8xbf16>
        tpu.vector_store %arg14[%83, %c0_41, %c0_42], %86 {strides = array<i32>} : memref<4x8x8xbf16, #tpu.memory_space<vmem>>, vector<1x8x8xbf16>,
        %87 = arith.index_cast %arg16 : i32 to index
        %c0_43 = arith.constant 0 : index
        %c0_44 = arith.constant 0 : index
        %88 = vector.load %arg6[%87, %c0_43, %c0_44] : memref<4x32x8xbf16, #tpu.memory_space<vmem>>, vector<1x32x8xbf16>
        %89 = vector.shape_cast %88 : vector<1x32x8xbf16> to vector<32x8xbf16>
        %cst_45 = arith.constant dense<0.000000e+00> : vector<8x8xf32>
        %90 = tpu.matmul %76, %89, %cst_45 {dimension_numbers = #tpu.dot_dimension_numbers<[1], [0], [0], [1], [0, 0, 1, 1], [], []>} : vector<8x32xbf16>, vector<32x8xbf16>, vector<8x8xf32> -> vector<8x8xf32>
        %91 = arith.truncf %90 : vector<8x8xf32> to vector<8x8xbf16>
        %92 = arith.index_cast %arg16 : i32 to index
        %c0_46 = arith.constant 0 : index
        %c0_47 = arith.constant 0 : index
        %93 = vector.load %arg15[%92, %c0_46, %c0_47] : memref<4x8x8xbf16, #tpu.memory_space<vmem>>, vector<1x8x8xbf16>
        %94 = vector.shape_cast %93 : vector<1x8x8xbf16> to vector<8x8xbf16>
        %95 = vector.shape_cast %91 : vector<8x8xbf16> to vector<1x8x8xbf16>
        tpu.vector_store %arg15[%92, %c0_46, %c0_47], %95 {strides = array<i32>} : memref<4x8x8xbf16, #tpu.memory_space<vmem>>, vector<1x8x8xbf16>,
      }
      %c4_i32_37 = arith.constant 4 : i32
    } else {
    }
    %c0 = arith.constant 0 : index
    %3 = memref.load %arg2[%c0] : memref<2xf32, #tpu.memory_space<smem>>
    %c1 = arith.constant 1 : index
    %4 = memref.load %arg2[%c1] : memref<2xf32, #tpu.memory_space<smem>>
    %cst = arith.constant 1.000000e+00 : f32
    %5 = arith.subf %cst, %4 : f32
    %c8_i32 = arith.constant 8 : i32
    %6 = arith.muli %arg1, %c8_i32 : i32
    %7 = tpu.assume_multiple %6, 8 : i32
    %c0_1 = arith.constant 0 : index
    %8 = arith.index_cast %7 : i32 to index
    %c0_2 = arith.constant 0 : index
    %9 = vector.load %arg3[%c0_1, %8, %c0_2] : memref<1x8x32xf32, #tpu.memory_space<vmem>>, vector<1x8x32xf32>
    %10 = vector.shape_cast %9 : vector<1x8x32xf32> to vector<8x32xf32>
    %c0_3 = arith.constant 0 : index
    %c0_4 = arith.constant 0 : index
    %11 = vector.load %arg8[%c0_3, %c0_4] : memref<1x32xf32, #tpu.memory_space<vmem>>, vector<1x32xf32>
    %12 = arith.mulf %10, %10 : vector<8x32xf32>
    %cst_5 = arith.constant dense<0.000000e+00> : vector<8xf32>
    %13 = vector.multi_reduction <add>, %12, %cst_5 [1] : vector<8x32xf32> to vector<8xf32>
    %14 = vector.shape_cast %13 : vector<8xf32> to vector<8x1xf32>
    %cst_6 = arith.constant 3.200000e+01 : f32
    %15 = vector.broadcast %cst_6 : f32 to vector<8x1xf32>
    %16 = arith.divf %14, %15 : vector<8x1xf32>
    %cst_7 = arith.constant 9.99999997E-7 : f32
    %17 = vector.broadcast %cst_7 : f32 to vector<8x1xf32>
    %18 = arith.addf %16, %17 : vector<8x1xf32>
    %19 = math.rsqrt %18 : vector<8x1xf32>
    %20 = vector.broadcast %19 : vector<8x1xf32> to vector<8x32xf32>
    %21 = arith.mulf %10, %20 : vector<8x32xf32>
    %22 = vector.broadcast %11 : vector<1x32xf32> to vector<8x32xf32>
    %23 = arith.mulf %21, %22 : vector<8x32xf32>
    %24 = arith.truncf %23 : vector<8x32xf32> to vector<8x32xbf16>
    %cst_8 = arith.constant 0.000000e+00 : f32
    %25 = vector.broadcast %cst_8 : f32 to vector<8x32xf32>
    %c0_i32_9 = arith.constant 0 : i32
    %c4_i32 = arith.constant 4 : i32
    %26 = arith.addi %c0_i32_9, %c4_i32 : i32
    %c1_i32 = arith.constant 1 : i32
    %27 = scf.for %arg16 = %c0_i32_9 to %26 step %c1_i32 iter_args(%arg17 = %25) -> (vector<8x32xf32>)  : i32 {
      %61 = arith.index_cast %arg16 : i32 to index
      %c0_26 = arith.constant 0 : index
      %c0_27 = arith.constant 0 : index
      %62 = vector.load %arg4[%61, %c0_26, %c0_27] : memref<4x32x8xbf16, #tpu.memory_space<vmem>>, vector<1x32x8xbf16>
      %63 = vector.shape_cast %62 : vector<1x32x8xbf16> to vector<32x8xbf16>
      %cst_28 = arith.constant dense<0.000000e+00> : vector<8x8xf32>
      %64 = tpu.matmul %24, %63, %cst_28 {dimension_numbers = #tpu.dot_dimension_numbers<[1], [0], [0], [1], [0, 0, 1, 1], [], []>} : vector<8x32xbf16>, vector<32x8xbf16>, vector<8x8xf32> -> vector<8x8xf32>
      %65 = arith.truncf %64 : vector<8x8xf32> to vector<8x8xbf16>
      %66 = arith.index_cast %arg16 : i32 to index
      %c0_29 = arith.constant 0 : index
      %c0_30 = arith.constant 0 : index
      %67 = vector.load %arg14[%66, %c0_29, %c0_30] : memref<4x8x8xbf16, #tpu.memory_space<vmem>>, vector<1x8x8xbf16>
      %68 = vector.shape_cast %67 : vector<1x8x8xbf16> to vector<8x8xbf16>
      %69 = vector.extract_strided_slice %65 {offsets = [0, 0], sizes = [8, 4], strides = [1, 1]} : vector<8x8xbf16> to vector<8x4xbf16>
      %70 = vector.extract_strided_slice %68 {offsets = [0, 0], sizes = [8, 4], strides = [1, 1]} : vector<8x8xbf16> to vector<8x4xbf16>
      %cst_31 = arith.constant dense<0.000000e+00> : vector<8x8xf32>
      %71 = tpu.matmul %69, %70, %cst_31 {dimension_numbers = #tpu.dot_dimension_numbers<[1], [1], [0], [0], [0, 0, 1, 0], [], []>} : vector<8x4xbf16>, vector<8x4xbf16>, vector<8x8xf32> -> vector<8x8xf32>
      %72 = vector.extract_strided_slice %65 {offsets = [0, 4], sizes = [8, 4], strides = [1, 1]} : vector<8x8xbf16> to vector<8x4xbf16>
      %73 = vector.extract_strided_slice %68 {offsets = [0, 4], sizes = [8, 4], strides = [1, 1]} : vector<8x8xbf16> to vector<8x4xbf16>
      %cst_32 = arith.constant dense<0.000000e+00> : vector<8x8xf32>
      %74 = tpu.matmul %72, %73, %cst_32 {dimension_numbers = #tpu.dot_dimension_numbers<[1], [1], [0], [0], [0, 0, 1, 0], [], []>} : vector<8x4xbf16>, vector<8x4xbf16>, vector<8x8xf32> -> vector<8x8xf32>
      %cst_33 = arith.constant dense<0xFF800000> : vector<8xf32>
      %75 = vector.multi_reduction <maximumf>, %71, %cst_33 [1] : vector<8x8xf32> to vector<8xf32>
      %76 = vector.shape_cast %75 : vector<8xf32> to vector<8x1xf32>
      %77 = vector.broadcast %76 : vector<8x1xf32> to vector<8x8xf32>
      %78 = arith.subf %71, %77 : vector<8x8xf32>
      %79 = math.exp %78 : vector<8x8xf32>
      %cst_34 = arith.constant dense<0.000000e+00> : vector<8xf32>
      %80 = vector.multi_reduction <add>, %79, %cst_34 [1] : vector<8x8xf32> to vector<8xf32>
      %81 = vector.shape_cast %80 : vector<8xf32> to vector<8x1xf32>
      %82 = tpu.reciprocal %81 {approx = true} : vector<8x1xf32> -> vector<8x1xf32>
      %83 = vector.broadcast %82 : vector<8x1xf32> to vector<8x8xf32>
      %84 = arith.mulf %79, %83 : vector<8x8xf32>
      %cst_35 = arith.constant dense<0xFF800000> : vector<8xf32>
      %85 = vector.multi_reduction <maximumf>, %74, %cst_35 [1] : vector<8x8xf32> to vector<8xf32>
      %86 = vector.shape_cast %85 : vector<8xf32> to vector<8x1xf32>
      %87 = vector.broadcast %86 : vector<8x1xf32> to vector<8x8xf32>
      %88 = arith.subf %74, %87 : vector<8x8xf32>
      %89 = math.exp %88 : vector<8x8xf32>
      %cst_36 = arith.constant dense<0.000000e+00> : vector<8xf32>
      %90 = vector.multi_reduction <add>, %89, %cst_36 [1] : vector<8x8xf32> to vector<8xf32>
      %91 = vector.shape_cast %90 : vector<8xf32> to vector<8x1xf32>
      %92 = tpu.reciprocal %91 {approx = true} : vector<8x1xf32> -> vector<8x1xf32>
      %93 = vector.broadcast %92 : vector<8x1xf32> to vector<8x8xf32>
      %94 = arith.mulf %89, %93 : vector<8x8xf32>
      %95 = vector.broadcast %3 : f32 to vector<8x8xf32>
      %96 = arith.mulf %95, %94 : vector<8x8xf32>
      %97 = arith.subf %84, %96 : vector<8x8xf32>
      %98 = arith.truncf %97 : vector<8x8xf32> to vector<8x8xbf16>
      %99 = arith.index_cast %arg16 : i32 to index
      %c0_37 = arith.constant 0 : index
      %c0_38 = arith.constant 0 : index
      %100 = vector.load %arg15[%99, %c0_37, %c0_38] : memref<4x8x8xbf16, #tpu.memory_space<vmem>>, vector<1x8x8xbf16>
      %101 = vector.shape_cast %100 : vector<1x8x8xbf16> to vector<8x8xbf16>
      %cst_39 = arith.constant dense<0.000000e+00> : vector<8x8xf32>
      %102 = tpu.matmul %98, %101, %cst_39 {dimension_numbers = #tpu.dot_dimension_numbers<[1], [0], [0], [1], [0, 0, 1, 1], [], []>} : vector<8x8xbf16>, vector<8x8xbf16>, vector<8x8xf32> -> vector<8x8xf32>
      %c0_40 = arith.constant 0 : index
      %c0_41 = arith.constant 0 : index
      %103 = vector.load %arg9[%c0_40, %c0_41] : memref<1x8xf32, #tpu.memory_space<vmem>>, vector<1x8xf32>
      %104 = arith.mulf %102, %102 : vector<8x8xf32>
      %cst_42 = arith.constant dense<0.000000e+00> : vector<8xf32>
      %105 = vector.multi_reduction <add>, %104, %cst_42 [1] : vector<8x8xf32> to vector<8xf32>
      %106 = vector.shape_cast %105 : vector<8xf32> to vector<8x1xf32>
      %cst_43 = arith.constant 8.000000e+00 : f32
      %107 = vector.broadcast %cst_43 : f32 to vector<8x1xf32>
      %108 = arith.divf %106, %107 : vector<8x1xf32>
      %cst_44 = arith.constant 9.99999997E-7 : f32
      %109 = vector.broadcast %cst_44 : f32 to vector<8x1xf32>
      %110 = arith.addf %108, %109 : vector<8x1xf32>
      %111 = math.rsqrt %110 : vector<8x1xf32>
      %112 = vector.broadcast %111 : vector<8x1xf32> to vector<8x8xf32>
      %113 = arith.mulf %102, %112 : vector<8x8xf32>
      %114 = vector.broadcast %103 : vector<1x8xf32> to vector<8x8xf32>
      %115 = arith.mulf %113, %114 : vector<8x8xf32>
      %116 = vector.broadcast %5 : f32 to vector<8x8xf32>
      %117 = arith.mulf %115, %116 : vector<8x8xf32>
      %118 = arith.truncf %117 : vector<8x8xf32> to vector<8x8xbf16>
      %119 = arith.index_cast %arg16 : i32 to index
      %c0_45 = arith.constant 0 : index
      %c0_46 = arith.constant 0 : index
      %120 = vector.load %arg7[%119, %c0_45, %c0_46] : memref<4x8x32xbf16, #tpu.memory_space<vmem>>, vector<1x8x32xbf16>
      %121 = vector.shape_cast %120 : vector<1x8x32xbf16> to vector<8x32xbf16>
      %cst_47 = arith.constant dense<0.000000e+00> : vector<8x32xf32>
      %122 = tpu.matmul %118, %121, %cst_47 {dimension_numbers = #tpu.dot_dimension_numbers<[1], [0], [0], [1], [0, 0, 1, 1], [], []>} : vector<8x8xbf16>, vector<8x32xbf16>, vector<8x32xf32> -> vector<8x32xf32>
      %123 = arith.addf %arg17, %122 : vector<8x32xf32>
      scf.yield %123 : vector<8x32xf32>
    }
    %c4_i32_10 = arith.constant 4 : i32
    %28 = arith.addf %10, %27 : vector<8x32xf32>
    %c0_11 = arith.constant 0 : index
    %c0_12 = arith.constant 0 : index
    %29 = vector.load %arg10[%c0_11, %c0_12] : memref<1x32xf32, #tpu.memory_space<vmem>>, vector<1x32xf32>
    %30 = arith.mulf %28, %28 : vector<8x32xf32>
    %cst_13 = arith.constant dense<0.000000e+00> : vector<8xf32>
    %31 = vector.multi_reduction <add>, %30, %cst_13 [1] : vector<8x32xf32> to vector<8xf32>
    %32 = vector.shape_cast %31 : vector<8xf32> to vector<8x1xf32>
    %cst_14 = arith.constant 3.200000e+01 : f32
    %33 = vector.broadcast %cst_14 : f32 to vector<8x1xf32>
    %34 = arith.divf %32, %33 : vector<8x1xf32>
    %cst_15 = arith.constant 9.99999997E-7 : f32
    %35 = vector.broadcast %cst_15 : f32 to vector<8x1xf32>
    %36 = arith.addf %34, %35 : vector<8x1xf32>
    %37 = math.rsqrt %36 : vector<8x1xf32>
    %38 = vector.broadcast %37 : vector<8x1xf32> to vector<8x32xf32>
    %39 = arith.mulf %28, %38 : vector<8x32xf32>
    %40 = vector.broadcast %29 : vector<1x32xf32> to vector<8x32xf32>
    %41 = arith.mulf %39, %40 : vector<8x32xf32>
    %42 = arith.truncf %41 : vector<8x32xf32> to vector<8x32xbf16>
    %c0_16 = arith.constant 0 : index
    %c0_17 = arith.constant 0 : index
    %43 = vector.load %arg11[%c0_16, %c0_17] : memref<32x256xbf16, #tpu.memory_space<vmem>>, vector<32x256xbf16>
    %cst_18 = arith.constant dense<0.000000e+00> : vector<8x256xf32>
    %44 = tpu.matmul %42, %43, %cst_18 {dimension_numbers = #tpu.dot_dimension_numbers<[1], [0], [0], [1], [0, 0, 1, 1], [], []>} : vector<8x32xbf16>, vector<32x256xbf16>, vector<8x256xf32> -> vector<8x256xf32>
    %45 = vector.extract_strided_slice %44 {offsets = [0, 0], sizes = [8, 128], strides = [1, 1]} : vector<8x256xf32> to vector<8x128xf32>
    %46 = vector.extract_strided_slice %44 {offsets = [0, 128], sizes = [8, 128], strides = [1, 1]} : vector<8x256xf32> to vector<8x128xf32>
    %47 = arith.negf %45 : vector<8x128xf32>
    %48 = math.exp %47 : vector<8x128xf32>
    %cst_19 = arith.constant 1.000000e+00 : f32
    %49 = vector.broadcast %cst_19 : f32 to vector<8x128xf32>
    %50 = arith.addf %49, %48 : vector<8x128xf32>
    %51 = arith.divf %49, %50 : vector<8x128xf32>
    %52 = arith.mulf %45, %51 : vector<8x128xf32>
    %53 = arith.mulf %52, %46 : vector<8x128xf32>
    %54 = arith.truncf %53 : vector<8x128xf32> to vector<8x128xbf16>
    %c0_20 = arith.constant 0 : index
    %c0_21 = arith.constant 0 : index
    %55 = vector.load %arg12[%c0_20, %c0_21] : memref<128x32xbf16, #tpu.memory_space<vmem>>, vector<128x32xbf16>
    %cst_22 = arith.constant dense<0.000000e+00> : vector<8x32xf32>
    %56 = tpu.matmul %54, %55, %cst_22 {dimension_numbers = #tpu.dot_dimension_numbers<[1], [0], [0], [1], [0, 0, 1, 1], [], []>} : vector<8x128xbf16>, vector<128x32xbf16>, vector<8x32xf32> -> vector<8x32xf32>
    %57 = arith.addf %28, %56 : vector<8x32xf32>
    %c0_23 = arith.constant 0 : index
    %c0_24 = arith.constant 0 : index
    %c0_25 = arith.constant 0 : index
    %58 = vector.load %arg13[%c0_23, %c0_24, %c0_25] : memref<1x8x32xf32, #tpu.memory_space<vmem>>, vector<1x8x32xf32>
    %59 = vector.shape_cast %58 : vector<1x8x32xf32> to vector<8x32xf32>
    %60 = vector.shape_cast %57 : vector<8x32xf32> to vector<1x8x32xf32>
    tpu.vector_store %arg13[%c0_23, %c0_24, %c0_25], %60 {strides = array<i32>} : memref<1x8x32xf32, #tpu.memory_space<vmem>>, vector<1x8x32xf32>,
    return
  }
  func.func @transform_0(%arg0: i32, %arg1: i32) -> i32 {
    %c0_i32 = arith.constant 0 : i32
    %c0_i32_0 = arith.constant 0 : i32
    return %c0_i32 : i32
  }
  func.func @transform_1(%arg0: i32, %arg1: i32) -> (i32, i32, i32) {
    %c0_i32 = arith.constant 0 : i32
    %c0_i32_0 = arith.constant 0 : i32
    %c0_i32_1 = arith.constant 0 : i32
    return %arg0, %c0_i32, %c0_i32_0 : i32, i32, i32
  }
  func.func @transform_2(%arg0: i32, %arg1: i32) -> (i32, i32, i32) {
    %c0_i32 = arith.constant 0 : i32
    %c0_i32_0 = arith.constant 0 : i32
    %c0_i32_1 = arith.constant 0 : i32
    %c0_i32_2 = arith.constant 0 : i32
    return %c0_i32, %c0_i32_0, %c0_i32_1 : i32, i32, i32
  }
  func.func @transform_3(%arg0: i32, %arg1: i32) -> (i32, i32, i32) {
    %c0_i32 = arith.constant 0 : i32
    %c0_i32_0 = arith.constant 0 : i32
    %c0_i32_1 = arith.constant 0 : i32
    %c0_i32_2 = arith.constant 0 : i32
    return %c0_i32, %c0_i32_0, %c0_i32_1 : i32, i32, i32
  }
  func.func @transform_4(%arg0: i32, %arg1: i32) -> (i32, i32, i32) {
    %c0_i32 = arith.constant 0 : i32
    %c0_i32_0 = arith.constant 0 : i32
    %c0_i32_1 = arith.constant 0 : i32
    %c0_i32_2 = arith.constant 0 : i32
    return %c0_i32, %c0_i32_0, %c0_i32_1 : i32, i32, i32
  }
  func.func @transform_5(%arg0: i32, %arg1: i32) -> (i32, i32, i32) {
    %c0_i32 = arith.constant 0 : i32
    %c0_i32_0 = arith.constant 0 : i32
    %c0_i32_1 = arith.constant 0 : i32
    %c0_i32_2 = arith.constant 0 : i32
    return %c0_i32, %c0_i32_0, %c0_i32_1 : i32, i32, i32
  }
  func.func @transform_6(%arg0: i32, %arg1: i32) -> (i32, i32) {
    %c0_i32 = arith.constant 0 : i32
    %c0_i32_0 = arith.constant 0 : i32
    %c0_i32_1 = arith.constant 0 : i32
    return %c0_i32, %c0_i32_0 : i32, i32
  }
  func.func @transform_7(%arg0: i32, %arg1: i32) -> (i32, i32) {
    %c0_i32 = arith.constant 0 : i32
    %c0_i32_0 = arith.constant 0 : i32
    %c0_i32_1 = arith.constant 0 : i32
    return %c0_i32, %c0_i32_0 : i32, i32
  }
  func.func @transform_8(%arg0: i32, %arg1: i32) -> (i32, i32) {
    %c0_i32 = arith.constant 0 : i32
    %c0_i32_0 = arith.constant 0 : i32
    %c0_i32_1 = arith.constant 0 : i32
    return %c0_i32, %c0_i32_0 : i32, i32
  }
  func.func @transform_9(%arg0: i32, %arg1: i32) -> (i32, i32) {
    %c0_i32 = arith.constant 0 : i32
    %c0_i32_0 = arith.constant 0 : i32
    %c0_i32_1 = arith.constant 0 : i32
    return %c0_i32, %c0_i32_0 : i32, i32
  }
  func.func @transform_10(%arg0: i32, %arg1: i32) -> (i32, i32) {
    %c0_i32 = arith.constant 0 : i32
    %c0_i32_0 = arith.constant 0 : i32
    %c0_i32_1 = arith.constant 0 : i32
    return %c0_i32, %c0_i32_0 : i32, i32
  }
  func.func @transform_11(%arg0: i32, %arg1: i32) -> (i32, i32, i32) {
    %c0_i32 = arith.constant 0 : i32
    %c0_i32_0 = arith.constant 0 : i32
    return %arg0, %arg1, %c0_i32 : i32, i32, i32
  }
}

module attributes {stable_mosaic.version = 11 : i64} {
  func.func @transformer_block_kernel(%arg0: i32, %arg1: i32, %arg2: memref<2xf32, #tpu.memory_space<smem>>, %arg3: memref<1x8x32xf32, #tpu.memory_space<vmem>>, %arg4: memref<4x32x8xbf16, #tpu.memory_space<vmem>>, %arg5: memref<4x32x8xbf16, #tpu.memory_space<vmem>>, %arg6: memref<4x32x8xbf16, #tpu.memory_space<vmem>>, %arg7: memref<4x8x32xbf16, #tpu.memory_space<vmem>>, %arg8: memref<1x32xf32, #tpu.memory_space<vmem>>, %arg9: memref<1x8xf32, #tpu.memory_space<vmem>>, %arg10: memref<1x32xf32, #tpu.memory_space<vmem>>, %arg11: memref<32x256xbf16, #tpu.memory_space<vmem>>, %arg12: memref<128x32xbf16, #tpu.memory_space<vmem>>, %arg13: memref<1x8x32xf32, #tpu.memory_space<vmem>>, %arg14: memref<4x8x8xbf16, #tpu.memory_space<vmem>>, %arg15: memref<4x8x8xbf16, #tpu.memory_space<vmem>>) attributes {dimension_semantics = [#tpu.dimension_semantics<parallel>, #tpu.dimension_semantics<arbitrary>], iteration_bounds = array<i64: 2, 1>, scalar_prefetch = 0 : i64, scratch_operands = 2 : i64, tpu.core_type = #tpu.core_type<tc>, window_params = [{transform_indices = @transform_0, window_bounds = array<i64: 2>}, {transform_indices = @transform_1, window_bounds = array<i64: 1, 8, 32>}, {pipeline_mode = #tpu.pipeline_mode<synchronous>, transform_indices = @transform_2, window_bounds = array<i64: 4, 32, 8>}, {pipeline_mode = #tpu.pipeline_mode<synchronous>, transform_indices = @transform_3, window_bounds = array<i64: 4, 32, 8>}, {pipeline_mode = #tpu.pipeline_mode<synchronous>, transform_indices = @transform_4, window_bounds = array<i64: 4, 32, 8>}, {pipeline_mode = #tpu.pipeline_mode<synchronous>, transform_indices = @transform_5, window_bounds = array<i64: 4, 8, 32>}, {pipeline_mode = #tpu.pipeline_mode<synchronous>, transform_indices = @transform_6, window_bounds = array<i64: 1, 32>}, {pipeline_mode = #tpu.pipeline_mode<synchronous>, transform_indices = @transform_7, window_bounds = array<i64: 1, 8>}, {pipeline_mode = #tpu.pipeline_mode<synchronous>, transform_indices = @transform_8, window_bounds = array<i64: 1, 32>}, {pipeline_mode = #tpu.pipeline_mode<synchronous>, transform_indices = @transform_9, window_bounds = array<i64: 32, 256>}, {pipeline_mode = #tpu.pipeline_mode<synchronous>, transform_indices = @transform_10, window_bounds = array<i64: 128, 32>}, {transform_indices = @transform_11, window_bounds = array<i64: 1, 8, 32>}]} {
    %c0_i32 = arith.constant 0 : i32
    %0 = arith.cmpi eq, %arg1, %c0_i32 : i32
    %1 = arith.extui %0 : i1 to i32
    %c0_i32_0 = arith.constant 0 : i32
    %2 = arith.cmpi ne, %1, %c0_i32_0 : i32
    scf.if %2 {
      %c0_26 = arith.constant 0 : index
      %c0_27 = arith.constant 0 : index
      %c0_28 = arith.constant 0 : index
      %61 = vector.load %arg3[%c0_26, %c0_27, %c0_28] : memref<1x8x32xf32, #tpu.memory_space<vmem>>, vector<1x8x32xf32>
      %62 = vector.shape_cast %61 : vector<1x8x32xf32> to vector<8x32xf32>
      %c0_29 = arith.constant 0 : index
      %c0_30 = arith.constant 0 : index
      %63 = vector.load %arg8[%c0_29, %c0_30] : memref<1x32xf32, #tpu.memory_space<vmem>>, vector<1x32xf32>
      %64 = arith.mulf %62, %62 : vector<8x32xf32>
      %cst_31 = arith.constant dense<0.000000e+00> : vector<8xf32>
      %65 = vector.multi_reduction <add>, %64, %cst_31 [1] : vector<8x32xf32> to vector<8xf32>
      %66 = vector.shape_cast %65 : vector<8xf32> to vector<8x1xf32>
      %cst_32 = arith.constant 3.200000e+01 : f32
      %67 = vector.broadcast %cst_32 : f32 to vector<8x1xf32>
      %68 = arith.divf %66, %67 : vector<8x1xf32>
      %cst_33 = arith.constant 9.99999997E-7 : f32
      %69 = vector.broadcast %cst_33 : f32 to vector<8x1xf32>
      %70 = arith.addf %68, %69 : vector<8x1xf32>
      %71 = math.rsqrt %70 : vector<8x1xf32>
      %72 = vector.broadcast %71 : vector<8x1xf32> to vector<8x32xf32>
      %73 = arith.mulf %62, %72 : vector<8x32xf32>
      %74 = vector.broadcast %63 : vector<1x32xf32> to vector<8x32xf32>
      %75 = arith.mulf %73, %74 : vector<8x32xf32>
      %76 = arith.truncf %75 : vector<8x32xf32> to vector<8x32xbf16>
      %c0_i32_34 = arith.constant 0 : i32
      %c4_i32_35 = arith.constant 4 : i32
      %77 = arith.addi %c0_i32_34, %c4_i32_35 : i32
      %c1_i32_36 = arith.constant 1 : i32
      scf.for %arg16 = %c0_i32_34 to %77 step %c1_i32_36  : i32 {
        %78 = arith.index_cast %arg16 : i32 to index
        %c0_38 = arith.constant 0 : index
        %c0_39 = arith.constant 0 : index
        %79 = vector.load %arg5[%78, %c0_38, %c0_39] : memref<4x32x8xbf16, #tpu.memory_space<vmem>>, vector<1x32x8xbf16>
        %80 = vector.shape_cast %79 : vector<1x32x8xbf16> to vector<32x8xbf16>
        %cst_40 = arith.constant dense<0.000000e+00> : vector<8x8xf32>
        %81 = tpu.matmul %76, %80, %cst_40 {dimension_numbers = #tpu.dot_dimension_numbers<[1], [0], [0], [1], [0, 0, 1, 1], [], []>} : vector<8x32xbf16>, vector<32x8xbf16>, vector<8x8xf32> -> vector<8x8xf32>
        %82 = arith.truncf %81 : vector<8x8xf32> to vector<8x8xbf16>
        %83 = arith.index_cast %arg16 : i32 to index
        %c0_41 = arith.constant 0 : index
        %c0_42 = arith.constant 0 : index
        %84 = vector.load %arg14[%83, %c0_41, %c0_42] : memref<4x8x8xbf16, #tpu.memory_space<vmem>>, vector<1x8x8xbf16>
        %85 = vector.shape_cast %84 : vector<1x8x8xbf16> to vector<8x8xbf16>
        %86 = vector.shape_cast %82 : vector<8x8xbf16> to vector<1x8x8xbf16>
        tpu.vector_store %arg14[%83, %c0_41, %c0_42], %86 {strides = array<i32>} : memref<4x8x8xbf16, #tpu.memory_space<vmem>>, vector<1x8x8xbf16>,
        %87 = arith.index_cast %arg16 : i32 to index
        %c0_43 = arith.constant 0 : index
        %c0_44 = arith.constant 0 : index
        %88 = vector.load %arg6[%87, %c0_43, %c0_44] : memref<4x32x8xbf16, #tpu.memory_space<vmem>>, vector<1x32x8xbf16>
        %89 = vector.shape_cast %88 : vector<1x32x8xbf16> to vector<32x8xbf16>
        %cst_45 = arith.constant dense<0.000000e+00> : vector<8x8xf32>
        %90 = tpu.matmul %76, %89, %cst_45 {dimension_numbers = #tpu.dot_dimension_numbers<[1], [0], [0], [1], [0, 0, 1, 1], [], []>} : vector<8x32xbf16>, vector<32x8xbf16>, vector<8x8xf32> -> vector<8x8xf32>
        %91 = arith.truncf %90 : vector<8x8xf32> to vector<8x8xbf16>
        %92 = arith.index_cast %arg16 : i32 to index
        %c0_46 = arith.constant 0 : index
        %c0_47 = arith.constant 0 : index
        %93 = vector.load %arg15[%92, %c0_46, %c0_47] : memref<4x8x8xbf16, #tpu.memory_space<vmem>>, vector<1x8x8xbf16>
        %94 = vector.shape_cast %93 : vector<1x8x8xbf16> to vector<8x8xbf16>
        %95 = vector.shape_cast %91 : vector<8x8xbf16> to vector<1x8x8xbf16>
        tpu.vector_store %arg15[%92, %c0_46, %c0_47], %95 {strides = array<i32>} : memref<4x8x8xbf16, #tpu.memory_space<vmem>>, vector<1x8x8xbf16>,
      }
      %c4_i32_37 = arith.constant 4 : i32
    } else {
    }
    %c0 = arith.constant 0 : index
    %3 = memref.load %arg2[%c0] : memref<2xf32, #tpu.memory_space<smem>>
    %c1 = arith.constant 1 : index
    %4 = memref.load %arg2[%c1] : memref<2xf32, #tpu.memory_space<smem>>
    %cst = arith.constant 1.000000e+00 : f32
    %5 = arith.subf %cst, %4 : f32
    %c8_i32 = arith.constant 8 : i32
    %6 = arith.muli %arg1, %c8_i32 : i32
    %7 = tpu.assume_multiple %6, 8 : i32
    %c0_1 = arith.constant 0 : index
    %8 = arith.index_cast %7 : i32 to index
    %c0_2 = arith.constant 0 : index
    %9 = vector.load %arg3[%c0_1, %8, %c0_2] : memref<1x8x32xf32, #tpu.memory_space<vmem>>, vector<1x8x32xf32>
    %10 = vector.shape_cast %9 : vector<1x8x32xf32> to vector<8x32xf32>
    %c0_3 = arith.constant 0 : index
    %c0_4 = arith.constant 0 : index
    %11 = vector.load %arg8[%c0_3, %c0_4] : memref<1x32xf32, #tpu.memory_space<vmem>>, vector<1x32xf32>
    %12 = arith.mulf %10, %10 : vector<8x32xf32>
    %cst_5 = arith.constant dense<0.000000e+00> : vector<8xf32>
    %13 = vector.multi_reduction <add>, %12, %cst_5 [1] : vector<8x32xf32> to vector<8xf32>
    %14 = vector.shape_cast %13 : vector<8xf32> to vector<8x1xf32>
    %cst_6 = arith.constant 3.200000e+01 : f32
    %15 = vector.broadcast %cst_6 : f32 to vector<8x1xf32>
    %16 = arith.divf %14, %15 : vector<8x1xf32>
    %cst_7 = arith.constant 9.99999997E-7 : f32
    %17 = vector.broadcast %cst_7 : f32 to vector<8x1xf32>
    %18 = arith.addf %16, %17 : vector<8x1xf32>
    %19 = math.rsqrt %18 : vector<8x1xf32>
    %20 = vector.broadcast %19 : vector<8x1xf32> to vector<8x32xf32>
    %21 = arith.mulf %10, %20 : vector<8x32xf32>
    %22 = vector.broadcast %11 : vector<1x32xf32> to vector<8x32xf32>
    %23 = arith.mulf %21, %22 : vector<8x32xf32>
    %24 = arith.truncf %23 : vector<8x32xf32> to vector<8x32xbf16>
    %cst_8 = arith.constant 0.000000e+00 : f32
    %25 = vector.broadcast %cst_8 : f32 to vector<8x32xf32>
    %c0_i32_9 = arith.constant 0 : i32
    %c4_i32 = arith.constant 4 : i32
    %26 = arith.addi %c0_i32_9, %c4_i32 : i32
    %c1_i32 = arith.constant 1 : i32
    %27 = scf.for %arg16 = %c0_i32_9 to %26 step %c1_i32 iter_args(%arg17 = %25) -> (vector<8x32xf32>)  : i32 {
      %61 = arith.index_cast %arg16 : i32 to index
      %c0_26 = arith.constant 0 : index
      %c0_27 = arith.constant 0 : index
      %62 = vector.load %arg4[%61, %c0_26, %c0_27] : memref<4x32x8xbf16, #tpu.memory_space<vmem>>, vector<1x32x8xbf16>
      %63 = vector.shape_cast %62 : vector<1x32x8xbf16> to vector<32x8xbf16>
      %cst_28 = arith.constant dense<0.000000e+00> : vector<8x8xf32>
      %64 = tpu.matmul %24, %63, %cst_28 {dimension_numbers = #tpu.dot_dimension_numbers<[1], [0], [0], [1], [0, 0, 1, 1], [], []>} : vector<8x32xbf16>, vector<32x8xbf16>, vector<8x8xf32> -> vector<8x8xf32>
      %65 = arith.truncf %64 : vector<8x8xf32> to vector<8x8xbf16>
      %66 = arith.index_cast %arg16 : i32 to index
      %c0_29 = arith.constant 0 : index
      %c0_30 = arith.constant 0 : index
      %67 = vector.load %arg14[%66, %c0_29, %c0_30] : memref<4x8x8xbf16, #tpu.memory_space<vmem>>, vector<1x8x8xbf16>
      %68 = vector.shape_cast %67 : vector<1x8x8xbf16> to vector<8x8xbf16>
      %69 = vector.extract_strided_slice %65 {offsets = [0, 0], sizes = [8, 4], strides = [1, 1]} : vector<8x8xbf16> to vector<8x4xbf16>
      %70 = vector.extract_strided_slice %68 {offsets = [0, 0], sizes = [8, 4], strides = [1, 1]} : vector<8x8xbf16> to vector<8x4xbf16>
      %cst_31 = arith.constant dense<0.000000e+00> : vector<8x8xf32>
      %71 = tpu.matmul %69, %70, %cst_31 {dimension_numbers = #tpu.dot_dimension_numbers<[1], [1], [0], [0], [0, 0, 1, 0], [], []>} : vector<8x4xbf16>, vector<8x4xbf16>, vector<8x8xf32> -> vector<8x8xf32>
      %72 = vector.extract_strided_slice %65 {offsets = [0, 4], sizes = [8, 4], strides = [1, 1]} : vector<8x8xbf16> to vector<8x4xbf16>
      %73 = vector.extract_strided_slice %68 {offsets = [0, 4], sizes = [8, 4], strides = [1, 1]} : vector<8x8xbf16> to vector<8x4xbf16>
      %cst_32 = arith.constant dense<0.000000e+00> : vector<8x8xf32>
      %74 = tpu.matmul %72, %73, %cst_32 {dimension_numbers = #tpu.dot_dimension_numbers<[1], [1], [0], [0], [0, 0, 1, 0], [], []>} : vector<8x4xbf16>, vector<8x4xbf16>, vector<8x8xf32> -> vector<8x8xf32>
      %cst_33 = arith.constant dense<0xFF800000> : vector<8xf32>
      %75 = vector.multi_reduction <maximumf>, %71, %cst_33 [1] : vector<8x8xf32> to vector<8xf32>
      %76 = vector.shape_cast %75 : vector<8xf32> to vector<8x1xf32>
      %77 = vector.broadcast %76 : vector<8x1xf32> to vector<8x8xf32>
      %78 = arith.subf %71, %77 : vector<8x8xf32>
      %79 = math.exp %78 : vector<8x8xf32>
      %cst_34 = arith.constant dense<0.000000e+00> : vector<8xf32>
      %80 = vector.multi_reduction <add>, %79, %cst_34 [1] : vector<8x8xf32> to vector<8xf32>
      %81 = vector.shape_cast %80 : vector<8xf32> to vector<8x1xf32>
      %82 = tpu.reciprocal %81 {approx = true} : vector<8x1xf32> -> vector<8x1xf32>
      %83 = vector.broadcast %82 : vector<8x1xf32> to vector<8x8xf32>
      %84 = arith.mulf %79, %83 : vector<8x8xf32>
      %cst_35 = arith.constant dense<0xFF800000> : vector<8xf32>
      %85 = vector.multi_reduction <maximumf>, %74, %cst_35 [1] : vector<8x8xf32> to vector<8xf32>
      %86 = vector.shape_cast %85 : vector<8xf32> to vector<8x1xf32>
      %87 = vector.broadcast %86 : vector<8x1xf32> to vector<8x8xf32>
      %88 = arith.subf %74, %87 : vector<8x8xf32>
      %89 = math.exp %88 : vector<8x8xf32>
      %cst_36 = arith.constant dense<0.000000e+00> : vector<8xf32>
      %90 = vector.multi_reduction <add>, %89, %cst_36 [1] : vector<8x8xf32> to vector<8xf32>
      %91 = vector.shape_cast %90 : vector<8xf32> to vector<8x1xf32>
      %92 = tpu.reciprocal %91 {approx = true} : vector<8x1xf32> -> vector<8x1xf32>
      %93 = vector.broadcast %92 : vector<8x1xf32> to vector<8x8xf32>
      %94 = arith.mulf %89, %93 : vector<8x8xf32>
      %95 = vector.broadcast %3 : f32 to vector<8x8xf32>
      %96 = arith.mulf %95, %94 : vector<8x8xf32>
      %97 = arith.subf %84, %96 : vector<8x8xf32>
      %98 = arith.truncf %97 : vector<8x8xf32> to vector<8x8xbf16>
      %99 = arith.index_cast %arg16 : i32 to index
      %c0_37 = arith.constant 0 : index
      %c0_38 = arith.constant 0 : index
      %100 = vector.load %arg15[%99, %c0_37, %c0_38] : memref<4x8x8xbf16, #tpu.memory_space<vmem>>, vector<1x8x8xbf16>
      %101 = vector.shape_cast %100 : vector<1x8x8xbf16> to vector<8x8xbf16>
      %cst_39 = arith.constant dense<0.000000e+00> : vector<8x8xf32>
      %102 = tpu.matmul %98, %101, %cst_39 {dimension_numbers = #tpu.dot_dimension_numbers<[1], [0], [0], [1], [0, 0, 1, 1], [], []>} : vector<8x8xbf16>, vector<8x8xbf16>, vector<8x8xf32> -> vector<8x8xf32>
      %c0_40 = arith.constant 0 : index
      %c0_41 = arith.constant 0 : index
      %103 = vector.load %arg9[%c0_40, %c0_41] : memref<1x8xf32, #tpu.memory_space<vmem>>, vector<1x8xf32>
      %104 = arith.mulf %102, %102 : vector<8x8xf32>
      %cst_42 = arith.constant dense<0.000000e+00> : vector<8xf32>
      %105 = vector.multi_reduction <add>, %104, %cst_42 [1] : vector<8x8xf32> to vector<8xf32>
      %106 = vector.shape_cast %105 : vector<8xf32> to vector<8x1xf32>
      %cst_43 = arith.constant 8.000000e+00 : f32
      %107 = vector.broadcast %cst_43 : f32 to vector<8x1xf32>
      %108 = arith.divf %106, %107 : vector<8x1xf32>
      %cst_44 = arith.constant 9.99999997E-7 : f32
      %109 = vector.broadcast %cst_44 : f32 to vector<8x1xf32>
      %110 = arith.addf %108, %109 : vector<8x1xf32>
      %111 = math.rsqrt %110 : vector<8x1xf32>
      %112 = vector.broadcast %111 : vector<8x1xf32> to vector<8x8xf32>
      %113 = arith.mulf %102, %112 : vector<8x8xf32>
      %114 = vector.broadcast %103 : vector<1x8xf32> to vector<8x8xf32>
      %115 = arith.mulf %113, %114 : vector<8x8xf32>
      %116 = vector.broadcast %5 : f32 to vector<8x8xf32>
      %117 = arith.mulf %115, %116 : vector<8x8xf32>
      %118 = arith.truncf %117 : vector<8x8xf32> to vector<8x8xbf16>
      %119 = arith.index_cast %arg16 : i32 to index
      %c0_45 = arith.constant 0 : index
      %c0_46 = arith.constant 0 : index
      %120 = vector.load %arg7[%119, %c0_45, %c0_46] : memref<4x8x32xbf16, #tpu.memory_space<vmem>>, vector<1x8x32xbf16>
      %121 = vector.shape_cast %120 : vector<1x8x32xbf16> to vector<8x32xbf16>
      %cst_47 = arith.constant dense<0.000000e+00> : vector<8x32xf32>
      %122 = tpu.matmul %118, %121, %cst_47 {dimension_numbers = #tpu.dot_dimension_numbers<[1], [0], [0], [1], [0, 0, 1, 1], [], []>} : vector<8x8xbf16>, vector<8x32xbf16>, vector<8x32xf32> -> vector<8x32xf32>
      %123 = arith.addf %arg17, %122 : vector<8x32xf32>
      scf.yield %123 : vector<8x32xf32>
    }
    %c4_i32_10 = arith.constant 4 : i32
    %28 = arith.addf %10, %27 : vector<8x32xf32>
    %c0_11 = arith.constant 0 : index
    %c0_12 = arith.constant 0 : index
    %29 = vector.load %arg10[%c0_11, %c0_12] : memref<1x32xf32, #tpu.memory_space<vmem>>, vector<1x32xf32>
    %30 = arith.mulf %28, %28 : vector<8x32xf32>
    %cst_13 = arith.constant dense<0.000000e+00> : vector<8xf32>
    %31 = vector.multi_reduction <add>, %30, %cst_13 [1] : vector<8x32xf32> to vector<8xf32>
    %32 = vector.shape_cast %31 : vector<8xf32> to vector<8x1xf32>
    %cst_14 = arith.constant 3.200000e+01 : f32
    %33 = vector.broadcast %cst_14 : f32 to vector<8x1xf32>
    %34 = arith.divf %32, %33 : vector<8x1xf32>
    %cst_15 = arith.constant 9.99999997E-7 : f32
    %35 = vector.broadcast %cst_15 : f32 to vector<8x1xf32>
    %36 = arith.addf %34, %35 : vector<8x1xf32>
    %37 = math.rsqrt %36 : vector<8x1xf32>
    %38 = vector.broadcast %37 : vector<8x1xf32> to vector<8x32xf32>
    %39 = arith.mulf %28, %38 : vector<8x32xf32>
    %40 = vector.broadcast %29 : vector<1x32xf32> to vector<8x32xf32>
    %41 = arith.mulf %39, %40 : vector<8x32xf32>
    %42 = arith.truncf %41 : vector<8x32xf32> to vector<8x32xbf16>
    %c0_16 = arith.constant 0 : index
    %c0_17 = arith.constant 0 : index
    %43 = vector.load %arg11[%c0_16, %c0_17] : memref<32x256xbf16, #tpu.memory_space<vmem>>, vector<32x256xbf16>
    %cst_18 = arith.constant dense<0.000000e+00> : vector<8x256xf32>
    %44 = tpu.matmul %42, %43, %cst_18 {dimension_numbers = #tpu.dot_dimension_numbers<[1], [0], [0], [1], [0, 0, 1, 1], [], []>} : vector<8x32xbf16>, vector<32x256xbf16>, vector<8x256xf32> -> vector<8x256xf32>
    %45 = vector.extract_strided_slice %44 {offsets = [0, 0], sizes = [8, 128], strides = [1, 1]} : vector<8x256xf32> to vector<8x128xf32>
    %46 = vector.extract_strided_slice %44 {offsets = [0, 128], sizes = [8, 128], strides = [1, 1]} : vector<8x256xf32> to vector<8x128xf32>
    %47 = arith.negf %45 : vector<8x128xf32>
    %48 = math.exp %47 : vector<8x128xf32>
    %cst_19 = arith.constant 1.000000e+00 : f32
    %49 = vector.broadcast %cst_19 : f32 to vector<8x128xf32>
    %50 = arith.addf %49, %48 : vector<8x128xf32>
    %51 = arith.divf %49, %50 : vector<8x128xf32>
    %52 = arith.mulf %45, %51 : vector<8x128xf32>
    %53 = arith.mulf %52, %46 : vector<8x128xf32>
    %54 = arith.truncf %53 : vector<8x128xf32> to vector<8x128xbf16>
    %c0_20 = arith.constant 0 : index
    %c0_21 = arith.constant 0 : index
    %55 = vector.load %arg12[%c0_20, %c0_21] : memref<128x32xbf16, #tpu.memory_space<vmem>>, vector<128x32xbf16>
    %cst_22 = arith.constant dense<0.000000e+00> : vector<8x32xf32>
    %56 = tpu.matmul %54, %55, %cst_22 {dimension_numbers = #tpu.dot_dimension_numbers<[1], [0], [0], [1], [0, 0, 1, 1], [], []>} : vector<8x128xbf16>, vector<128x32xbf16>, vector<8x32xf32> -> vector<8x32xf32>
    %57 = arith.addf %28, %56 : vector<8x32xf32>
    %c0_23 = arith.constant 0 : index
    %c0_24 = arith.constant 0 : index
    %c0_25 = arith.constant 0 : index
    %58 = vector.load %arg13[%c0_23, %c0_24, %c0_25] : memref<1x8x32xf32, #tpu.memory_space<vmem>>, vector<1x8x32xf32>
    %59 = vector.shape_cast %58 : vector<1x8x32xf32> to vector<8x32xf32>
    %60 = vector.shape_cast %57 : vector<8x32xf32> to vector<1x8x32xf32>
    tpu.vector_store %arg13[%c0_23, %c0_24, %c0_25], %60 {strides = array<i32>} : memref<1x8x32xf32, #tpu.memory_space<vmem>>, vector<1x8x32xf32>,
    return
  }
  func.func @transform_0(%arg0: i32, %arg1: i32) -> i32 {
    %c0_i32 = arith.constant 0 : i32
    %c0_i32_0 = arith.constant 0 : i32
    return %c0_i32 : i32
  }
  func.func @transform_1(%arg0: i32, %arg1: i32) -> (i32, i32, i32) {
    %c0_i32 = arith.constant 0 : i32
    %c0_i32_0 = arith.constant 0 : i32
    %c0_i32_1 = arith.constant 0 : i32
    return %arg0, %c0_i32, %c0_i32_0 : i32, i32, i32
  }
  func.func @transform_2(%arg0: i32, %arg1: i32) -> (i32, i32, i32) {
    %c0_i32 = arith.constant 0 : i32
    %c0_i32_0 = arith.constant 0 : i32
    %c0_i32_1 = arith.constant 0 : i32
    %c0_i32_2 = arith.constant 0 : i32
    return %c0_i32, %c0_i32_0, %c0_i32_1 : i32, i32, i32
  }
  func.func @transform_3(%arg0: i32, %arg1: i32) -> (i32, i32, i32) {
    %c0_i32 = arith.constant 0 : i32
    %c0_i32_0 = arith.constant 0 : i32
    %c0_i32_1 = arith.constant 0 : i32
    %c0_i32_2 = arith.constant 0 : i32
    return %c0_i32, %c0_i32_0, %c0_i32_1 : i32, i32, i32
  }
  func.func @transform_4(%arg0: i32, %arg1: i32) -> (i32, i32, i32) {
    %c0_i32 = arith.constant 0 : i32
    %c0_i32_0 = arith.constant 0 : i32
    %c0_i32_1 = arith.constant 0 : i32
    %c0_i32_2 = arith.constant 0 : i32
    return %c0_i32, %c0_i32_0, %c0_i32_1 : i32, i32, i32
  }
  func.func @transform_5(%arg0: i32, %arg1: i32) -> (i32, i32, i32) {
    %c0_i32 = arith.constant 0 : i32
    %c0_i32_0 = arith.constant 0 : i32
    %c0_i32_1 = arith.constant 0 : i32
    %c0_i32_2 = arith.constant 0 : i32
    return %c0_i32, %c0_i32_0, %c0_i32_1 : i32, i32, i32
  }
  func.func @transform_6(%arg0: i32, %arg1: i32) -> (i32, i32) {
    %c0_i32 = arith.constant 0 : i32
    %c0_i32_0 = arith.constant 0 : i32
    %c0_i32_1 = arith.constant 0 : i32
    return %c0_i32, %c0_i32_0 : i32, i32
  }
  func.func @transform_7(%arg0: i32, %arg1: i32) -> (i32, i32) {
    %c0_i32 = arith.constant 0 : i32
    %c0_i32_0 = arith.constant 0 : i32
    %c0_i32_1 = arith.constant 0 : i32
    return %c0_i32, %c0_i32_0 : i32, i32
  }
  func.func @transform_8(%arg0: i32, %arg1: i32) -> (i32, i32) {
    %c0_i32 = arith.constant 0 : i32
    %c0_i32_0 = arith.constant 0 : i32
    %c0_i32_1 = arith.constant 0 : i32
    return %c0_i32, %c0_i32_0 : i32, i32
  }
  func.func @transform_9(%arg0: i32, %arg1: i32) -> (i32, i32) {
    %c0_i32 = arith.constant 0 : i32
    %c0_i32_0 = arith.constant 0 : i32
    %c0_i32_1 = arith.constant 0 : i32
    return %c0_i32, %c0_i32_0 : i32, i32
  }
  func.func @transform_10(%arg0: i32, %arg1: i32) -> (i32, i32) {
    %c0_i32 = arith.constant 0 : i32
    %c0_i32_0 = arith.constant 0 : i32
    %c0_i32_1 = arith.constant 0 : i32
    return %c0_i32, %c0_i32_0 : i32, i32
  }
  func.func @transform_11(%arg0: i32, %arg1: i32) -> (i32, i32, i32) {
    %c0_i32 = arith.constant 0 : i32
    %c0_i32_0 = arith.constant 0 : i32
    return %arg0, %arg1, %c0_i32 : i32, i32, i32
  }
}

</mosaic_0001>

<llo_original>
// kernel: tpu_custom_call.1
$region0: #{tpu_custom_call.1}
  #allocation0 [shape = 'u32[]', space=smem, size = 0x4, offset = 0x4, fixed_abs, tag = 'smem constant byte address 0x4 - core index']
  #allocation1 [shape = 'u32[144,128]{1,0:T(1,128)}', space=vmem, size = 0x12000, scoped, tag = 'internal scratch']
  #allocation2 [shape = 'bf16[4,8,8]{2,1,0:T(8,128)(2,1)}', space=vmem, size = 0x2000, scoped, tag = 'scratch operand']
  #allocation3 [shape = 'bf16[4,8,8]{2,1,0:T(8,128)(2,1)}', space=vmem, size = 0x2000, scoped, tag = 'scratch operand']
  %s0 = inlined_call_operand.vmem [shape: f32[2], index: 0, kind: input, shape index: {}]
  %s1 = inlined_call_operand.vmem [shape: f32[2,8,32], index: 1, kind: input, shape index: {}]
  %s2 = inlined_call_operand.vmem [shape: bf16[4,32,8], index: 2, kind: input, shape index: {}]
  %s3 = inlined_call_operand.vmem [shape: bf16[4,32,8], index: 3, kind: input, shape index: {}]
  %s4 = inlined_call_operand.vmem [shape: bf16[4,32,8], index: 4, kind: input, shape index: {}]
  %s5 = inlined_call_operand.vmem [shape: bf16[4,8,32], index: 5, kind: input, shape index: {}]
  %s6 = inlined_call_operand.vmem [shape: f32[1,32], index: 6, kind: input, shape index: {}]
  %s7 = inlined_call_operand.vmem [shape: f32[1,8], index: 7, kind: input, shape index: {}]
  %s8 = inlined_call_operand.vmem [shape: f32[1,32], index: 8, kind: input, shape index: {}]
  %s9 = inlined_call_operand.vmem [shape: bf16[32,256], index: 9, kind: input, shape index: {}]
  %s10 = inlined_call_operand.vmem [shape: bf16[128,32], index: 10, kind: input, shape index: {}]
  %s11 = inlined_call_operand.hbm [shape: f32[2,8,32], index: 11, kind: output, shape index: {}]
  %s12 = sld [smem:[#allocation0]]
  $region99: #{tpu_custom_call.1} parent=0
    _
  %s14 = ssub.s32 1, %s12
  %s15 = scalar_select 0, %s14, %s12
  $region1: #{tpu_custom_call.1} parent=0
    #allocation4 [shape = 'u8[512]{0}', space=smem, size = 0x200, scoped, tag = 'input window, operand 0, single buffered']
    #allocation5 [shape = 's32[2]{0}', space=sflag, size = 0x8, scoped, tag = 'scoped memory for tpu_custom_call.1']
    #allocation6 [shape = 's32[2]{0}', space=sflag, size = 0x8, scoped, tag = 'scoped memory for tpu_custom_call.1']
    #allocation7 [shape = 'u8[8192]{0}', space=vmem, size = 0x2000, scoped, tag = 'output window, operand 0']
    %16 = vsyncpa [#allocation6], 0
    %17 = vsyncpa [#allocation5], 0
    %s18 = scalar_lea.sflag [#allocation5], 1
    %19 = vsyncpa %s18, 0
    loop: start=0, step=1, limit=4
    $region2: #{tpu_custom_call.1} parent=1 // loop_pre_header
      _
    $region3: #{tpu_custom_call.1} parent=1 // loop_header
      %s21 = sphi 0, %s25
      %p22 = scmp.ge.s32.totalorder %s21, 4
      %s28 = sphi 0, %s40
      %s29 = sphi 0, %s36
      %s30 = sphi 0, %s28
      %s31 = sphi 0, %s29
      %s32 = sphi 0, %s30
      %s33 = sphi 0, %s31
      %s41 = sphi 0, %s41
      %s43 = sphi 0, %s41
      %s44 = sphi 0, %s43
      %s58 = sphi 0, %s44
      %s64 = sphi 0, %s66
      %s67 = sphi 0, %s64
      %s68 = sphi 0, %s67
      %s84 = sphi 0, %s68
      %s88 = sphi 0, %s88
      %s90 = sphi 0, %s88
      %s91 = sphi 0, %s90
      %s105 = sphi 0, %s91
      %s109 = sphi 0, %s109
      %s111 = sphi 0, %s109
      %s112 = sphi 0, %s111
      %s126 = sphi 0, %s112
      %s130 = sphi 0, %s130
      %s132 = sphi 0, %s130
      %s133 = sphi 0, %s132
      %s147 = sphi 0, %s133
      %s151 = sphi 0, %s151
      %s153 = sphi 0, %s151
      %s154 = sphi 0, %s153
      %s168 = sphi 0, %s154
      %s172 = sphi 0, %s172
      %s174 = sphi 0, %s172
      %s175 = sphi 0, %s174
      %s189 = sphi 0, %s175
      %s193 = sphi 0, %s193
      %s195 = sphi 0, %s193
      %s196 = sphi 0, %s195
      %s210 = sphi 0, %s196
      %s214 = sphi 0, %s214
      %s216 = sphi 0, %s214
      %s217 = sphi 0, %s216
      %s231 = sphi 0, %s217
      %s235 = sphi 0, %s235
      %s237 = sphi 0, %s235
      %s238 = sphi 0, %s237
      %s252 = sphi 0, %s238
      %s256 = sphi 0, %s256
      %s258 = sphi 0, %s256
      %s259 = sphi 0, %s258
      %s273 = sphi 0, %s259
      %s281 = sphi 0, %s283
      %s284 = sphi 0, %s281
      %s285 = sphi 0, %s284
      %s301 = sphi 0, %s285
    $region4: #{tpu_custom_call.1} parent=1 // loop_header_branch
      %24 = sbr.rel (%p22) target = $region8
    $region5: #{tpu_custom_call.1} parent=1 // loop_body
      %s26 = ssub.s32 %s21, 1
      %s27 = ssub.s32 %s21, 2
      %s34 = sadd.s32 1, %s29
      %p35 = scmp.ge.s32.totalorder %s34, 1
      %s36 = scalar_select %p35, 0, %s34
      %s37 = sadd.s32 1, %s28
      %s38 = scalar_select %p35, %s37, %s28
      %p39 = scmp.ge.s32.totalorder %s38, 2
      %s40 = scalar_select %p39, 0, %s38
      %s42 = sadd.s32 %s41, 1
      %p45 = scmp.eq.s32.totalorder %s21, 1
      %p46 = scmp.ne.s32.totalorder %s41, %s43
      %p47 = scmp.eq.s32.totalorder %s21, 0
      %p48 = por %p46, %p47
      %p49 = scmp.ne.s32.totalorder %s41, %s43
      %p50 = scmp.eq.s32.totalorder %s26, 1
      %p51 = por %p49, %p50
      %p52 = scmp.ne.s32.totalorder %s43, %s44
      %p53 = scmp.eq.s32.totalorder %s26, 0
      %p54 = por %p52, %p53
      %p55 = scmp.ne.s32.totalorder %s43, %s44
      %p56 = scmp.eq.s32.totalorder %s27, 1
      %p57 = por %p55, %p56
      %p59 = scmp.ne.s32.totalorder %s44, %s58
      %p60 = scmp.eq.s32.totalorder %s27, 0
      %p61 = por %p59, %p60
      %s62 = ssub.s32 %s28, %s40
      %p63 = scmp.eq.s32.totalorder %s62, 0
      %s65 = sadd.s32 %s64, 1
      %s66 = scalar_select %p63, %s64, %s65
      %p69 = pneg %p63
      %p70 = scmp.eq.s32.totalorder %s21, 1
      %p71 = por %p69, %p70
      %p72 = scmp.ne.s32.totalorder %s64, %s67
      %p73 = scmp.eq.s32.totalorder %s21, 0
      %p74 = por %p72, %p73
      %p75 = scmp.ne.s32.totalorder %s64, %s67
      %p76 = scmp.eq.s32.totalorder %s26, 1
      %p77 = por %p75, %p76
      %p78 = scmp.ne.s32.totalorder %s67, %s68
      %p79 = scmp.eq.s32.totalorder %s26, 0
      %p80 = por %p78, %p79
      %p81 = scmp.ne.s32.totalorder %s67, %s68
      %p82 = scmp.eq.s32.totalorder %s27, 1
      %p83 = por %p81, %p82
      %p85 = scmp.ne.s32.totalorder %s68, %s84
      %p86 = scmp.eq.s32.totalorder %s27, 0
      %p87 = por %p85, %p86
      %s89 = sadd.s32 %s88, 1
      %p92 = scmp.eq.s32.totalorder %s21, 1
      %p93 = scmp.ne.s32.totalorder %s88, %s90
      %p94 = scmp.eq.s32.totalorder %s21, 0
      %p95 = por %p93, %p94
      %p96 = scmp.ne.s32.totalorder %s88, %s90
      %p97 = scmp.eq.s32.totalorder %s26, 1
      %p98 = por %p96, %p97
      %p99 = scmp.ne.s32.totalorder %s90, %s91
      %p100 = scmp.eq.s32.totalorder %s26, 0
      %p101 = por %p99, %p100
      %p102 = scmp.ne.s32.totalorder %s90, %s91
      %p103 = scmp.eq.s32.totalorder %s27, 1
      %p104 = por %p102, %p103
      %p106 = scmp.ne.s32.totalorder %s91, %s105
      %p107 = scmp.eq.s32.totalorder %s27, 0
      %p108 = por %p106, %p107
      %s110 = sadd.s32 %s109, 1
      %p113 = scmp.eq.s32.totalorder %s21, 1
      %p114 = scmp.ne.s32.totalorder %s109, %s111
      %p115 = scmp.eq.s32.totalorder %s21, 0
      %p116 = por %p114, %p115
      %p117 = scmp.ne.s32.totalorder %s109, %s111
      %p118 = scmp.eq.s32.totalorder %s26, 1
      %p119 = por %p117, %p118
      %p120 = scmp.ne.s32.totalorder %s111, %s112
      %p121 = scmp.eq.s32.totalorder %s26, 0
      %p122 = por %p120, %p121
      %p123 = scmp.ne.s32.totalorder %s111, %s112
      %p124 = scmp.eq.s32.totalorder %s27, 1
      %p125 = por %p123, %p124
      %p127 = scmp.ne.s32.totalorder %s112, %s126
      %p128 = scmp.eq.s32.totalorder %s27, 0
      %p129 = por %p127, %p128
      %s131 = sadd.s32 %s130, 1
      %p134 = scmp.eq.s32.totalorder %s21, 1
      %p135 = scmp.ne.s32.totalorder %s130, %s132
      %p136 = scmp.eq.s32.totalorder %s21, 0
      %p137 = por %p135, %p136
      %p138 = scmp.ne.s32.totalorder %s130, %s132
      %p139 = scmp.eq.s32.totalorder %s26, 1
      %p140 = por %p138, %p139
      %p141 = scmp.ne.s32.totalorder %s132, %s133
      %p142 = scmp.eq.s32.totalorder %s26, 0
      %p143 = por %p141, %p142
      %p144 = scmp.ne.s32.totalorder %s132, %s133
      %p145 = scmp.eq.s32.totalorder %s27, 1
      %p146 = por %p144, %p145
      %p148 = scmp.ne.s32.totalorder %s133, %s147
      %p149 = scmp.eq.s32.totalorder %s27, 0
      %p150 = por %p148, %p149
      %s152 = sadd.s32 %s151, 1
      %p155 = scmp.eq.s32.totalorder %s21, 1
      %p156 = scmp.ne.s32.totalorder %s151, %s153
      %p157 = scmp.eq.s32.totalorder %s21, 0
      %p158 = por %p156, %p157
      %p159 = scmp.ne.s32.totalorder %s151, %s153
      %p160 = scmp.eq.s32.totalorder %s26, 1
      %p161 = por %p159, %p160
      %p162 = scmp.ne.s32.totalorder %s153, %s154
      %p163 = scmp.eq.s32.totalorder %s26, 0
      %p164 = por %p162, %p163
      %p165 = scmp.ne.s32.totalorder %s153, %s154
      %p166 = scmp.eq.s32.totalorder %s27, 1
      %p167 = por %p165, %p166
      %p169 = scmp.ne.s32.totalorder %s154, %s168
      %p170 = scmp.eq.s32.totalorder %s27, 0
      %p171 = por %p169, %p170
      %s173 = sadd.s32 %s172, 1
      %p176 = scmp.eq.s32.totalorder %s21, 1
      %p177 = scmp.ne.s32.totalorder %s172, %s174
      %p178 = scmp.eq.s32.totalorder %s21, 0
      %p179 = por %p177, %p178
      %p180 = scmp.ne.s32.totalorder %s172, %s174
      %p181 = scmp.eq.s32.totalorder %s26, 1
      %p182 = por %p180, %p181
      %p183 = scmp.ne.s32.totalorder %s174, %s175
      %p184 = scmp.eq.s32.totalorder %s26, 0
      %p185 = por %p183, %p184
      %p186 = scmp.ne.s32.totalorder %s174, %s175
      %p187 = scmp.eq.s32.totalorder %s27, 1
      %p188 = por %p186, %p187
      %p190 = scmp.ne.s32.totalorder %s175, %s189
      %p191 = scmp.eq.s32.totalorder %s27, 0
      %p192 = por %p190, %p191
      %s194 = sadd.s32 %s193, 1
      %p197 = scmp.eq.s32.totalorder %s21, 1
      %p198 = scmp.ne.s32.totalorder %s193, %s195
      %p199 = scmp.eq.s32.totalorder %s21, 0
      %p200 = por %p198, %p199
      %p201 = scmp.ne.s32.totalorder %s193, %s195
      %p202 = scmp.eq.s32.totalorder %s26, 1
      %p203 = por %p201, %p202
      %p204 = scmp.ne.s32.totalorder %s195, %s196
      %p205 = scmp.eq.s32.totalorder %s26, 0
      %p206 = por %p204, %p205
      %p207 = scmp.ne.s32.totalorder %s195, %s196
      %p208 = scmp.eq.s32.totalorder %s27, 1
      %p209 = por %p207, %p208
      %p211 = scmp.ne.s32.totalorder %s196, %s210
      %p212 = scmp.eq.s32.totalorder %s27, 0
      %p213 = por %p211, %p212
      %s215 = sadd.s32 %s214, 1
      %p218 = scmp.eq.s32.totalorder %s21, 1
      %p219 = scmp.ne.s32.totalorder %s214, %s216
      %p220 = scmp.eq.s32.totalorder %s21, 0
      %p221 = por %p219, %p220
      %p222 = scmp.ne.s32.totalorder %s214, %s216
      %p223 = scmp.eq.s32.totalorder %s26, 1
      %p224 = por %p222, %p223
      %p225 = scmp.ne.s32.totalorder %s216, %s217
      %p226 = scmp.eq.s32.totalorder %s26, 0
      %p227 = por %p225, %p226
      %p228 = scmp.ne.s32.totalorder %s216, %s217
      %p229 = scmp.eq.s32.totalorder %s27, 1
      %p230 = por %p228, %p229
      %p232 = scmp.ne.s32.totalorder %s217, %s231
      %p233 = scmp.eq.s32.totalorder %s27, 0
      %p234 = por %p232, %p233
      %s236 = sadd.s32 %s235, 1
      %p239 = scmp.eq.s32.totalorder %s21, 1
      %p240 = scmp.ne.s32.totalorder %s235, %s237
      %p241 = scmp.eq.s32.totalorder %s21, 0
      %p242 = por %p240, %p241
      %p243 = scmp.ne.s32.totalorder %s235, %s237
      %p244 = scmp.eq.s32.totalorder %s26, 1
      %p245 = por %p243, %p244
      %p246 = scmp.ne.s32.totalorder %s237, %s238
      %p247 = scmp.eq.s32.totalorder %s26, 0
      %p248 = por %p246, %p247
      %p249 = scmp.ne.s32.totalorder %s237, %s238
      %p250 = scmp.eq.s32.totalorder %s27, 1
      %p251 = por %p249, %p250
      %p253 = scmp.ne.s32.totalorder %s238, %s252
      %p254 = scmp.eq.s32.totalorder %s27, 0
      %p255 = por %p253, %p254
      %s257 = sadd.s32 %s256, 1
      %p260 = scmp.eq.s32.totalorder %s21, 1
      %p261 = scmp.ne.s32.totalorder %s256, %s258
      %p262 = scmp.eq.s32.totalorder %s21, 0
      %p263 = por %p261, %p262
      %p264 = scmp.ne.s32.totalorder %s256, %s258
      %p265 = scmp.eq.s32.totalorder %s26, 1
      %p266 = por %p264, %p265
      %p267 = scmp.ne.s32.totalorder %s258, %s259
      %p268 = scmp.eq.s32.totalorder %s26, 0
      %p269 = por %p267, %p268
      %p270 = scmp.ne.s32.totalorder %s258, %s259
      %p271 = scmp.eq.s32.totalorder %s27, 1
      %p272 = por %p270, %p271
      %p274 = scmp.ne.s32.totalorder %s259, %s273
      %p275 = scmp.eq.s32.totalorder %s27, 0
      %p276 = por %p274, %p275
      %s277 = ssub.s32 %s28, %s40
      %s278 = ssub.s32 %s29, %s36
      %s279 = sor.u32 %s277, %s278
      %p280 = scmp.eq.s32.totalorder %s279, 0
      %s282 = sadd.s32 %s281, 1
      %s283 = scalar_select %p280, %s281, %s282
      %p286 = pneg %p280
      %p287 = scmp.eq.s32.totalorder %s21, 1
      %p288 = por %p286, %p287
      %p289 = scmp.ne.s32.totalorder %s281, %s284
      %p290 = scmp.eq.s32.totalorder %s21, 0
      %p291 = por %p289, %p290
      %p292 = scmp.ne.s32.totalorder %s281, %s284
      %p293 = scmp.eq.s32.totalorder %s26, 1
      %p294 = por %p292, %p293
      %p295 = scmp.ne.s32.totalorder %s284, %s285
      %p296 = scmp.eq.s32.totalorder %s26, 0
      %p297 = por %p295, %p296
      %p298 = scmp.ne.s32.totalorder %s284, %s285
      %p299 = scmp.eq.s32.totalorder %s27, 1
      %p300 = por %p298, %p299
      %p302 = scmp.ne.s32.totalorder %s285, %s301
      %p303 = scmp.eq.s32.totalorder %s27, 0
      %p304 = por %p302, %p303
      %p305 = scmp.le.s32.totalorder 1, %s21
      %p306 = scmp.lt.s32.totalorder %s21, 3
      %p307 = pnand %p305, %p306
      %p308 = pneg %p307
      // Predicated region
      $region9: #{tpu_custom_call.1} parent=5 // pred_check
        _
      $region10: #{tpu_custom_call.1} parent=5 // pred_check_branch
        %310 = sbr.rel (%p307) target = $region12
      $region11: #{tpu_custom_call.1} parent=5 // pred_region
        %s311 = ssub.s32 %s21, 1
        // Predicated region
        $region13: #{tpu_custom_call.1} parent=11 // pred_check
          %p312 = pneg %p54
        $region14: #{tpu_custom_call.1} parent=11 // pred_check_branch
          %314 = sbr.rel (%p312) target = $region16
        $region15: #{tpu_custom_call.1} parent=11 // pred_region
          %s316 = ssub.s32 16, 16
          %317 = vsyncadd [#allocation6], %s316
          %s319 = sshll.u32 %s0, 4
          %s320 = int_to_ptr.vmem [resolvable:$true] %s319
          %322 = dma.vmem_to_smem %s320, 16, [#allocation4], [#allocation6]
        $region16: #{tpu_custom_call.1} parent=11 // pred_fallthru
          _
        // Predicated region
        $region17: #{tpu_custom_call.1} parent=11 // pred_check
          %p323 = pneg %p101
        $region18: #{tpu_custom_call.1} parent=11 // pred_check_branch
          %325 = sbr.rel (%p323) target = $region20
        $region19: #{tpu_custom_call.1} parent=11 // pred_region
          _
        $region20: #{tpu_custom_call.1} parent=11 // pred_fallthru
          _
        // Predicated region
        $region21: #{tpu_custom_call.1} parent=11 // pred_check
          %p326 = pneg %p122
        $region22: #{tpu_custom_call.1} parent=11 // pred_check_branch
          %328 = sbr.rel (%p326) target = $region24
        $region23: #{tpu_custom_call.1} parent=11 // pred_region
          _
        $region24: #{tpu_custom_call.1} parent=11 // pred_fallthru
          _
        // Predicated region
        $region25: #{tpu_custom_call.1} parent=11 // pred_check
          %p329 = pneg %p143
        $region26: #{tpu_custom_call.1} parent=11 // pred_check_branch
          %331 = sbr.rel (%p329) target = $region28
        $region27: #{tpu_custom_call.1} parent=11 // pred_region
          _
        $region28: #{tpu_custom_call.1} parent=11 // pred_fallthru
          _
        // Predicated region
        $region29: #{tpu_custom_call.1} parent=11 // pred_check
          %p332 = pneg %p164
        $region30: #{tpu_custom_call.1} parent=11 // pred_check_branch
          %334 = sbr.rel (%p332) target = $region32
        $region31: #{tpu_custom_call.1} parent=11 // pred_region
          _
        $region32: #{tpu_custom_call.1} parent=11 // pred_fallthru
          _
        // Predicated region
        $region33: #{tpu_custom_call.1} parent=11 // pred_check
          %p335 = pneg %p185
        $region34: #{tpu_custom_call.1} parent=11 // pred_check_branch
          %337 = sbr.rel (%p335) target = $region36
        $region35: #{tpu_custom_call.1} parent=11 // pred_region
          _
        $region36: #{tpu_custom_call.1} parent=11 // pred_fallthru
          _
        // Predicated region
        $region37: #{tpu_custom_call.1} parent=11 // pred_check
          %p338 = pneg %p206
        $region38: #{tpu_custom_call.1} parent=11 // pred_check_branch
          %340 = sbr.rel (%p338) target = $region40
        $region39: #{tpu_custom_call.1} parent=11 // pred_region
          _
        $region40: #{tpu_custom_call.1} parent=11 // pred_fallthru
          _
        // Predicated region
        $region41: #{tpu_custom_call.1} parent=11 // pred_check
          %p341 = pneg %p227
        $region42: #{tpu_custom_call.1} parent=11 // pred_check_branch
          %343 = sbr.rel (%p341) target = $region44
        $region43: #{tpu_custom_call.1} parent=11 // pred_region
          _
        $region44: #{tpu_custom_call.1} parent=11 // pred_fallthru
          _
        // Predicated region
        $region45: #{tpu_custom_call.1} parent=11 // pred_check
          %p344 = pneg %p248
        $region46: #{tpu_custom_call.1} parent=11 // pred_check_branch
          %346 = sbr.rel (%p344) target = $region48
        $region47: #{tpu_custom_call.1} parent=11 // pred_region
          _
        $region48: #{tpu_custom_call.1} parent=11 // pred_fallthru
          _
        // Predicated region
        $region49: #{tpu_custom_call.1} parent=11 // pred_check
          %p347 = pneg %p269
        $region50: #{tpu_custom_call.1} parent=11 // pred_check_branch
          %349 = sbr.rel (%p347) target = $region52
        $region51: #{tpu_custom_call.1} parent=11 // pred_region
          _
        $region52: #{tpu_custom_call.1} parent=11 // pred_fallthru
          _
      $region12: #{tpu_custom_call.1} parent=5 // pred_fallthru
        _
      %p350 = scmp.lt.s32.totalorder %s21, 2
      // Predicated region
      $region53: #{tpu_custom_call.1} parent=5 // pred_check
        %p351 = pneg %p350
      $region54: #{tpu_custom_call.1} parent=5 // pred_check_branch
        %353 = sbr.rel (%p351) target = $region56
      $region55: #{tpu_custom_call.1} parent=5 // pred_region
        // Predicated region
        $region57: #{tpu_custom_call.1} parent=55 // pred_check
          %p354 = pneg %p74
        $region58: #{tpu_custom_call.1} parent=55 // pred_check_branch
          %356 = sbr.rel (%p354) target = $region60
        $region59: #{tpu_custom_call.1} parent=55 // pred_region
          %p357 = scmp.lt.s32.totalorder %s28, 1
          %s358 = scalar_select %p357, %s28, 1
          %s359 = smul.addr %s358, 8
          %s360 = scalar_lea.vmem %s1, %s359
        $region60: #{tpu_custom_call.1} parent=55 // pred_fallthru
          _
      $region56: #{tpu_custom_call.1} parent=5 // pred_fallthru
        _
      %p361 = scmp.le.s32.totalorder 1, %s21
      %p362 = scmp.lt.s32.totalorder %s21, 3
      %p363 = pnand %p361, %p362
      %p364 = pneg %p363
      // Predicated region
      $region61: #{tpu_custom_call.1} parent=5 // pred_check
        _
      $region62: #{tpu_custom_call.1} parent=5 // pred_check_branch
        %366 = sbr.rel (%p363) target = $region64
      $region63: #{tpu_custom_call.1} parent=5 // pred_region
        %s367 = ssub.s32 %s21, 1
        // Predicated region
        $region65: #{tpu_custom_call.1} parent=63 // pred_check
          %p368 = pneg %p54
        $region66: #{tpu_custom_call.1} parent=63 // pred_check_branch
          %370 = sbr.rel (%p368) target = $region68
        $region67: #{tpu_custom_call.1} parent=63 // pred_region
          %371 = dma.done [#allocation6], 16
        $region68: #{tpu_custom_call.1} parent=63 // pred_fallthru
          _
        %372 = sfence
        %p373 = pneg %p54
        %p374 = pneg %p51
        %p375 = scmp.lt.s32.totalorder %s30, 1
        %s376 = scalar_select %p375, %s30, 1
        %s377 = smul.addr %s376, 8
        %s378 = scalar_lea.vmem %s1, %s377
        %p379 = pneg %p80
        %p380 = pneg %p77
        %p381 = pneg %p101
        %p382 = pneg %p98
        %p383 = pneg %p122
        %p384 = pneg %p119
        %p385 = pneg %p143
        %p386 = pneg %p140
        %p387 = pneg %p164
        %p388 = pneg %p161
        %p389 = pneg %p185
        %p390 = pneg %p182
        %p391 = pneg %p206
        %p392 = pneg %p203
        %p393 = pneg %p227
        %p394 = pneg %p224
        %p395 = pneg %p248
        %p396 = pneg %p245
        %p397 = pneg %p269
        %p398 = pneg %p266
        %p399 = pneg %p297
        %p400 = pneg %p294
        %s401 = sand.u32 %s284, 1
        %s402 = scalar_lea.sflag [#allocation5], %s401
        %s403 = sand.u32 %s284, 1
        %s404 = smul.addr %s403, 8
        %s405 = scalar_lea.vmem [#allocation7], %s404
        %p406 = scmp.lt.s32.totalorder %s30, 1
        %s407 = scalar_select %p406, %s30, 1
        %s408 = smul.addr %s407, 8
        %s409 = scalar_lea.vmem %s1, %s408
        %p411 = scmp.eq.s32.totalorder %s31, 0
        // Predicated region
        $region69: #{tpu_custom_call.1} parent=63 // pred_check
          %p412 = pneg %p411
        $region70: #{tpu_custom_call.1} parent=63 // pred_check_branch
          %414 = sbr.rel (%p412) target = $region72
        $region71: #{tpu_custom_call.1} parent=63 // pred_region
          %v415 = vld [vmem:[%s409] sm:$0xff]
          %v416 = vld [vmem:[%s6] sm:$0x1]
          %v417 = vmul.f32 %v415, %v415
          %vm418 = vcmask 261120
          %v419 = vsel %vm418, %v417, 0.0
          %420 = vadd.xlane.f32.xlu0 %v419
          %v421 = vpop.xlane.xlu0 %420
          %v422 = vrcp.pop 32.0
          %v423 = vmul.f32 %v421, %v422
          %v424 = vadd.f32 %v423, 1e-06
          %v425 = vrsqrt.pop %v424
          %v426 = vmul.f32 %v415, %v425
          %v428 = vlaneseq
          %v429 = vshrl.u32 %v428, 7
          %v430 = vsub.s32 0, %v429
          %v431 = vrot.slane %v416, %v430
          %v433 = vmul.f32 %v426, %v431
          %v434 = vpack.c.bf16 %v433, %v433
          loop: start=0, step=1, limit=4
          $region73: #{tpu_custom_call.1} parent=71 // loop_pre_header
            _
          $region74: #{tpu_custom_call.1} parent=71 // loop_header
            %s436 = sphi 0, %s440
            %p437 = scmp.ge.s32.totalorder %s436, 4
          $region75: #{tpu_custom_call.1} parent=71 // loop_header_branch
            %439 = sbr.rel (%p437) target = $region79
          $region76: #{tpu_custom_call.1} parent=71 // loop_body
            %s441 = smul.u32 %s436, 4
            %s442 = smul.addr %s441, 4
            %s443 = scalar_lea.vmem %s3, %s442
            %v444 = vld [vmem:[%s443] sm:$0xf]
            %v445 = vld [vmem:[%s443 + $0x4] sm:$0xf]
            %v446 = vld [vmem:[%s443 + $0x8] sm:$0xf]
            %v447 = vld [vmem:[%s443 + $0xc] sm:$0xf]
            %v452 = vunpack.c.l.b16 %v444
            %v453 = vunpack.c.l.b16 %v445
            %v454 = vunpack.c.l.b16 %v446
            %v455 = vunpack.c.l.b16 %v447
            %v456 = vpack.c.b16 %v453, %v452
            %v457 = vpack.c.b16 %v455, %v454
            %v461 = vsel %vm418, %v434, 0
            %463 = vmatprep.subr.bf16.mxu0 0
            %464 = vmatpush1.bf16.msra.mxu0 0
            %465 = vmatprep.subr.bf16.mxu0 0
            %466 = vmatpush1.bf16.msra.mxu0 0
            %467 = vmatprep.subr.bf16.mxu0 0
            %468 = vmatpush1.bf16.msra.mxu0 0
            %469 = vmatprep.subr.bf16.mxu0 0
            %470 = vmatpush1.bf16.msra.mxu0 0
            %471 = vmatprep.subr.bf16.mxu0 0
            %472 = vmatpush1.bf16.msra.mxu0 0
            %473 = vmatprep.subr.bf16.mxu0 0
            %474 = vmatpush1.bf16.msra.mxu0 0
            %475 = vmatprep.subr.bf16.mxu0 0
            %476 = vmatpush1.bf16.msra.mxu0 %v457
            %477 = vmatprep.subr.bf16.mxu0 0
            %478 = vmatpush1.bf16.msra.mxu0 %v456
            %479 = vmatprep.subr.bf16.mxu0 0
            %480 = vmatpush2.bf16.msra.mxu0 0
            %481 = vmatprep.subr.bf16.mxu0 0
            %482 = vmatpush2.bf16.msra.mxu0 0
            %483 = vmatprep.subr.bf16.mxu0 0
            %484 = vmatpush2.bf16.msra.mxu0 0
            %485 = vmatprep.subr.bf16.mxu0 0
            %486 = vmatpush2.bf16.msra.mxu0 0
            %487 = vmatprep.subr.bf16.mxu0 0
            %488 = vmatpush2.bf16.msra.mxu0 0
            %489 = vmatprep.subr.bf16.mxu0 0
            %490 = vmatpush2.bf16.msra.mxu0 0
            %491 = vmatprep.subr.bf16.mxu0 0
            %492 = vmatpush2.bf16.msra.mxu0 0
            %493 = vmatprep.subr.bf16.mxu0 0
            %494 = vmatpush2.bf16.msra.mxu0 0
            %495 = vmatprep.mubr.bf16.mxu0 0
            %496 = vmatmul.mubr.bf16.gmra.mxu0 %v461
            %v497 = vpop.f32.mrf.mxu0
            %v498 = vadd.f32 0.0, %v497
            %v499 = vpop.f32.mrf.mxu0
            %v500 = vpop.f32.mrf.mxu0
            %v501 = vpop.f32.mrf.mxu0
            %502 = vdwg.mxu0
            %v503 = vpack.c.bf16 %v498, %v498
            %s504 = smul.addr %s436, 4
            %s505 = scalar_lea.vmem [#allocation2], %s504
            %vm506 = vcmask 60416
            %507 = vst.msk [vmem:[%s505] sm:$0xf] %vm506, %v503
            %s508 = smul.addr %s441, 4
            %s509 = scalar_lea.vmem %s4, %s508
            %v510 = vld [vmem:[%s509] sm:$0xf]
            %v511 = vld [vmem:[%s509 + $0x4] sm:$0xf]
            %v512 = vld [vmem:[%s509 + $0x8] sm:$0xf]
            %v513 = vld [vmem:[%s509 + $0xc] sm:$0xf]
            %v518 = vunpack.c.l.b16 %v510
            %v519 = vunpack.c.l.b16 %v511
            %v520 = vunpack.c.l.b16 %v512
            %v521 = vunpack.c.l.b16 %v513
            %v522 = vpack.c.b16 %v519, %v518
            %v523 = vpack.c.b16 %v521, %v520
            %526 = vmatprep.subr.bf16.mxu0 0
            %527 = vmatpush1.bf16.msra.mxu0 0
            %528 = vmatprep.subr.bf16.mxu0 0
            %529 = vmatpush1.bf16.msra.mxu0 0
            %530 = vmatprep.subr.bf16.mxu0 0
            %531 = vmatpush1.bf16.msra.mxu0 0
            %532 = vmatprep.subr.bf16.mxu0 0
            %533 = vmatpush1.bf16.msra.mxu0 0
            %534 = vmatprep.subr.bf16.mxu0 0
            %535 = vmatpush1.bf16.msra.mxu0 0
            %536 = vmatprep.subr.bf16.mxu0 0
            %537 = vmatpush1.bf16.msra.mxu0 0
            %538 = vmatprep.subr.bf16.mxu0 0
            %539 = vmatpush1.bf16.msra.mxu0 %v523
            %540 = vmatprep.subr.bf16.mxu0 0
            %541 = vmatpush1.bf16.msra.mxu0 %v522
            %542 = vmatprep.subr.bf16.mxu0 0
            %543 = vmatpush2.bf16.msra.mxu0 0
            %544 = vmatprep.subr.bf16.mxu0 0
            %545 = vmatpush2.bf16.msra.mxu0 0
            %546 = vmatprep.subr.bf16.mxu0 0
            %547 = vmatpush2.bf16.msra.mxu0 0
            %548 = vmatprep.subr.bf16.mxu0 0
            %549 = vmatpush2.bf16.msra.mxu0 0
            %550 = vmatprep.subr.bf16.mxu0 0
            %551 = vmatpush2.bf16.msra.mxu0 0
            %552 = vmatprep.subr.bf16.mxu0 0
            %553 = vmatpush2.bf16.msra.mxu0 0
            %554 = vmatprep.subr.bf16.mxu0 0
            %555 = vmatpush2.bf16.msra.mxu0 0
            %556 = vmatprep.subr.bf16.mxu0 0
            %557 = vmatpush2.bf16.msra.mxu0 0
            %558 = vmatprep.mubr.bf16.mxu0 0
            %559 = vmatmul.mubr.bf16.gmra.mxu0 %v461
            %v560 = vpop.f32.mrf.mxu0
            %v561 = vadd.f32 0.0, %v560
            %v562 = vpop.f32.mrf.mxu0
            %v563 = vpop.f32.mrf.mxu0
            %v564 = vpop.f32.mrf.mxu0
            %565 = vdwg.mxu0
            %v566 = vpack.c.bf16 %v561, %v561
            %s567 = smul.addr %s436, 4
            %s568 = scalar_lea.vmem [#allocation3], %s567
            %569 = vst.msk [vmem:[%s568] sm:$0xf] %vm506, %v566
          $region77: #{tpu_custom_call.1} parent=71 // loop_footer
            %s440 = sadd.s32 1, %s436
          $region78: #{tpu_custom_call.1} parent=71 // loop_footer_branch
            %435 = sbr.rel target = $region74
          $region79: #{tpu_custom_call.1} parent=71 // loop_exit
            _
        $region72: #{tpu_custom_call.1} parent=63 // pred_fallthru
          _
        %s570 = sld [smem:[#allocation4]]
        %s571 = sld [smem:[#allocation4 + $0x1]]
        %s572 = ssub.f32 1.0, %s571
        %s573 = smul.u32 %s31, 8
        %s574 = scalar_lea.vmem %s409, %s573
        %v575 = vld [vmem:[%s574] sm:$0xff]
        %v576 = vld [vmem:[%s6] sm:$0x1]
        %v577 = vmul.f32 %v575, %v575
        %vm578 = vcmask 261120
        %v579 = vsel %vm578, %v577, 0.0
        %580 = vadd.xlane.f32.xlu0 %v579
        %v581 = vpop.xlane.xlu0 %580
        %v582 = vrcp.pop 32.0
        %v583 = vmul.f32 %v581, %v582
        %v584 = vadd.f32 %v583, 1e-06
        %v585 = vrsqrt.pop %v584
        %v586 = vmul.f32 %v575, %v585
        %v588 = vlaneseq
        %v589 = vshrl.u32 %v588, 7
        %v590 = vsub.s32 0, %v589
        %v591 = vrot.slane %v576, %v590
        %v593 = vmul.f32 %v586, %v591
        %v594 = vpack.c.bf16 %v593, %v593
        loop: start=0, step=1, limit=4
        $region80: #{tpu_custom_call.1} parent=63 // loop_pre_header
          _
        $region81: #{tpu_custom_call.1} parent=63 // loop_header
          %s596 = sphi 0, %s600
          %p597 = scmp.ge.s32.totalorder %s596, 4
          %v601 = vphi 0.0, %v915
        $region82: #{tpu_custom_call.1} parent=63 // loop_header_branch
          %599 = sbr.rel (%p597) target = $region86
        $region83: #{tpu_custom_call.1} parent=63 // loop_body
          %s602 = smul.u32 %s596, 4
          %s603 = smul.addr %s602, 4
          %s604 = scalar_lea.vmem %s2, %s603
          %v605 = vld [vmem:[%s604] sm:$0xf]
          %v606 = vld [vmem:[%s604 + $0x4] sm:$0xf]
          %v607 = vld [vmem:[%s604 + $0x8] sm:$0xf]
          %v608 = vld [vmem:[%s604 + $0xc] sm:$0xf]
          %v613 = vunpack.c.l.b16 %v605
          %v614 = vunpack.c.l.b16 %v606
          %v615 = vunpack.c.l.b16 %v607
          %v616 = vunpack.c.l.b16 %v608
          %v617 = vpack.c.b16 %v614, %v613
          %v618 = vpack.c.b16 %v616, %v615
          %v622 = vsel %vm578, %v594, 0
          %624 = vmatprep.subr.bf16.mxu0 0
          %625 = vmatpush1.bf16.msra.mxu0 0
          %626 = vmatprep.subr.bf16.mxu0 0
          %627 = vmatpush1.bf16.msra.mxu0 0
          %628 = vmatprep.subr.bf16.mxu0 0
          %629 = vmatpush1.bf16.msra.mxu0 0
          %630 = vmatprep.subr.bf16.mxu0 0
          %631 = vmatpush1.bf16.msra.mxu0 0
          %632 = vmatprep.subr.bf16.mxu0 0
          %633 = vmatpush1.bf16.msra.mxu0 0
          %634 = vmatprep.subr.bf16.mxu0 0
          %635 = vmatpush1.bf16.msra.mxu0 0
          %636 = vmatprep.subr.bf16.mxu0 0
          %637 = vmatpush1.bf16.msra.mxu0 %v618
          %638 = vmatprep.subr.bf16.mxu0 0
          %639 = vmatpush1.bf16.msra.mxu0 %v617
          %640 = vmatprep.subr.bf16.mxu0 0
          %641 = vmatpush2.bf16.msra.mxu0 0
          %642 = vmatprep.subr.bf16.mxu0 0
          %643 = vmatpush2.bf16.msra.mxu0 0
          %644 = vmatprep.subr.bf16.mxu0 0
          %645 = vmatpush2.bf16.msra.mxu0 0
          %646 = vmatprep.subr.bf16.mxu0 0
          %647 = vmatpush2.bf16.msra.mxu0 0
          %648 = vmatprep.subr.bf16.mxu0 0
          %649 = vmatpush2.bf16.msra.mxu0 0
          %650 = vmatprep.subr.bf16.mxu0 0
          %651 = vmatpush2.bf16.msra.mxu0 0
          %652 = vmatprep.subr.bf16.mxu0 0
          %653 = vmatpush2.bf16.msra.mxu0 0
          %654 = vmatprep.subr.bf16.mxu0 0
          %655 = vmatpush2.bf16.msra.mxu0 0
          %656 = vmatprep.mubr.bf16.mxu0 0
          %657 = vmatmul.mubr.bf16.gmra.mxu0 %v622
          %v658 = vpop.f32.mrf.mxu0
          %v659 = vadd.f32 0.0, %v658
          %v660 = vpop.f32.mrf.mxu0
          %v661 = vpop.f32.mrf.mxu0
          %v662 = vpop.f32.mrf.mxu0
          %663 = vdwg.mxu0
          %v664 = vpack.c.bf16 %v659, %v659
          %s665 = smul.addr %s596, 4
          %s666 = scalar_lea.vmem [#allocation2], %s665
          %v667 = vld [vmem:[%s666] sm:$0xf]
          %vm668 = vcmask 31744
          %v670 = vsel %vm668, %v664, 0
          %v673 = vsel %vm668, %v667, 0
          %675 = vmatprep.subr.bf16.mxu0 0
          %676 = vmatpush1.bf16.xpose.msra.mxu0 0
          %677 = vmatprep.subr.bf16.mxu0 0
          %678 = vmatpush1.bf16.xpose.msra.mxu0 0
          %679 = vmatprep.subr.bf16.mxu0 0
          %680 = vmatpush1.bf16.xpose.msra.mxu0 0
          %681 = vmatprep.subr.bf16.mxu0 0
          %682 = vmatpush1.bf16.xpose.msra.mxu0 0
          %683 = vmatprep.subr.bf16.mxu0 0
          %684 = vmatpush1.bf16.xpose.msra.mxu0 0
          %685 = vmatprep.subr.bf16.mxu0 0
          %686 = vmatpush1.bf16.xpose.msra.mxu0 0
          %687 = vmatprep.subr.bf16.mxu0 0
          %688 = vmatpush1.bf16.xpose.msra.mxu0 0
          %689 = vmatprep.subr.bf16.mxu0 0
          %690 = vmatpush1.bf16.xpose.msra.mxu0 %v673
          %691 = vmatprep.subr.bf16.mxu0 0
          %692 = vmatpush2.bf16.xpose.msra.mxu0 0
          %693 = vmatprep.subr.bf16.mxu0 0
          %694 = vmatpush2.bf16.xpose.msra.mxu0 0
          %695 = vmatprep.subr.bf16.mxu0 0
          %696 = vmatpush2.bf16.xpose.msra.mxu0 0
          %697 = vmatprep.subr.bf16.mxu0 0
          %698 = vmatpush2.bf16.xpose.msra.mxu0 0
          %699 = vmatprep.subr.bf16.mxu0 0
          %700 = vmatpush2.bf16.xpose.msra.mxu0 0
          %701 = vmatprep.subr.bf16.mxu0 0
          %702 = vmatpush2.bf16.xpose.msra.mxu0 0
          %703 = vmatprep.subr.bf16.mxu0 0
          %704 = vmatpush2.bf16.xpose.msra.mxu0 0
          %705 = vmatprep.subr.bf16.mxu0 0
          %706 = vmatpush2.bf16.xpose.msra.mxu0 0
          %707 = vmatprep.mubr.bf16.mxu0 0
          %708 = vmatmul.mubr.bf16.gmra.mxu0 %v670
          %v709 = vpop.f32.mrf.mxu0
          %v710 = vadd.f32 0.0, %v709
          %v711 = vpop.f32.mrf.mxu0
          %v712 = vpop.f32.mrf.mxu0
          %v713 = vpop.f32.mrf.mxu0
          %714 = vdwg.mxu0
          %716 = vrot.lane.b32.xlu0 %v664, 124
          %v717 = vpop.permute.xlu0 %716
          %v719 = vunpack.c.l.b16 %v667
          %v720 = vpack.c.b16 %v719, %v719
          %721 = vrot.lane.b32.xlu0 %v720, 124
          %v722 = vpop.permute.xlu0 %721
          %v724 = vsel %vm668, %v717, 0
          %v727 = vsel %vm668, %v722, 0
          %729 = vmatprep.subr.bf16.mxu0 0
          %730 = vmatpush1.bf16.xpose.msra.mxu0 0
          %731 = vmatprep.subr.bf16.mxu0 0
          %732 = vmatpush1.bf16.xpose.msra.mxu0 0
          %733 = vmatprep.subr.bf16.mxu0 0
          %734 = vmatpush1.bf16.xpose.msra.mxu0 0
          %735 = vmatprep.subr.bf16.mxu0 0
          %736 = vmatpush1.bf16.xpose.msra.mxu0 0
          %737 = vmatprep.subr.bf16.mxu0 0
          %738 = vmatpush1.bf16.xpose.msra.mxu0 0
          %739 = vmatprep.subr.bf16.mxu0 0
          %740 = vmatpush1.bf16.xpose.msra.mxu0 0
          %741 = vmatprep.subr.bf16.mxu0 0
          %742 = vmatpush1.bf16.xpose.msra.mxu0 0
          %743 = vmatprep.subr.bf16.mxu0 0
          %744 = vmatpush1.bf16.xpose.msra.mxu0 %v727
          %745 = vmatprep.subr.bf16.mxu0 0
          %746 = vmatpush2.bf16.xpose.msra.mxu0 0
          %747 = vmatprep.subr.bf16.mxu0 0
          %748 = vmatpush2.bf16.xpose.msra.mxu0 0
          %749 = vmatprep.subr.bf16.mxu0 0
          %750 = vmatpush2.bf16.xpose.msra.mxu0 0
          %751 = vmatprep.subr.bf16.mxu0 0
          %752 = vmatpush2.bf16.xpose.msra.mxu0 0
          %753 = vmatprep.subr.bf16.mxu0 0
          %754 = vmatpush2.bf16.xpose.msra.mxu0 0
          %755 = vmatprep.subr.bf16.mxu0 0
          %756 = vmatpush2.bf16.xpose.msra.mxu0 0
          %757 = vmatprep.subr.bf16.mxu0 0
          %758 = vmatpush2.bf16.xpose.msra.mxu0 0
          %759 = vmatprep.subr.bf16.mxu0 0
          %760 = vmatpush2.bf16.xpose.msra.mxu0 0
          %761 = vmatprep.mubr.bf16.mxu0 0
          %762 = vmatmul.mubr.bf16.gmra.mxu0 %v724
          %v763 = vpop.f32.mrf.mxu0
          %v764 = vadd.f32 0.0, %v763
          %v765 = vpop.f32.mrf.mxu0
          %v766 = vpop.f32.mrf.mxu0
          %v767 = vpop.f32.mrf.mxu0
          %768 = vdwg.mxu0
          %vm769 = vcmask 64512
          %v770 = vsel %vm769, %v710, -inf
          %771 = vmax.xlane.f32.xlu0 %v770
          %v772 = vpop.xlane.xlu0 %771
          %v773 = vsub.f32 %v710, %v772
          %v774 = vmul.f32 %v773, 1.442695
          %v775 = vpow.pop %v774
          %v776 = vsel %vm769, %v775, 0.0
          %777 = vadd.xlane.f32.xlu0 %v776
          %v778 = vpop.xlane.xlu0 %777
          %v779 = vrcp.pop %v778
          %v780 = vmul.f32 %v775, %v779
          %v781 = vsel %vm769, %v764, -inf
          %782 = vmax.xlane.f32.xlu0 %v781
          %v783 = vpop.xlane.xlu0 %782
          %v784 = vsub.f32 %v764, %v783
          %v785 = vmul.f32 %v784, 1.442695
          %v786 = vpow.pop %v785
          %v787 = vsel %vm769, %v786, 0.0
          %788 = vadd.xlane.f32.xlu0 %v787
          %v789 = vpop.xlane.xlu0 %788
          %v790 = vrcp.pop %v789
          %v791 = vmul.f32 %v786, %v790
          %v792 = vstv %s570
          %v793 = vmul.f32 %v792, %v791
          %v794 = vsub.f32 %v780, %v793
          %v795 = vpack.c.bf16 %v794, %v794
          %s796 = smul.addr %s596, 4
          %s797 = scalar_lea.vmem [#allocation3], %s796
          %v798 = vld [vmem:[%s797] sm:$0xf]
          %v800 = vsel %vm769, %v795, 0
          %vm802 = vcmask 1043456
          %v804 = vsel %vm802, %v798, 0
          %806 = vmatprep.subr.bf16.mxu0 0
          %807 = vmatpush1.bf16.msra.mxu0 0
          %808 = vmatprep.subr.bf16.mxu0 0
          %809 = vmatpush1.bf16.msra.mxu0 0
          %810 = vmatprep.subr.bf16.mxu0 0
          %811 = vmatpush1.bf16.msra.mxu0 0
          %812 = vmatprep.subr.bf16.mxu0 0
          %813 = vmatpush1.bf16.msra.mxu0 0
          %814 = vmatprep.subr.bf16.mxu0 0
          %815 = vmatpush1.bf16.msra.mxu0 0
          %816 = vmatprep.subr.bf16.mxu0 0
          %817 = vmatpush1.bf16.msra.mxu0 0
          %818 = vmatprep.subr.bf16.mxu0 0
          %819 = vmatpush1.bf16.msra.mxu0 0
          %820 = vmatprep.subr.bf16.mxu0 0
          %821 = vmatpush1.bf16.msra.mxu0 %v804
          %822 = vmatprep.subr.bf16.mxu0 0
          %823 = vmatpush2.bf16.msra.mxu0 0
          %824 = vmatprep.subr.bf16.mxu0 0
          %825 = vmatpush2.bf16.msra.mxu0 0
          %826 = vmatprep.subr.bf16.mxu0 0
          %827 = vmatpush2.bf16.msra.mxu0 0
          %828 = vmatprep.subr.bf16.mxu0 0
          %829 = vmatpush2.bf16.msra.mxu0 0
          %830 = vmatprep.subr.bf16.mxu0 0
          %831 = vmatpush2.bf16.msra.mxu0 0
          %832 = vmatprep.subr.bf16.mxu0 0
          %833 = vmatpush2.bf16.msra.mxu0 0
          %834 = vmatprep.subr.bf16.mxu0 0
          %835 = vmatpush2.bf16.msra.mxu0 0
          %836 = vmatprep.subr.bf16.mxu0 0
          %837 = vmatpush2.bf16.msra.mxu0 0
          %838 = vmatprep.mubr.bf16.mxu0 0
          %839 = vmatmul.mubr.bf16.gmra.mxu0 %v800
          %v840 = vpop.f32.mrf.mxu0
          %v841 = vadd.f32 0.0, %v840
          %v842 = vpop.f32.mrf.mxu0
          %v843 = vpop.f32.mrf.mxu0
          %v844 = vpop.f32.mrf.mxu0
          %845 = vdwg.mxu0
          %v846 = vld [vmem:[%s7] sm:$0x1]
          %v847 = vmul.f32 %v841, %v841
          %v848 = vsel %vm769, %v847, 0.0
          %849 = vadd.xlane.f32.xlu0 %v848
          %v850 = vpop.xlane.xlu0 %849
          %v851 = vrcp.pop 8.0
          %v852 = vmul.f32 %v850, %v851
          %v853 = vadd.f32 %v852, 1e-06
          %v854 = vrsqrt.pop %v853
          %v855 = vmul.f32 %v841, %v854
          %v857 = vlaneseq
          %v858 = vshrl.u32 %v857, 7
          %v859 = vsub.s32 0, %v858
          %v860 = vrot.slane %v846, %v859
          %v862 = vmul.f32 %v855, %v860
          %v863 = vstv %s572
          %v864 = vmul.f32 %v862, %v863
          %v865 = vpack.c.bf16 %v864, %v864
          %s866 = smul.addr %s596, 4
          %s867 = scalar_lea.vmem %s5, %s866
          %v868 = vld [vmem:[%s867] sm:$0xf]
          %v870 = vsel %vm769, %v865, 0
          %v873 = vsel %vm802, %v868, 0
          %875 = vmatprep.subr.bf16.mxu0 0
          %876 = vmatpush1.bf16.msra.mxu0 0
          %877 = vmatprep.subr.bf16.mxu0 0
          %878 = vmatpush1.bf16.msra.mxu0 0
          %879 = vmatprep.subr.bf16.mxu0 0
          %880 = vmatpush1.bf16.msra.mxu0 0
          %881 = vmatprep.subr.bf16.mxu0 0
          %882 = vmatpush1.bf16.msra.mxu0 0
          %883 = vmatprep.subr.bf16.mxu0 0
          %884 = vmatpush1.bf16.msra.mxu0 0
          %885 = vmatprep.subr.bf16.mxu0 0
          %886 = vmatpush1.bf16.msra.mxu0 0
          %887 = vmatprep.subr.bf16.mxu0 0
          %888 = vmatpush1.bf16.msra.mxu0 0
          %889 = vmatprep.subr.bf16.mxu0 0
          %890 = vmatpush1.bf16.msra.mxu0 %v873
          %891 = vmatprep.subr.bf16.mxu0 0
          %892 = vmatpush2.bf16.msra.mxu0 0
          %893 = vmatprep.subr.bf16.mxu0 0
          %894 = vmatpush2.bf16.msra.mxu0 0
          %895 = vmatprep.subr.bf16.mxu0 0
          %896 = vmatpush2.bf16.msra.mxu0 0
          %897 = vmatprep.subr.bf16.mxu0 0
          %898 = vmatpush2.bf16.msra.mxu0 0
          %899 = vmatprep.subr.bf16.mxu0 0
          %900 = vmatpush2.bf16.msra.mxu0 0
          %901 = vmatprep.subr.bf16.mxu0 0
          %902 = vmatpush2.bf16.msra.mxu0 0
          %903 = vmatprep.subr.bf16.mxu0 0
          %904 = vmatpush2.bf16.msra.mxu0 0
          %905 = vmatprep.subr.bf16.mxu0 0
          %906 = vmatpush2.bf16.msra.mxu0 0
          %907 = vmatprep.mubr.bf16.mxu0 0
          %908 = vmatmul.mubr.bf16.gmra.mxu0 %v870
          %v909 = vpop.f32.mrf.mxu0
          %v910 = vadd.f32 0.0, %v909
          %v911 = vpop.f32.mrf.mxu0
          %v912 = vpop.f32.mrf.mxu0
          %v913 = vpop.f32.mrf.mxu0
          %914 = vdwg.mxu0
          %v915 = vadd.f32 %v601, %v910
        $region84: #{tpu_custom_call.1} parent=63 // loop_footer
          %s600 = sadd.s32 1, %s596
        $region85: #{tpu_custom_call.1} parent=63 // loop_footer_branch
          %595 = sbr.rel target = $region81
        $region86: #{tpu_custom_call.1} parent=63 // loop_exit
          _
        %v916 = vadd.f32 %v575, %v601
        %v917 = vld [vmem:[%s8] sm:$0x1]
        %v918 = vmul.f32 %v916, %v916
        %v919 = vsel %vm578, %v918, 0.0
        %920 = vadd.xlane.f32.xlu0 %v919
        %v921 = vpop.xlane.xlu0 %920
        %v922 = vmul.f32 %v921, %v582
        %v923 = vadd.f32 %v922, 1e-06
        %v924 = vrsqrt.pop %v923
        %v925 = vmul.f32 %v916, %v924
        %v927 = vlaneseq
        %v928 = vshrl.u32 %v927, 7
        %v929 = vsub.s32 0, %v928
        %v930 = vrot.slane %v917, %v929
        %v932 = vmul.f32 %v925, %v930
        %v933 = vpack.c.bf16 %v932, %v932
        %v934 = vld [vmem:[%s9] sm:$0xff]
        %v935 = vld [vmem:[%s9 + $0x8] sm:$0xff]
        %v936 = vld [vmem:[%s9 + $0x10] sm:$0xff]
        %v937 = vld [vmem:[%s9 + $0x18] sm:$0xff]
        %v942 = vunpack.c.l.b16 %v934
        %v943 = vunpack.c.h.b16 %v934
        %v944 = vunpack.c.l.b16 %v935
        %v945 = vunpack.c.h.b16 %v935
        %v946 = vunpack.c.l.b16 %v936
        %v947 = vunpack.c.h.b16 %v936
        %v948 = vunpack.c.l.b16 %v937
        %v949 = vunpack.c.h.b16 %v937
        %v950 = vpack.c.b16 %v944, %v942
        %v951 = vpack.c.b16 %v945, %v943
        %v952 = vpack.c.b16 %v948, %v946
        %v953 = vpack.c.b16 %v949, %v947
        %v959 = vsel %vm578, %v933, 0
        %961 = vmatprep.subr.bf16.mxu0 0
        %962 = vmatpush1.bf16.msra.mxu0 0
        %963 = vmatprep.subr.bf16.mxu0 0
        %964 = vmatpush1.bf16.msra.mxu0 0
        %965 = vmatprep.subr.bf16.mxu0 0
        %966 = vmatpush1.bf16.msra.mxu0 0
        %967 = vmatprep.subr.bf16.mxu0 0
        %968 = vmatpush1.bf16.msra.mxu0 0
        %969 = vmatprep.subr.bf16.mxu0 0
        %970 = vmatpush1.bf16.msra.mxu0 0
        %971 = vmatprep.subr.bf16.mxu0 0
        %972 = vmatpush1.bf16.msra.mxu0 0
        %973 = vmatprep.subr.bf16.mxu0 %v953
        %974 = vmatpush1.bf16.msra.mxu0 %v952
        %975 = vmatprep.subr.bf16.mxu0 %v951
        %976 = vmatpush1.bf16.msra.mxu0 %v950
        %977 = vmatprep.subr.bf16.mxu0 0
        %978 = vmatpush2.bf16.msra.mxu0 0
        %979 = vmatprep.subr.bf16.mxu0 0
        %980 = vmatpush2.bf16.msra.mxu0 0
        %981 = vmatprep.subr.bf16.mxu0 0
        %982 = vmatpush2.bf16.msra.mxu0 0
        %983 = vmatprep.subr.bf16.mxu0 0
        %984 = vmatpush2.bf16.msra.mxu0 0
        %985 = vmatprep.subr.bf16.mxu0 0
        %986 = vmatpush2.bf16.msra.mxu0 0
        %987 = vmatprep.subr.bf16.mxu0 0
        %988 = vmatpush2.bf16.msra.mxu0 0
        %989 = vmatprep.subr.bf16.mxu0 0
        %990 = vmatpush2.bf16.msra.mxu0 0
        %991 = vmatprep.subr.bf16.mxu0 0
        %992 = vmatpush2.bf16.msra.mxu0 0
        %993 = vmatprep.mubr.bf16.mxu0 0
        %994 = vmatmul.mubr.bf16.gmra.mxu0 %v959
        %v995 = vpop.f32.mrf.mxu0
        %v996 = vadd.f32 0.0, %v995
        %v997 = vpop.f32.mrf.mxu0
        %v998 = vadd.f32 0.0, %v997
        %v999 = vpop.f32.mrf.mxu0
        %v1000 = vpop.f32.mrf.mxu0
        %1001 = vdwg.mxu0
        %v1002 = vxor.u32 %v996, 2147483648
        %v1003 = vmul.f32 %v1002, 1.442695
        %v1004 = vpow.pop %v1003
        %v1005 = vadd.f32 %v1004, 1.0
        %v1006 = vrcp.pop %v1005
        %v1007 = vmul.f32 1.0, %v1006
        %v1008 = vmul.f32 %v996, %v1007
        %v1009 = vmul.f32 %v1008, %v998
        %v1010 = vpack.c.bf16 %v1009, %v1009
        %v1011 = vld [vmem:[%s10] sm:$0xf]
        %v1012 = vld [vmem:[%s10 + $0x4] sm:$0xf]
        %v1013 = vld [vmem:[%s10 + $0x8] sm:$0xf]
        %v1014 = vld [vmem:[%s10 + $0xc] sm:$0xf]
        %v1015 = vld [vmem:[%s10 + $0x10] sm:$0xf]
        %v1016 = vld [vmem:[%s10 + $0x14] sm:$0xf]
        %v1017 = vld [vmem:[%s10 + $0x18] sm:$0xf]
        %v1018 = vld [vmem:[%s10 + $0x1c] sm:$0xf]
        %v1019 = vld [vmem:[%s10 + $0x20] sm:$0xf]
        %v1020 = vld [vmem:[%s10 + $0x24] sm:$0xf]
        %v1021 = vld [vmem:[%s10 + $0x28] sm:$0xf]
        %v1022 = vld [vmem:[%s10 + $0x2c] sm:$0xf]
        %v1023 = vld [vmem:[%s10 + $0x30] sm:$0xf]
        %v1024 = vld [vmem:[%s10 + $0x34] sm:$0xf]
        %v1025 = vld [vmem:[%s10 + $0x38] sm:$0xf]
        %v1026 = vld [vmem:[%s10 + $0x3c] sm:$0xf]
        %v1043 = vunpack.c.l.b16 %v1011
        %v1044 = vunpack.c.l.b16 %v1012
        %v1045 = vunpack.c.l.b16 %v1013
        %v1046 = vunpack.c.l.b16 %v1014
        %v1047 = vunpack.c.l.b16 %v1015
        %v1048 = vunpack.c.l.b16 %v1016
        %v1049 = vunpack.c.l.b16 %v1017
        %v1050 = vunpack.c.l.b16 %v1018
        %v1051 = vunpack.c.l.b16 %v1019
        %v1052 = vunpack.c.l.b16 %v1020
        %v1053 = vunpack.c.l.b16 %v1021
        %v1054 = vunpack.c.l.b16 %v1022
        %v1055 = vunpack.c.l.b16 %v1023
        %v1056 = vunpack.c.l.b16 %v1024
        %v1057 = vunpack.c.l.b16 %v1025
        %v1058 = vunpack.c.l.b16 %v1026
        %v1059 = vpack.c.b16 %v1044, %v1043
        %v1060 = vpack.c.b16 %v1046, %v1045
        %v1061 = vpack.c.b16 %v1048, %v1047
        %v1062 = vpack.c.b16 %v1050, %v1049
        %v1063 = vpack.c.b16 %v1052, %v1051
        %v1064 = vpack.c.b16 %v1054, %v1053
        %v1065 = vpack.c.b16 %v1056, %v1055
        %v1066 = vpack.c.b16 %v1058, %v1057
        %1075 = vmatprep.subr.bf16.mxu0 0
        %1076 = vmatpush1.bf16.msra.mxu0 %v1066
        %1077 = vmatprep.subr.bf16.mxu0 0
        %1078 = vmatpush1.bf16.msra.mxu0 %v1065
        %1079 = vmatprep.subr.bf16.mxu0 0
        %1080 = vmatpush1.bf16.msra.mxu0 %v1064
        %1081 = vmatprep.subr.bf16.mxu0 0
        %1082 = vmatpush1.bf16.msra.mxu0 %v1063
        %1083 = vmatprep.subr.bf16.mxu0 0
        %1084 = vmatpush1.bf16.msra.mxu0 %v1062
        %1085 = vmatprep.subr.bf16.mxu0 0
        %1086 = vmatpush1.bf16.msra.mxu0 %v1061
        %1087 = vmatprep.subr.bf16.mxu0 0
        %1088 = vmatpush1.bf16.msra.mxu0 %v1060
        %1089 = vmatprep.subr.bf16.mxu0 0
        %1090 = vmatpush1.bf16.msra.mxu0 %v1059
        %1091 = vmatprep.subr.bf16.mxu0 0
        %1092 = vmatpush2.bf16.msra.mxu0 0
        %1093 = vmatprep.subr.bf16.mxu0 0
        %1094 = vmatpush2.bf16.msra.mxu0 0
        %1095 = vmatprep.subr.bf16.mxu0 0
        %1096 = vmatpush2.bf16.msra.mxu0 0
        %1097 = vmatprep.subr.bf16.mxu0 0
        %1098 = vmatpush2.bf16.msra.mxu0 0
        %1099 = vmatprep.subr.bf16.mxu0 0
        %1100 = vmatpush2.bf16.msra.mxu0 0
        %1101 = vmatprep.subr.bf16.mxu0 0
        %1102 = vmatpush2.bf16.msra.mxu0 0
        %1103 = vmatprep.subr.bf16.mxu0 0
        %1104 = vmatpush2.bf16.msra.mxu0 0
        %1105 = vmatprep.subr.bf16.mxu0 0
        %1106 = vmatpush2.bf16.msra.mxu0 0
        %1107 = vmatprep.mubr.bf16.mxu0 0
        %1108 = vmatmul.mubr.bf16.gmra.mxu0 %v1010
        %v1109 = vpop.f32.mrf.mxu0
        %v1110 = vadd.f32 0.0, %v1109
        %v1111 = vpop.f32.mrf.mxu0
        %v1112 = vpop.f32.mrf.mxu0
        %v1113 = vpop.f32.mrf.mxu0
        %1114 = vdwg.mxu0
        %v1115 = vadd.f32 %v916, %v1110
        %1116 = vst.msk [vmem:[%s405] sm:$0xff] %vm578, %v1115
        %s1117 = sand.u32 %s284, 1
        %s1118 = scalar_lea.sflag [#allocation5], %s1117
        %s1119 = sand.u32 %s284, 1
        %s1120 = smul.addr %s1119, 8
        %s1121 = scalar_lea.vmem [#allocation7], %s1120
        // Predicated region
        $region87: #{tpu_custom_call.1} parent=63 // pred_check
          %p1122 = pneg %p294
        $region88: #{tpu_custom_call.1} parent=63 // pred_check_branch
          %1124 = sbr.rel (%p1122) target = $region90
        $region89: #{tpu_custom_call.1} parent=63 // pred_region
          %s1126 = ssub.s32 128, 128
          %1127 = vsyncadd %s1118, %s1126
          %s1128 = sadd.s32 %s31, %s30
          %s1129 = smul.addr %s1128, 128
          %s1130 = scalar_lea.hbm %s11, %s1129
          %s1132 = sshll.u32 %s1121, 4
          %s1133 = int_to_ptr.vmem [resolvable:$true] %s1132
          %1135 = dma.vmem_to_hbm [thread:$0]  %s1133, 128, %s1130, %s1118
        $region90: #{tpu_custom_call.1} parent=63 // pred_fallthru
          _
      $region64: #{tpu_custom_call.1} parent=5 // pred_fallthru
        _
      %p1136 = scmp.le.s32.totalorder 2, %s21
      // Predicated region
      $region91: #{tpu_custom_call.1} parent=5 // pred_check
        %p1137 = pneg %p1136
      $region92: #{tpu_custom_call.1} parent=5 // pred_check_branch
        %1139 = sbr.rel (%p1137) target = $region94
      $region93: #{tpu_custom_call.1} parent=5 // pred_region
        %s1140 = ssub.s32 %s21, 2
        // Predicated region
        $region95: #{tpu_custom_call.1} parent=93 // pred_check
          %p1141 = pneg %p300
        $region96: #{tpu_custom_call.1} parent=93 // pred_check_branch
          %1143 = sbr.rel (%p1141) target = $region98
        $region97: #{tpu_custom_call.1} parent=93 // pred_region
          %s1144 = sand.u32 %s285, 1
          %s1145 = scalar_lea.sflag [#allocation5], %s1144
          %s1146 = sand.u32 %s285, 1
          %s1147 = smul.addr %s1146, 8
          %s1148 = scalar_lea.vmem [#allocation7], %s1147
          %1149 = dma.done %s1145, 128
        $region98: #{tpu_custom_call.1} parent=93 // pred_fallthru
          _
      $region94: #{tpu_custom_call.1} parent=5 // pred_fallthru
        _
    $region6: #{tpu_custom_call.1} parent=1 // loop_footer
      %s25 = sadd.s32 1, %s21
    $region7: #{tpu_custom_call.1} parent=1 // loop_footer_branch
      %20 = sbr.rel target = $region3
    $region8: #{tpu_custom_call.1} parent=1 // loop_exit
      _
    %1150 = vsyncpa [#allocation5], 1
    %s1151 = scalar_lea.sflag [#allocation5], 1
    %1152 = vsyncpa %s1151, 1
    %1153 = vsyncpa [#allocation6], 1
    %s1154 = scalar_lea.sflag [#allocation6], 1
    %1155 = vsyncpa %s1154, 1

// kernel: tpu_custom_call.1
$region0: #{tpu_custom_call.1}
  #allocation0 [shape = 'u32[]', space=smem, size = 0x4, offset = 0x4, fixed_abs, tag = 'smem constant byte address 0x4 - core index']
  #allocation1 [shape = 'u32[144,128]{1,0:T(1,128)}', space=vmem, size = 0x12000, scoped, tag = 'internal scratch']
  #allocation2 [shape = 'bf16[4,8,8]{2,1,0:T(8,128)(2,1)}', space=vmem, size = 0x2000, scoped, tag = 'scratch operand']
  #allocation3 [shape = 'bf16[4,8,8]{2,1,0:T(8,128)(2,1)}', space=vmem, size = 0x2000, scoped, tag = 'scratch operand']
  %s0 = inlined_call_operand.vmem [shape: f32[2], index: 0, kind: input, shape index: {}]
  %s1 = inlined_call_operand.vmem [shape: f32[2,8,32], index: 1, kind: input, shape index: {}]
  %s2 = inlined_call_operand.vmem [shape: bf16[4,32,8], index: 2, kind: input, shape index: {}]
  %s3 = inlined_call_operand.vmem [shape: bf16[4,32,8], index: 3, kind: input, shape index: {}]
  %s4 = inlined_call_operand.vmem [shape: bf16[4,32,8], index: 4, kind: input, shape index: {}]
  %s5 = inlined_call_operand.vmem [shape: bf16[4,8,32], index: 5, kind: input, shape index: {}]
  %s6 = inlined_call_operand.vmem [shape: f32[1,32], index: 6, kind: input, shape index: {}]
  %s7 = inlined_call_operand.vmem [shape: f32[1,8], index: 7, kind: input, shape index: {}]
  %s8 = inlined_call_operand.vmem [shape: f32[1,32], index: 8, kind: input, shape index: {}]
  %s9 = inlined_call_operand.vmem [shape: bf16[32,256], index: 9, kind: input, shape index: {}]
  %s10 = inlined_call_operand.vmem [shape: bf16[128,32], index: 10, kind: input, shape index: {}]
  %s11 = inlined_call_operand.hbm [shape: f32[2,8,32], index: 11, kind: output, shape index: {}]
  %s12 = sld [smem:[#allocation0]]
  $region99: #{tpu_custom_call.1} parent=0
    _
  %s14 = ssub.s32 1, %s12
  %s15 = scalar_select 0, %s14, %s12
  $region1: #{tpu_custom_call.1} parent=0
    #allocation4 [shape = 'u8[512]{0}', space=smem, size = 0x200, scoped, tag = 'input window, operand 0, single buffered']
    #allocation5 [shape = 's32[2]{0}', space=sflag, size = 0x8, scoped, tag = 'scoped memory for tpu_custom_call.1']
    #allocation6 [shape = 's32[2]{0}', space=sflag, size = 0x8, scoped, tag = 'scoped memory for tpu_custom_call.1']
    #allocation7 [shape = 'u8[8192]{0}', space=vmem, size = 0x2000, scoped, tag = 'output window, operand 0']
    %16 = vsyncpa [#allocation6], 0
    %17 = vsyncpa [#allocation5], 0
    %s18 = scalar_lea.sflag [#allocation5], 1
    %19 = vsyncpa %s18, 0
    loop: start=0, step=1, limit=4
    $region2: #{tpu_custom_call.1} parent=1 // loop_pre_header
      _
    $region3: #{tpu_custom_call.1} parent=1 // loop_header
      %s21 = sphi 0, %s25
      %p22 = scmp.ge.s32.totalorder %s21, 4
      %s28 = sphi 0, %s40
      %s29 = sphi 0, %s36
      %s30 = sphi 0, %s28
      %s31 = sphi 0, %s29
      %s32 = sphi 0, %s30
      %s33 = sphi 0, %s31
      %s41 = sphi 0, %s41
      %s43 = sphi 0, %s41
      %s44 = sphi 0, %s43
      %s58 = sphi 0, %s44
      %s64 = sphi 0, %s66
      %s67 = sphi 0, %s64
      %s68 = sphi 0, %s67
      %s84 = sphi 0, %s68
      %s88 = sphi 0, %s88
      %s90 = sphi 0, %s88
      %s91 = sphi 0, %s90
      %s105 = sphi 0, %s91
      %s109 = sphi 0, %s109
      %s111 = sphi 0, %s109
      %s112 = sphi 0, %s111
      %s126 = sphi 0, %s112
      %s130 = sphi 0, %s130
      %s132 = sphi 0, %s130
      %s133 = sphi 0, %s132
      %s147 = sphi 0, %s133
      %s151 = sphi 0, %s151
      %s153 = sphi 0, %s151
      %s154 = sphi 0, %s153
      %s168 = sphi 0, %s154
      %s172 = sphi 0, %s172
      %s174 = sphi 0, %s172
      %s175 = sphi 0, %s174
      %s189 = sphi 0, %s175
      %s193 = sphi 0, %s193
      %s195 = sphi 0, %s193
      %s196 = sphi 0, %s195
      %s210 = sphi 0, %s196
      %s214 = sphi 0, %s214
      %s216 = sphi 0, %s214
      %s217 = sphi 0, %s216
      %s231 = sphi 0, %s217
      %s235 = sphi 0, %s235
      %s237 = sphi 0, %s235
      %s238 = sphi 0, %s237
      %s252 = sphi 0, %s238
      %s256 = sphi 0, %s256
      %s258 = sphi 0, %s256
      %s259 = sphi 0, %s258
      %s273 = sphi 0, %s259
      %s281 = sphi 0, %s283
      %s284 = sphi 0, %s281
      %s285 = sphi 0, %s284
      %s301 = sphi 0, %s285
    $region4: #{tpu_custom_call.1} parent=1 // loop_header_branch
      %24 = sbr.rel (%p22) target = $region8
    $region5: #{tpu_custom_call.1} parent=1 // loop_body
      %s26 = ssub.s32 %s21, 1
      %s27 = ssub.s32 %s21, 2
      %s34 = sadd.s32 1, %s29
      %p35 = scmp.ge.s32.totalorder %s34, 1
      %s36 = scalar_select %p35, 0, %s34
      %s37 = sadd.s32 1, %s28
      %s38 = scalar_select %p35, %s37, %s28
      %p39 = scmp.ge.s32.totalorder %s38, 2
      %s40 = scalar_select %p39, 0, %s38
      %s42 = sadd.s32 %s41, 1
      %p45 = scmp.eq.s32.totalorder %s21, 1
      %p46 = scmp.ne.s32.totalorder %s41, %s43
      %p47 = scmp.eq.s32.totalorder %s21, 0
      %p48 = por %p46, %p47
      %p49 = scmp.ne.s32.totalorder %s41, %s43
      %p50 = scmp.eq.s32.totalorder %s26, 1
      %p51 = por %p49, %p50
      %p52 = scmp.ne.s32.totalorder %s43, %s44
      %p53 = scmp.eq.s32.totalorder %s26, 0
      %p54 = por %p52, %p53
      %p55 = scmp.ne.s32.totalorder %s43, %s44
      %p56 = scmp.eq.s32.totalorder %s27, 1
      %p57 = por %p55, %p56
      %p59 = scmp.ne.s32.totalorder %s44, %s58
      %p60 = scmp.eq.s32.totalorder %s27, 0
      %p61 = por %p59, %p60
      %s62 = ssub.s32 %s28, %s40
      %p63 = scmp.eq.s32.totalorder %s62, 0
      %s65 = sadd.s32 %s64, 1
      %s66 = scalar_select %p63, %s64, %s65
      %p69 = pneg %p63
      %p70 = scmp.eq.s32.totalorder %s21, 1
      %p71 = por %p69, %p70
      %p72 = scmp.ne.s32.totalorder %s64, %s67
      %p73 = scmp.eq.s32.totalorder %s21, 0
      %p74 = por %p72, %p73
      %p75 = scmp.ne.s32.totalorder %s64, %s67
      %p76 = scmp.eq.s32.totalorder %s26, 1
      %p77 = por %p75, %p76
      %p78 = scmp.ne.s32.totalorder %s67, %s68
      %p79 = scmp.eq.s32.totalorder %s26, 0
      %p80 = por %p78, %p79
      %p81 = scmp.ne.s32.totalorder %s67, %s68
      %p82 = scmp.eq.s32.totalorder %s27, 1
      %p83 = por %p81, %p82
      %p85 = scmp.ne.s32.totalorder %s68, %s84
      %p86 = scmp.eq.s32.totalorder %s27, 0
      %p87 = por %p85, %p86
      %s89 = sadd.s32 %s88, 1
      %p92 = scmp.eq.s32.totalorder %s21, 1
      %p93 = scmp.ne.s32.totalorder %s88, %s90
      %p94 = scmp.eq.s32.totalorder %s21, 0
      %p95 = por %p93, %p94
      %p96 = scmp.ne.s32.totalorder %s88, %s90
      %p97 = scmp.eq.s32.totalorder %s26, 1
      %p98 = por %p96, %p97
      %p99 = scmp.ne.s32.totalorder %s90, %s91
      %p100 = scmp.eq.s32.totalorder %s26, 0
      %p101 = por %p99, %p100
      %p102 = scmp.ne.s32.totalorder %s90, %s91
      %p103 = scmp.eq.s32.totalorder %s27, 1
      %p104 = por %p102, %p103
      %p106 = scmp.ne.s32.totalorder %s91, %s105
      %p107 = scmp.eq.s32.totalorder %s27, 0
      %p108 = por %p106, %p107
      %s110 = sadd.s32 %s109, 1
      %p113 = scmp.eq.s32.totalorder %s21, 1
      %p114 = scmp.ne.s32.totalorder %s109, %s111
      %p115 = scmp.eq.s32.totalorder %s21, 0
      %p116 = por %p114, %p115
      %p117 = scmp.ne.s32.totalorder %s109, %s111
      %p118 = scmp.eq.s32.totalorder %s26, 1
      %p119 = por %p117, %p118
      %p120 = scmp.ne.s32.totalorder %s111, %s112
      %p121 = scmp.eq.s32.totalorder %s26, 0
      %p122 = por %p120, %p121
      %p123 = scmp.ne.s32.totalorder %s111, %s112
      %p124 = scmp.eq.s32.totalorder %s27, 1
      %p125 = por %p123, %p124
      %p127 = scmp.ne.s32.totalorder %s112, %s126
      %p128 = scmp.eq.s32.totalorder %s27, 0
      %p129 = por %p127, %p128
      %s131 = sadd.s32 %s130, 1
      %p134 = scmp.eq.s32.totalorder %s21, 1
      %p135 = scmp.ne.s32.totalorder %s130, %s132
      %p136 = scmp.eq.s32.totalorder %s21, 0
      %p137 = por %p135, %p136
      %p138 = scmp.ne.s32.totalorder %s130, %s132
      %p139 = scmp.eq.s32.totalorder %s26, 1
      %p140 = por %p138, %p139
      %p141 = scmp.ne.s32.totalorder %s132, %s133
      %p142 = scmp.eq.s32.totalorder %s26, 0
      %p143 = por %p141, %p142
      %p144 = scmp.ne.s32.totalorder %s132, %s133
      %p145 = scmp.eq.s32.totalorder %s27, 1
      %p146 = por %p144, %p145
      %p148 = scmp.ne.s32.totalorder %s133, %s147
      %p149 = scmp.eq.s32.totalorder %s27, 0
      %p150 = por %p148, %p149
      %s152 = sadd.s32 %s151, 1
      %p155 = scmp.eq.s32.totalorder %s21, 1
      %p156 = scmp.ne.s32.totalorder %s151, %s153
      %p157 = scmp.eq.s32.totalorder %s21, 0
      %p158 = por %p156, %p157
      %p159 = scmp.ne.s32.totalorder %s151, %s153
      %p160 = scmp.eq.s32.totalorder %s26, 1
      %p161 = por %p159, %p160
      %p162 = scmp.ne.s32.totalorder %s153, %s154
      %p163 = scmp.eq.s32.totalorder %s26, 0
      %p164 = por %p162, %p163
      %p165 = scmp.ne.s32.totalorder %s153, %s154
      %p166 = scmp.eq.s32.totalorder %s27, 1
      %p167 = por %p165, %p166
      %p169 = scmp.ne.s32.totalorder %s154, %s168
      %p170 = scmp.eq.s32.totalorder %s27, 0
      %p171 = por %p169, %p170
      %s173 = sadd.s32 %s172, 1
      %p176 = scmp.eq.s32.totalorder %s21, 1
      %p177 = scmp.ne.s32.totalorder %s172, %s174
      %p178 = scmp.eq.s32.totalorder %s21, 0
      %p179 = por %p177, %p178
      %p180 = scmp.ne.s32.totalorder %s172, %s174
      %p181 = scmp.eq.s32.totalorder %s26, 1
      %p182 = por %p180, %p181
      %p183 = scmp.ne.s32.totalorder %s174, %s175
      %p184 = scmp.eq.s32.totalorder %s26, 0
      %p185 = por %p183, %p184
      %p186 = scmp.ne.s32.totalorder %s174, %s175
      %p187 = scmp.eq.s32.totalorder %s27, 1
      %p188 = por %p186, %p187
      %p190 = scmp.ne.s32.totalorder %s175, %s189
      %p191 = scmp.eq.s32.totalorder %s27, 0
      %p192 = por %p190, %p191
      %s194 = sadd.s32 %s193, 1
      %p197 = scmp.eq.s32.totalorder %s21, 1
      %p198 = scmp.ne.s32.totalorder %s193, %s195
      %p199 = scmp.eq.s32.totalorder %s21, 0
      %p200 = por %p198, %p199
      %p201 = scmp.ne.s32.totalorder %s193, %s195
      %p202 = scmp.eq.s32.totalorder %s26, 1
      %p203 = por %p201, %p202
      %p204 = scmp.ne.s32.totalorder %s195, %s196
      %p205 = scmp.eq.s32.totalorder %s26, 0
      %p206 = por %p204, %p205
      %p207 = scmp.ne.s32.totalorder %s195, %s196
      %p208 = scmp.eq.s32.totalorder %s27, 1
      %p209 = por %p207, %p208
      %p211 = scmp.ne.s32.totalorder %s196, %s210
      %p212 = scmp.eq.s32.totalorder %s27, 0
      %p213 = por %p211, %p212
      %s215 = sadd.s32 %s214, 1
      %p218 = scmp.eq.s32.totalorder %s21, 1
      %p219 = scmp.ne.s32.totalorder %s214, %s216
      %p220 = scmp.eq.s32.totalorder %s21, 0
      %p221 = por %p219, %p220
      %p222 = scmp.ne.s32.totalorder %s214, %s216
      %p223 = scmp.eq.s32.totalorder %s26, 1
      %p224 = por %p222, %p223
      %p225 = scmp.ne.s32.totalorder %s216, %s217
      %p226 = scmp.eq.s32.totalorder %s26, 0
      %p227 = por %p225, %p226
      %p228 = scmp.ne.s32.totalorder %s216, %s217
      %p229 = scmp.eq.s32.totalorder %s27, 1
      %p230 = por %p228, %p229
      %p232 = scmp.ne.s32.totalorder %s217, %s231
      %p233 = scmp.eq.s32.totalorder %s27, 0
      %p234 = por %p232, %p233
      %s236 = sadd.s32 %s235, 1
      %p239 = scmp.eq.s32.totalorder %s21, 1
      %p240 = scmp.ne.s32.totalorder %s235, %s237
      %p241 = scmp.eq.s32.totalorder %s21, 0
      %p242 = por %p240, %p241
      %p243 = scmp.ne.s32.totalorder %s235, %s237
      %p244 = scmp.eq.s32.totalorder %s26, 1
      %p245 = por %p243, %p244
      %p246 = scmp.ne.s32.totalorder %s237, %s238
      %p247 = scmp.eq.s32.totalorder %s26, 0
      %p248 = por %p246, %p247
      %p249 = scmp.ne.s32.totalorder %s237, %s238
      %p250 = scmp.eq.s32.totalorder %s27, 1
      %p251 = por %p249, %p250
      %p253 = scmp.ne.s32.totalorder %s238, %s252
      %p254 = scmp.eq.s32.totalorder %s27, 0
      %p255 = por %p253, %p254
      %s257 = sadd.s32 %s256, 1
      %p260 = scmp.eq.s32.totalorder %s21, 1
      %p261 = scmp.ne.s32.totalorder %s256, %s258
      %p262 = scmp.eq.s32.totalorder %s21, 0
      %p263 = por %p261, %p262
      %p264 = scmp.ne.s32.totalorder %s256, %s258
      %p265 = scmp.eq.s32.totalorder %s26, 1
      %p266 = por %p264, %p265
      %p267 = scmp.ne.s32.totalorder %s258, %s259
      %p268 = scmp.eq.s32.totalorder %s26, 0
      %p269 = por %p267, %p268
      %p270 = scmp.ne.s32.totalorder %s258, %s259
      %p271 = scmp.eq.s32.totalorder %s27, 1
      %p272 = por %p270, %p271
      %p274 = scmp.ne.s32.totalorder %s259, %s273
      %p275 = scmp.eq.s32.totalorder %s27, 0
      %p276 = por %p274, %p275
      %s277 = ssub.s32 %s28, %s40
      %s278 = ssub.s32 %s29, %s36
      %s279 = sor.u32 %s277, %s278
      %p280 = scmp.eq.s32.totalorder %s279, 0
      %s282 = sadd.s32 %s281, 1
      %s283 = scalar_select %p280, %s281, %s282
      %p286 = pneg %p280
      %p287 = scmp.eq.s32.totalorder %s21, 1
      %p288 = por %p286, %p287
      %p289 = scmp.ne.s32.totalorder %s281, %s284
      %p290 = scmp.eq.s32.totalorder %s21, 0
      %p291 = por %p289, %p290
      %p292 = scmp.ne.s32.totalorder %s281, %s284
      %p293 = scmp.eq.s32.totalorder %s26, 1
      %p294 = por %p292, %p293
      %p295 = scmp.ne.s32.totalorder %s284, %s285
      %p296 = scmp.eq.s32.totalorder %s26, 0
      %p297 = por %p295, %p296
      %p298 = scmp.ne.s32.totalorder %s284, %s285
      %p299 = scmp.eq.s32.totalorder %s27, 1
      %p300 = por %p298, %p299
      %p302 = scmp.ne.s32.totalorder %s285, %s301
      %p303 = scmp.eq.s32.totalorder %s27, 0
      %p304 = por %p302, %p303
      %p305 = scmp.le.s32.totalorder 1, %s21
      %p306 = scmp.lt.s32.totalorder %s21, 3
      %p307 = pnand %p305, %p306
      %p308 = pneg %p307
      // Predicated region
      $region9: #{tpu_custom_call.1} parent=5 // pred_check
        _
      $region10: #{tpu_custom_call.1} parent=5 // pred_check_branch
        %310 = sbr.rel (%p307) target = $region12
      $region11: #{tpu_custom_call.1} parent=5 // pred_region
        %s311 = ssub.s32 %s21, 1
        // Predicated region
        $region13: #{tpu_custom_call.1} parent=11 // pred_check
          %p312 = pneg %p54
        $region14: #{tpu_custom_call.1} parent=11 // pred_check_branch
          %314 = sbr.rel (%p312) target = $region16
        $region15: #{tpu_custom_call.1} parent=11 // pred_region
          %s316 = ssub.s32 16, 16
          %317 = vsyncadd [#allocation6], %s316
          %s319 = sshll.u32 %s0, 4
          %s320 = int_to_ptr.vmem [resolvable:$true] %s319
          %322 = dma.vmem_to_smem %s320, 16, [#allocation4], [#allocation6]
        $region16: #{tpu_custom_call.1} parent=11 // pred_fallthru
          _
        // Predicated region
        $region17: #{tpu_custom_call.1} parent=11 // pred_check
          %p323 = pneg %p101
        $region18: #{tpu_custom_call.1} parent=11 // pred_check_branch
          %325 = sbr.rel (%p323) target = $region20
        $region19: #{tpu_custom_call.1} parent=11 // pred_region
          _
        $region20: #{tpu_custom_call.1} parent=11 // pred_fallthru
          _
        // Predicated region
        $region21: #{tpu_custom_call.1} parent=11 // pred_check
          %p326 = pneg %p122
        $region22: #{tpu_custom_call.1} parent=11 // pred_check_branch
          %328 = sbr.rel (%p326) target = $region24
        $region23: #{tpu_custom_call.1} parent=11 // pred_region
          _
        $region24: #{tpu_custom_call.1} parent=11 // pred_fallthru
          _
        // Predicated region
        $region25: #{tpu_custom_call.1} parent=11 // pred_check
          %p329 = pneg %p143
        $region26: #{tpu_custom_call.1} parent=11 // pred_check_branch
          %331 = sbr.rel (%p329) target = $region28
        $region27: #{tpu_custom_call.1} parent=11 // pred_region
          _
        $region28: #{tpu_custom_call.1} parent=11 // pred_fallthru
          _
        // Predicated region
        $region29: #{tpu_custom_call.1} parent=11 // pred_check
          %p332 = pneg %p164
        $region30: #{tpu_custom_call.1} parent=11 // pred_check_branch
          %334 = sbr.rel (%p332) target = $region32
        $region31: #{tpu_custom_call.1} parent=11 // pred_region
          _
        $region32: #{tpu_custom_call.1} parent=11 // pred_fallthru
          _
        // Predicated region
        $region33: #{tpu_custom_call.1} parent=11 // pred_check
          %p335 = pneg %p185
        $region34: #{tpu_custom_call.1} parent=11 // pred_check_branch
          %337 = sbr.rel (%p335) target = $region36
        $region35: #{tpu_custom_call.1} parent=11 // pred_region
          _
        $region36: #{tpu_custom_call.1} parent=11 // pred_fallthru
          _
        // Predicated region
        $region37: #{tpu_custom_call.1} parent=11 // pred_check
          %p338 = pneg %p206
        $region38: #{tpu_custom_call.1} parent=11 // pred_check_branch
          %340 = sbr.rel (%p338) target = $region40
        $region39: #{tpu_custom_call.1} parent=11 // pred_region
          _
        $region40: #{tpu_custom_call.1} parent=11 // pred_fallthru
          _
        // Predicated region
        $region41: #{tpu_custom_call.1} parent=11 // pred_check
          %p341 = pneg %p227
        $region42: #{tpu_custom_call.1} parent=11 // pred_check_branch
          %343 = sbr.rel (%p341) target = $region44
        $region43: #{tpu_custom_call.1} parent=11 // pred_region
          _
        $region44: #{tpu_custom_call.1} parent=11 // pred_fallthru
          _
        // Predicated region
        $region45: #{tpu_custom_call.1} parent=11 // pred_check
          %p344 = pneg %p248
        $region46: #{tpu_custom_call.1} parent=11 // pred_check_branch
          %346 = sbr.rel (%p344) target = $region48
        $region47: #{tpu_custom_call.1} parent=11 // pred_region
          _
        $region48: #{tpu_custom_call.1} parent=11 // pred_fallthru
          _
        // Predicated region
        $region49: #{tpu_custom_call.1} parent=11 // pred_check
          %p347 = pneg %p269
        $region50: #{tpu_custom_call.1} parent=11 // pred_check_branch
          %349 = sbr.rel (%p347) target = $region52
        $region51: #{tpu_custom_call.1} parent=11 // pred_region
          _
        $region52: #{tpu_custom_call.1} parent=11 // pred_fallthru
          _
      $region12: #{tpu_custom_call.1} parent=5 // pred_fallthru
        _
      %p350 = scmp.lt.s32.totalorder %s21, 2
      // Predicated region
      $region53: #{tpu_custom_call.1} parent=5 // pred_check
        %p351 = pneg %p350
      $region54: #{tpu_custom_call.1} parent=5 // pred_check_branch
        %353 = sbr.rel (%p351) target = $region56
      $region55: #{tpu_custom_call.1} parent=5 // pred_region
        // Predicated region
        $region57: #{tpu_custom_call.1} parent=55 // pred_check
          %p354 = pneg %p74
        $region58: #{tpu_custom_call.1} parent=55 // pred_check_branch
          %356 = sbr.rel (%p354) target = $region60
        $region59: #{tpu_custom_call.1} parent=55 // pred_region
          %p357 = scmp.lt.s32.totalorder %s28, 1
          %s358 = scalar_select %p357, %s28, 1
          %s359 = smul.addr %s358, 8
          %s360 = scalar_lea.vmem %s1, %s359
        $region60: #{tpu_custom_call.1} parent=55 // pred_fallthru
          _
      $region56: #{tpu_custom_call.1} parent=5 // pred_fallthru
        _
      %p361 = scmp.le.s32.totalorder 1, %s21
      %p362 = scmp.lt.s32.totalorder %s21, 3
      %p363 = pnand %p361, %p362
      %p364 = pneg %p363
      // Predicated region
      $region61: #{tpu_custom_call.1} parent=5 // pred_check
        _
      $region62: #{tpu_custom_call.1} parent=5 // pred_check_branch
        %366 = sbr.rel (%p363) target = $region64
      $region63: #{tpu_custom_call.1} parent=5 // pred_region
        %s367 = ssub.s32 %s21, 1
        // Predicated region
        $region65: #{tpu_custom_call.1} parent=63 // pred_check
          %p368 = pneg %p54
        $region66: #{tpu_custom_call.1} parent=63 // pred_check_branch
          %370 = sbr.rel (%p368) target = $region68
        $region67: #{tpu_custom_call.1} parent=63 // pred_region
          %371 = dma.done [#allocation6], 16
        $region68: #{tpu_custom_call.1} parent=63 // pred_fallthru
          _
        %372 = sfence
        %p373 = pneg %p54
        %p374 = pneg %p51
        %p375 = scmp.lt.s32.totalorder %s30, 1
        %s376 = scalar_select %p375, %s30, 1
        %s377 = smul.addr %s376, 8
        %s378 = scalar_lea.vmem %s1, %s377
        %p379 = pneg %p80
        %p380 = pneg %p77
        %p381 = pneg %p101
        %p382 = pneg %p98
        %p383 = pneg %p122
        %p384 = pneg %p119
        %p385 = pneg %p143
        %p386 = pneg %p140
        %p387 = pneg %p164
        %p388 = pneg %p161
        %p389 = pneg %p185
        %p390 = pneg %p182
        %p391 = pneg %p206
        %p392 = pneg %p203
        %p393 = pneg %p227
        %p394 = pneg %p224
        %p395 = pneg %p248
        %p396 = pneg %p245
        %p397 = pneg %p269
        %p398 = pneg %p266
        %p399 = pneg %p297
        %p400 = pneg %p294
        %s401 = sand.u32 %s284, 1
        %s402 = scalar_lea.sflag [#allocation5], %s401
        %s403 = sand.u32 %s284, 1
        %s404 = smul.addr %s403, 8
        %s405 = scalar_lea.vmem [#allocation7], %s404
        %p406 = scmp.lt.s32.totalorder %s30, 1
        %s407 = scalar_select %p406, %s30, 1
        %s408 = smul.addr %s407, 8
        %s409 = scalar_lea.vmem %s1, %s408
        %p411 = scmp.eq.s32.totalorder %s31, 0
        // Predicated region
        $region69: #{tpu_custom_call.1} parent=63 // pred_check
          %p412 = pneg %p411
        $region70: #{tpu_custom_call.1} parent=63 // pred_check_branch
          %414 = sbr.rel (%p412) target = $region72
        $region71: #{tpu_custom_call.1} parent=63 // pred_region
          %v415 = vld [vmem:[%s409] sm:$0xff]
          %v416 = vld [vmem:[%s6] sm:$0x1]
          %v417 = vmul.f32 %v415, %v415
          %vm418 = vcmask 261120
          %v419 = vsel %vm418, %v417, 0.0
          %420 = vadd.xlane.f32.xlu0 %v419
          %v421 = vpop.xlane.xlu0 %420
          %v422 = vrcp.pop 32.0
          %v423 = vmul.f32 %v421, %v422
          %v424 = vadd.f32 %v423, 1e-06
          %v425 = vrsqrt.pop %v424
          %v426 = vmul.f32 %v415, %v425
          %v428 = vlaneseq
          %v429 = vshrl.u32 %v428, 7
          %v430 = vsub.s32 0, %v429
          %v431 = vrot.slane %v416, %v430
          %v433 = vmul.f32 %v426, %v431
          %v434 = vpack.c.bf16 %v433, %v433
          loop: start=0, step=1, limit=4
          $region73: #{tpu_custom_call.1} parent=71 // loop_pre_header
            _
          $region74: #{tpu_custom_call.1} parent=71 // loop_header
            %s436 = sphi 0, %s440
            %p437 = scmp.ge.s32.totalorder %s436, 4
          $region75: #{tpu_custom_call.1} parent=71 // loop_header_branch
            %439 = sbr.rel (%p437) target = $region79
          $region76: #{tpu_custom_call.1} parent=71 // loop_body
            %s441 = smul.u32 %s436, 4
            %s442 = smul.addr %s441, 4
            %s443 = scalar_lea.vmem %s3, %s442
            %v444 = vld [vmem:[%s443] sm:$0xf]
            %v445 = vld [vmem:[%s443 + $0x4] sm:$0xf]
            %v446 = vld [vmem:[%s443 + $0x8] sm:$0xf]
            %v447 = vld [vmem:[%s443 + $0xc] sm:$0xf]
            %v452 = vunpack.c.l.b16 %v444
            %v453 = vunpack.c.l.b16 %v445
            %v454 = vunpack.c.l.b16 %v446
            %v455 = vunpack.c.l.b16 %v447
            %v456 = vpack.c.b16 %v453, %v452
            %v457 = vpack.c.b16 %v455, %v454
            %v461 = vsel %vm418, %v434, 0
            %463 = vmatprep.subr.bf16.mxu0 0
            %464 = vmatpush1.bf16.msra.mxu0 0
            %465 = vmatprep.subr.bf16.mxu0 0
            %466 = vmatpush1.bf16.msra.mxu0 0
            %467 = vmatprep.subr.bf16.mxu0 0
            %468 = vmatpush1.bf16.msra.mxu0 0
            %469 = vmatprep.subr.bf16.mxu0 0
            %470 = vmatpush1.bf16.msra.mxu0 0
            %471 = vmatprep.subr.bf16.mxu0 0
            %472 = vmatpush1.bf16.msra.mxu0 0
            %473 = vmatprep.subr.bf16.mxu0 0
            %474 = vmatpush1.bf16.msra.mxu0 0
            %475 = vmatprep.subr.bf16.mxu0 0
            %476 = vmatpush1.bf16.msra.mxu0 %v457
            %477 = vmatprep.subr.bf16.mxu0 0
            %478 = vmatpush1.bf16.msra.mxu0 %v456
            %479 = vmatprep.subr.bf16.mxu0 0
            %480 = vmatpush2.bf16.msra.mxu0 0
            %481 = vmatprep.subr.bf16.mxu0 0
            %482 = vmatpush2.bf16.msra.mxu0 0
            %483 = vmatprep.subr.bf16.mxu0 0
            %484 = vmatpush2.bf16.msra.mxu0 0
            %485 = vmatprep.subr.bf16.mxu0 0
            %486 = vmatpush2.bf16.msra.mxu0 0
            %487 = vmatprep.subr.bf16.mxu0 0
            %488 = vmatpush2.bf16.msra.mxu0 0
            %489 = vmatprep.subr.bf16.mxu0 0
            %490 = vmatpush2.bf16.msra.mxu0 0
            %491 = vmatprep.subr.bf16.mxu0 0
            %492 = vmatpush2.bf16.msra.mxu0 0
            %493 = vmatprep.subr.bf16.mxu0 0
            %494 = vmatpush2.bf16.msra.mxu0 0
            %495 = vmatprep.mubr.bf16.mxu0 0
            %496 = vmatmul.mubr.bf16.gmra.mxu0 %v461
            %v497 = vpop.f32.mrf.mxu0
            %v498 = vadd.f32 0.0, %v497
            %v499 = vpop.f32.mrf.mxu0
            %v500 = vpop.f32.mrf.mxu0
            %v501 = vpop.f32.mrf.mxu0
            %502 = vdwg.mxu0
            %v503 = vpack.c.bf16 %v498, %v498
            %s504 = smul.addr %s436, 4
            %s505 = scalar_lea.vmem [#allocation2], %s504
            %vm506 = vcmask 60416
            %507 = vst.msk [vmem:[%s505] sm:$0xf] %vm506, %v503
            %s508 = smul.addr %s441, 4
            %s509 = scalar_lea.vmem %s4, %s508
            %v510 = vld [vmem:[%s509] sm:$0xf]
            %v511 = vld [vmem:[%s509 + $0x4] sm:$0xf]
            %v512 = vld [vmem:[%s509 + $0x8] sm:$0xf]
            %v513 = vld [vmem:[%s509 + $0xc] sm:$0xf]
            %v518 = vunpack.c.l.b16 %v510
            %v519 = vunpack.c.l.b16 %v511
            %v520 = vunpack.c.l.b16 %v512
            %v521 = vunpack.c.l.b16 %v513
            %v522 = vpack.c.b16 %v519, %v518
            %v523 = vpack.c.b16 %v521, %v520
            %526 = vmatprep.subr.bf16.mxu0 0
            %527 = vmatpush1.bf16.msra.mxu0 0
            %528 = vmatprep.subr.bf16.mxu0 0
            %529 = vmatpush1.bf16.msra.mxu0 0
            %530 = vmatprep.subr.bf16.mxu0 0
            %531 = vmatpush1.bf16.msra.mxu0 0
            %532 = vmatprep.subr.bf16.mxu0 0
            %533 = vmatpush1.bf16.msra.mxu0 0
            %534 = vmatprep.subr.bf16.mxu0 0
            %535 = vmatpush1.bf16.msra.mxu0 0
            %536 = vmatprep.subr.bf16.mxu0 0
            %537 = vmatpush1.bf16.msra.mxu0 0
            %538 = vmatprep.subr.bf16.mxu0 0
            %539 = vmatpush1.bf16.msra.mxu0 %v523
            %540 = vmatprep.subr.bf16.mxu0 0
            %541 = vmatpush1.bf16.msra.mxu0 %v522
            %542 = vmatprep.subr.bf16.mxu0 0
            %543 = vmatpush2.bf16.msra.mxu0 0
            %544 = vmatprep.subr.bf16.mxu0 0
            %545 = vmatpush2.bf16.msra.mxu0 0
            %546 = vmatprep.subr.bf16.mxu0 0
            %547 = vmatpush2.bf16.msra.mxu0 0
            %548 = vmatprep.subr.bf16.mxu0 0
            %549 = vmatpush2.bf16.msra.mxu0 0
            %550 = vmatprep.subr.bf16.mxu0 0
            %551 = vmatpush2.bf16.msra.mxu0 0
            %552 = vmatprep.subr.bf16.mxu0 0
            %553 = vmatpush2.bf16.msra.mxu0 0
            %554 = vmatprep.subr.bf16.mxu0 0
            %555 = vmatpush2.bf16.msra.mxu0 0
            %556 = vmatprep.subr.bf16.mxu0 0
            %557 = vmatpush2.bf16.msra.mxu0 0
            %558 = vmatprep.mubr.bf16.mxu0 0
            %559 = vmatmul.mubr.bf16.gmra.mxu0 %v461
            %v560 = vpop.f32.mrf.mxu0
            %v561 = vadd.f32 0.0, %v560
            %v562 = vpop.f32.mrf.mxu0
            %v563 = vpop.f32.mrf.mxu0
            %v564 = vpop.f32.mrf.mxu0
            %565 = vdwg.mxu0
            %v566 = vpack.c.bf16 %v561, %v561
            %s567 = smul.addr %s436, 4
            %s568 = scalar_lea.vmem [#allocation3], %s567
            %569 = vst.msk [vmem:[%s568] sm:$0xf] %vm506, %v566
          $region77: #{tpu_custom_call.1} parent=71 // loop_footer
            %s440 = sadd.s32 1, %s436
          $region78: #{tpu_custom_call.1} parent=71 // loop_footer_branch
            %435 = sbr.rel target = $region74
          $region79: #{tpu_custom_call.1} parent=71 // loop_exit
            _
        $region72: #{tpu_custom_call.1} parent=63 // pred_fallthru
          _
        %s570 = sld [smem:[#allocation4]]
        %s571 = sld [smem:[#allocation4 + $0x1]]
        %s572 = ssub.f32 1.0, %s571
        %s573 = smul.u32 %s31, 8
        %s574 = scalar_lea.vmem %s409, %s573
        %v575 = vld [vmem:[%s574] sm:$0xff]
        %v576 = vld [vmem:[%s6] sm:$0x1]
        %v577 = vmul.f32 %v575, %v575
        %vm578 = vcmask 261120
        %v579 = vsel %vm578, %v577, 0.0
        %580 = vadd.xlane.f32.xlu0 %v579
        %v581 = vpop.xlane.xlu0 %580
        %v582 = vrcp.pop 32.0
        %v583 = vmul.f32 %v581, %v582
        %v584 = vadd.f32 %v583, 1e-06
        %v585 = vrsqrt.pop %v584
        %v586 = vmul.f32 %v575, %v585
        %v588 = vlaneseq
        %v589 = vshrl.u32 %v588, 7
        %v590 = vsub.s32 0, %v589
        %v591 = vrot.slane %v576, %v590
        %v593 = vmul.f32 %v586, %v591
        %v594 = vpack.c.bf16 %v593, %v593
        loop: start=0, step=1, limit=4
        $region80: #{tpu_custom_call.1} parent=63 // loop_pre_header
          _
        $region81: #{tpu_custom_call.1} parent=63 // loop_header
          %s596 = sphi 0, %s600
          %p597 = scmp.ge.s32.totalorder %s596, 4
          %v601 = vphi 0.0, %v915
        $region82: #{tpu_custom_call.1} parent=63 // loop_header_branch
          %599 = sbr.rel (%p597) target = $region86
        $region83: #{tpu_custom_call.1} parent=63 // loop_body
          %s602 = smul.u32 %s596, 4
          %s603 = smul.addr %s602, 4
          %s604 = scalar_lea.vmem %s2, %s603
          %v605 = vld [vmem:[%s604] sm:$0xf]
          %v606 = vld [vmem:[%s604 + $0x4] sm:$0xf]
          %v607 = vld [vmem:[%s604 + $0x8] sm:$0xf]
          %v608 = vld [vmem:[%s604 + $0xc] sm:$0xf]
          %v613 = vunpack.c.l.b16 %v605
          %v614 = vunpack.c.l.b16 %v606
          %v615 = vunpack.c.l.b16 %v607
          %v616 = vunpack.c.l.b16 %v608
          %v617 = vpack.c.b16 %v614, %v613
          %v618 = vpack.c.b16 %v616, %v615
          %v622 = vsel %vm578, %v594, 0
          %624 = vmatprep.subr.bf16.mxu0 0
          %625 = vmatpush1.bf16.msra.mxu0 0
          %626 = vmatprep.subr.bf16.mxu0 0
          %627 = vmatpush1.bf16.msra.mxu0 0
          %628 = vmatprep.subr.bf16.mxu0 0
          %629 = vmatpush1.bf16.msra.mxu0 0
          %630 = vmatprep.subr.bf16.mxu0 0
          %631 = vmatpush1.bf16.msra.mxu0 0
          %632 = vmatprep.subr.bf16.mxu0 0
          %633 = vmatpush1.bf16.msra.mxu0 0
          %634 = vmatprep.subr.bf16.mxu0 0
          %635 = vmatpush1.bf16.msra.mxu0 0
          %636 = vmatprep.subr.bf16.mxu0 0
          %637 = vmatpush1.bf16.msra.mxu0 %v618
          %638 = vmatprep.subr.bf16.mxu0 0
          %639 = vmatpush1.bf16.msra.mxu0 %v617
          %640 = vmatprep.subr.bf16.mxu0 0
          %641 = vmatpush2.bf16.msra.mxu0 0
          %642 = vmatprep.subr.bf16.mxu0 0
          %643 = vmatpush2.bf16.msra.mxu0 0
          %644 = vmatprep.subr.bf16.mxu0 0
          %645 = vmatpush2.bf16.msra.mxu0 0
          %646 = vmatprep.subr.bf16.mxu0 0
          %647 = vmatpush2.bf16.msra.mxu0 0
          %648 = vmatprep.subr.bf16.mxu0 0
          %649 = vmatpush2.bf16.msra.mxu0 0
          %650 = vmatprep.subr.bf16.mxu0 0
          %651 = vmatpush2.bf16.msra.mxu0 0
          %652 = vmatprep.subr.bf16.mxu0 0
          %653 = vmatpush2.bf16.msra.mxu0 0
          %654 = vmatprep.subr.bf16.mxu0 0
          %655 = vmatpush2.bf16.msra.mxu0 0
          %656 = vmatprep.mubr.bf16.mxu0 0
          %657 = vmatmul.mubr.bf16.gmra.mxu0 %v622
          %v658 = vpop.f32.mrf.mxu0
          %v659 = vadd.f32 0.0, %v658
          %v660 = vpop.f32.mrf.mxu0
          %v661 = vpop.f32.mrf.mxu0
          %v662 = vpop.f32.mrf.mxu0
          %663 = vdwg.mxu0
          %v664 = vpack.c.bf16 %v659, %v659
          %s665 = smul.addr %s596, 4
          %s666 = scalar_lea.vmem [#allocation2], %s665
          %v667 = vld [vmem:[%s666] sm:$0xf]
          %vm668 = vcmask 31744
          %v670 = vsel %vm668, %v664, 0
          %v673 = vsel %vm668, %v667, 0
          %675 = vmatprep.subr.bf16.mxu0 0
          %676 = vmatpush1.bf16.xpose.msra.mxu0 0
          %677 = vmatprep.subr.bf16.mxu0 0
          %678 = vmatpush1.bf16.xpose.msra.mxu0 0
          %679 = vmatprep.subr.bf16.mxu0 0
          %680 = vmatpush1.bf16.xpose.msra.mxu0 0
          %681 = vmatprep.subr.bf16.mxu0 0
          %682 = vmatpush1.bf16.xpose.msra.mxu0 0
          %683 = vmatprep.subr.bf16.mxu0 0
          %684 = vmatpush1.bf16.xpose.msra.mxu0 0
          %685 = vmatprep.subr.bf16.mxu0 0
          %686 = vmatpush1.bf16.xpose.msra.mxu0 0
          %687 = vmatprep.subr.bf16.mxu0 0
          %688 = vmatpush1.bf16.xpose.msra.mxu0 0
          %689 = vmatprep.subr.bf16.mxu0 0
          %690 = vmatpush1.bf16.xpose.msra.mxu0 %v673
          %691 = vmatprep.subr.bf16.mxu0 0
          %692 = vmatpush2.bf16.xpose.msra.mxu0 0
          %693 = vmatprep.subr.bf16.mxu0 0
          %694 = vmatpush2.bf16.xpose.msra.mxu0 0
          %695 = vmatprep.subr.bf16.mxu0 0
          %696 = vmatpush2.bf16.xpose.msra.mxu0 0
          %697 = vmatprep.subr.bf16.mxu0 0
          %698 = vmatpush2.bf16.xpose.msra.mxu0 0
          %699 = vmatprep.subr.bf16.mxu0 0
          %700 = vmatpush2.bf16.xpose.msra.mxu0 0
          %701 = vmatprep.subr.bf16.mxu0 0
          %702 = vmatpush2.bf16.xpose.msra.mxu0 0
          %703 = vmatprep.subr.bf16.mxu0 0
          %704 = vmatpush2.bf16.xpose.msra.mxu0 0
          %705 = vmatprep.subr.bf16.mxu0 0
          %706 = vmatpush2.bf16.xpose.msra.mxu0 0
          %707 = vmatprep.mubr.bf16.mxu0 0
          %708 = vmatmul.mubr.bf16.gmra.mxu0 %v670
          %v709 = vpop.f32.mrf.mxu0
          %v710 = vadd.f32 0.0, %v709
          %v711 = vpop.f32.mrf.mxu0
          %v712 = vpop.f32.mrf.mxu0
          %v713 = vpop.f32.mrf.mxu0
          %714 = vdwg.mxu0
          %716 = vrot.lane.b32.xlu0 %v664, 124
          %v717 = vpop.permute.xlu0 %716
          %v719 = vunpack.c.l.b16 %v667
          %v720 = vpack.c.b16 %v719, %v719
          %721 = vrot.lane.b32.xlu0 %v720, 124
          %v722 = vpop.permute.xlu0 %721
          %v724 = vsel %vm668, %v717, 0
          %v727 = vsel %vm668, %v722, 0
          %729 = vmatprep.subr.bf16.mxu0 0
          %730 = vmatpush1.bf16.xpose.msra.mxu0 0
          %731 = vmatprep.subr.bf16.mxu0 0
          %732 = vmatpush1.bf16.xpose.msra.mxu0 0
          %733 = vmatprep.subr.bf16.mxu0 0
          %734 = vmatpush1.bf16.xpose.msra.mxu0 0
          %735 = vmatprep.subr.bf16.mxu0 0
          %736 = vmatpush1.bf16.xpose.msra.mxu0 0
          %737 = vmatprep.subr.bf16.mxu0 0
          %738 = vmatpush1.bf16.xpose.msra.mxu0 0
          %739 = vmatprep.subr.bf16.mxu0 0
          %740 = vmatpush1.bf16.xpose.msra.mxu0 0
          %741 = vmatprep.subr.bf16.mxu0 0
          %742 = vmatpush1.bf16.xpose.msra.mxu0 0
          %743 = vmatprep.subr.bf16.mxu0 0
          %744 = vmatpush1.bf16.xpose.msra.mxu0 %v727
          %745 = vmatprep.subr.bf16.mxu0 0
          %746 = vmatpush2.bf16.xpose.msra.mxu0 0
          %747 = vmatprep.subr.bf16.mxu0 0
          %748 = vmatpush2.bf16.xpose.msra.mxu0 0
          %749 = vmatprep.subr.bf16.mxu0 0
          %750 = vmatpush2.bf16.xpose.msra.mxu0 0
          %751 = vmatprep.subr.bf16.mxu0 0
          %752 = vmatpush2.bf16.xpose.msra.mxu0 0
          %753 = vmatprep.subr.bf16.mxu0 0
          %754 = vmatpush2.bf16.xpose.msra.mxu0 0
          %755 = vmatprep.subr.bf16.mxu0 0
          %756 = vmatpush2.bf16.xpose.msra.mxu0 0
          %757 = vmatprep.subr.bf16.mxu0 0
          %758 = vmatpush2.bf16.xpose.msra.mxu0 0
          %759 = vmatprep.subr.bf16.mxu0 0
          %760 = vmatpush2.bf16.xpose.msra.mxu0 0
          %761 = vmatprep.mubr.bf16.mxu0 0
          %762 = vmatmul.mubr.bf16.gmra.mxu0 %v724
          %v763 = vpop.f32.mrf.mxu0
          %v764 = vadd.f32 0.0, %v763
          %v765 = vpop.f32.mrf.mxu0
          %v766 = vpop.f32.mrf.mxu0
          %v767 = vpop.f32.mrf.mxu0
          %768 = vdwg.mxu0
          %vm769 = vcmask 64512
          %v770 = vsel %vm769, %v710, -inf
          %771 = vmax.xlane.f32.xlu0 %v770
          %v772 = vpop.xlane.xlu0 %771
          %v773 = vsub.f32 %v710, %v772
          %v774 = vmul.f32 %v773, 1.442695
          %v775 = vpow.pop %v774
          %v776 = vsel %vm769, %v775, 0.0
          %777 = vadd.xlane.f32.xlu0 %v776
          %v778 = vpop.xlane.xlu0 %777
          %v779 = vrcp.pop %v778
          %v780 = vmul.f32 %v775, %v779
          %v781 = vsel %vm769, %v764, -inf
          %782 = vmax.xlane.f32.xlu0 %v781
          %v783 = vpop.xlane.xlu0 %782
          %v784 = vsub.f32 %v764, %v783
          %v785 = vmul.f32 %v784, 1.442695
          %v786 = vpow.pop %v785
          %v787 = vsel %vm769, %v786, 0.0
          %788 = vadd.xlane.f32.xlu0 %v787
          %v789 = vpop.xlane.xlu0 %788
          %v790 = vrcp.pop %v789
          %v791 = vmul.f32 %v786, %v790
          %v792 = vstv %s570
          %v793 = vmul.f32 %v792, %v791
          %v794 = vsub.f32 %v780, %v793
          %v795 = vpack.c.bf16 %v794, %v794
          %s796 = smul.addr %s596, 4
          %s797 = scalar_lea.vmem [#allocation3], %s796
          %v798 = vld [vmem:[%s797] sm:$0xf]
          %v800 = vsel %vm769, %v795, 0
          %vm802 = vcmask 1043456
          %v804 = vsel %vm802, %v798, 0
          %806 = vmatprep.subr.bf16.mxu0 0
          %807 = vmatpush1.bf16.msra.mxu0 0
          %808 = vmatprep.subr.bf16.mxu0 0
          %809 = vmatpush1.bf16.msra.mxu0 0
          %810 = vmatprep.subr.bf16.mxu0 0
          %811 = vmatpush1.bf16.msra.mxu0 0
          %812 = vmatprep.subr.bf16.mxu0 0
          %813 = vmatpush1.bf16.msra.mxu0 0
          %814 = vmatprep.subr.bf16.mxu0 0
          %815 = vmatpush1.bf16.msra.mxu0 0
          %816 = vmatprep.subr.bf16.mxu0 0
          %817 = vmatpush1.bf16.msra.mxu0 0
          %818 = vmatprep.subr.bf16.mxu0 0
          %819 = vmatpush1.bf16.msra.mxu0 0
          %820 = vmatprep.subr.bf16.mxu0 0
          %821 = vmatpush1.bf16.msra.mxu0 %v804
          %822 = vmatprep.subr.bf16.mxu0 0
          %823 = vmatpush2.bf16.msra.mxu0 0
          %824 = vmatprep.subr.bf16.mxu0 0
          %825 = vmatpush2.bf16.msra.mxu0 0
          %826 = vmatprep.subr.bf16.mxu0 0
          %827 = vmatpush2.bf16.msra.mxu0 0
          %828 = vmatprep.subr.bf16.mxu0 0
          %829 = vmatpush2.bf16.msra.mxu0 0
          %830 = vmatprep.subr.bf16.mxu0 0
          %831 = vmatpush2.bf16.msra.mxu0 0
          %832 = vmatprep.subr.bf16.mxu0 0
          %833 = vmatpush2.bf16.msra.mxu0 0
          %834 = vmatprep.subr.bf16.mxu0 0
          %835 = vmatpush2.bf16.msra.mxu0 0
          %836 = vmatprep.subr.bf16.mxu0 0
          %837 = vmatpush2.bf16.msra.mxu0 0
          %838 = vmatprep.mubr.bf16.mxu0 0
          %839 = vmatmul.mubr.bf16.gmra.mxu0 %v800
          %v840 = vpop.f32.mrf.mxu0
          %v841 = vadd.f32 0.0, %v840
          %v842 = vpop.f32.mrf.mxu0
          %v843 = vpop.f32.mrf.mxu0
          %v844 = vpop.f32.mrf.mxu0
          %845 = vdwg.mxu0
          %v846 = vld [vmem:[%s7] sm:$0x1]
          %v847 = vmul.f32 %v841, %v841
          %v848 = vsel %vm769, %v847, 0.0
          %849 = vadd.xlane.f32.xlu0 %v848
          %v850 = vpop.xlane.xlu0 %849
          %v851 = vrcp.pop 8.0
          %v852 = vmul.f32 %v850, %v851
          %v853 = vadd.f32 %v852, 1e-06
          %v854 = vrsqrt.pop %v853
          %v855 = vmul.f32 %v841, %v854
          %v857 = vlaneseq
          %v858 = vshrl.u32 %v857, 7
          %v859 = vsub.s32 0, %v858
          %v860 = vrot.slane %v846, %v859
          %v862 = vmul.f32 %v855, %v860
          %v863 = vstv %s572
          %v864 = vmul.f32 %v862, %v863
          %v865 = vpack.c.bf16 %v864, %v864
          %s866 = smul.addr %s596, 4
          %s867 = scalar_lea.vmem %s5, %s866
          %v868 = vld [vmem:[%s867] sm:$0xf]
          %v870 = vsel %vm769, %v865, 0
          %v873 = vsel %vm802, %v868, 0
          %875 = vmatprep.subr.bf16.mxu0 0
          %876 = vmatpush1.bf16.msra.mxu0 0
          %877 = vmatprep.subr.bf16.mxu0 0
          %878 = vmatpush1.bf16.msra.mxu0 0
          %879 = vmatprep.subr.bf16.mxu0 0
          %880 = vmatpush1.bf16.msra.mxu0 0
          %881 = vmatprep.subr.bf16.mxu0 0
          %882 = vmatpush1.bf16.msra.mxu0 0
          %883 = vmatprep.subr.bf16.mxu0 0
          %884 = vmatpush1.bf16.msra.mxu0 0
          %885 = vmatprep.subr.bf16.mxu0 0
          %886 = vmatpush1.bf16.msra.mxu0 0
          %887 = vmatprep.subr.bf16.mxu0 0
          %888 = vmatpush1.bf16.msra.mxu0 0
          %889 = vmatprep.subr.bf16.mxu0 0
          %890 = vmatpush1.bf16.msra.mxu0 %v873
          %891 = vmatprep.subr.bf16.mxu0 0
          %892 = vmatpush2.bf16.msra.mxu0 0
          %893 = vmatprep.subr.bf16.mxu0 0
          %894 = vmatpush2.bf16.msra.mxu0 0
          %895 = vmatprep.subr.bf16.mxu0 0
          %896 = vmatpush2.bf16.msra.mxu0 0
          %897 = vmatprep.subr.bf16.mxu0 0
          %898 = vmatpush2.bf16.msra.mxu0 0
          %899 = vmatprep.subr.bf16.mxu0 0
          %900 = vmatpush2.bf16.msra.mxu0 0
          %901 = vmatprep.subr.bf16.mxu0 0
          %902 = vmatpush2.bf16.msra.mxu0 0
          %903 = vmatprep.subr.bf16.mxu0 0
          %904 = vmatpush2.bf16.msra.mxu0 0
          %905 = vmatprep.subr.bf16.mxu0 0
          %906 = vmatpush2.bf16.msra.mxu0 0
          %907 = vmatprep.mubr.bf16.mxu0 0
          %908 = vmatmul.mubr.bf16.gmra.mxu0 %v870
          %v909 = vpop.f32.mrf.mxu0
          %v910 = vadd.f32 0.0, %v909
          %v911 = vpop.f32.mrf.mxu0
          %v912 = vpop.f32.mrf.mxu0
          %v913 = vpop.f32.mrf.mxu0
          %914 = vdwg.mxu0
          %v915 = vadd.f32 %v601, %v910
        $region84: #{tpu_custom_call.1} parent=63 // loop_footer
          %s600 = sadd.s32 1, %s596
        $region85: #{tpu_custom_call.1} parent=63 // loop_footer_branch
          %595 = sbr.rel target = $region81
        $region86: #{tpu_custom_call.1} parent=63 // loop_exit
          _
        %v916 = vadd.f32 %v575, %v601
        %v917 = vld [vmem:[%s8] sm:$0x1]
        %v918 = vmul.f32 %v916, %v916
        %v919 = vsel %vm578, %v918, 0.0
        %920 = vadd.xlane.f32.xlu0 %v919
        %v921 = vpop.xlane.xlu0 %920
        %v922 = vmul.f32 %v921, %v582
        %v923 = vadd.f32 %v922, 1e-06
        %v924 = vrsqrt.pop %v923
        %v925 = vmul.f32 %v916, %v924
        %v927 = vlaneseq
        %v928 = vshrl.u32 %v927, 7
        %v929 = vsub.s32 0, %v928
        %v930 = vrot.slane %v917, %v929
        %v932 = vmul.f32 %v925, %v930
        %v933 = vpack.c.bf16 %v932, %v932
        %v934 = vld [vmem:[%s9] sm:$0xff]
        %v935 = vld [vmem:[%s9 + $0x8] sm:$0xff]
        %v936 = vld [vmem:[%s9 + $0x10] sm:$0xff]
        %v937 = vld [vmem:[%s9 + $0x18] sm:$0xff]
        %v942 = vunpack.c.l.b16 %v934
        %v943 = vunpack.c.h.b16 %v934
        %v944 = vunpack.c.l.b16 %v935
        %v945 = vunpack.c.h.b16 %v935
        %v946 = vunpack.c.l.b16 %v936
        %v947 = vunpack.c.h.b16 %v936
        %v948 = vunpack.c.l.b16 %v937
        %v949 = vunpack.c.h.b16 %v937
        %v950 = vpack.c.b16 %v944, %v942
        %v951 = vpack.c.b16 %v945, %v943
        %v952 = vpack.c.b16 %v948, %v946
        %v953 = vpack.c.b16 %v949, %v947
        %v959 = vsel %vm578, %v933, 0
        %961 = vmatprep.subr.bf16.mxu0 0
        %962 = vmatpush1.bf16.msra.mxu0 0
        %963 = vmatprep.subr.bf16.mxu0 0
        %964 = vmatpush1.bf16.msra.mxu0 0
        %965 = vmatprep.subr.bf16.mxu0 0
        %966 = vmatpush1.bf16.msra.mxu0 0
        %967 = vmatprep.subr.bf16.mxu0 0
        %968 = vmatpush1.bf16.msra.mxu0 0
        %969 = vmatprep.subr.bf16.mxu0 0
        %970 = vmatpush1.bf16.msra.mxu0 0
        %971 = vmatprep.subr.bf16.mxu0 0
        %972 = vmatpush1.bf16.msra.mxu0 0
        %973 = vmatprep.subr.bf16.mxu0 %v953
        %974 = vmatpush1.bf16.msra.mxu0 %v952
        %975 = vmatprep.subr.bf16.mxu0 %v951
        %976 = vmatpush1.bf16.msra.mxu0 %v950
        %977 = vmatprep.subr.bf16.mxu0 0
        %978 = vmatpush2.bf16.msra.mxu0 0
        %979 = vmatprep.subr.bf16.mxu0 0
        %980 = vmatpush2.bf16.msra.mxu0 0
        %981 = vmatprep.subr.bf16.mxu0 0
        %982 = vmatpush2.bf16.msra.mxu0 0
        %983 = vmatprep.subr.bf16.mxu0 0
        %984 = vmatpush2.bf16.msra.mxu0 0
        %985 = vmatprep.subr.bf16.mxu0 0
        %986 = vmatpush2.bf16.msra.mxu0 0
        %987 = vmatprep.subr.bf16.mxu0 0
        %988 = vmatpush2.bf16.msra.mxu0 0
        %989 = vmatprep.subr.bf16.mxu0 0
        %990 = vmatpush2.bf16.msra.mxu0 0
        %991 = vmatprep.subr.bf16.mxu0 0
        %992 = vmatpush2.bf16.msra.mxu0 0
        %993 = vmatprep.mubr.bf16.mxu0 0
        %994 = vmatmul.mubr.bf16.gmra.mxu0 %v959
        %v995 = vpop.f32.mrf.mxu0
        %v996 = vadd.f32 0.0, %v995
        %v997 = vpop.f32.mrf.mxu0
        %v998 = vadd.f32 0.0, %v997
        %v999 = vpop.f32.mrf.mxu0
        %v1000 = vpop.f32.mrf.mxu0
        %1001 = vdwg.mxu0
        %v1002 = vxor.u32 %v996, 2147483648
        %v1003 = vmul.f32 %v1002, 1.442695
        %v1004 = vpow.pop %v1003
        %v1005 = vadd.f32 %v1004, 1.0
        %v1006 = vrcp.pop %v1005
        %v1007 = vmul.f32 1.0, %v1006
        %v1008 = vmul.f32 %v996, %v1007
        %v1009 = vmul.f32 %v1008, %v998
        %v1010 = vpack.c.bf16 %v1009, %v1009
        %v1011 = vld [vmem:[%s10] sm:$0xf]
        %v1012 = vld [vmem:[%s10 + $0x4] sm:$0xf]
        %v1013 = vld [vmem:[%s10 + $0x8] sm:$0xf]
        %v1014 = vld [vmem:[%s10 + $0xc] sm:$0xf]
        %v1015 = vld [vmem:[%s10 + $0x10] sm:$0xf]
        %v1016 = vld [vmem:[%s10 + $0x14] sm:$0xf]
        %v1017 = vld [vmem:[%s10 + $0x18] sm:$0xf]
        %v1018 = vld [vmem:[%s10 + $0x1c] sm:$0xf]
        %v1019 = vld [vmem:[%s10 + $0x20] sm:$0xf]
        %v1020 = vld [vmem:[%s10 + $0x24] sm:$0xf]
        %v1021 = vld [vmem:[%s10 + $0x28] sm:$0xf]
        %v1022 = vld [vmem:[%s10 + $0x2c] sm:$0xf]
        %v1023 = vld [vmem:[%s10 + $0x30] sm:$0xf]
        %v1024 = vld [vmem:[%s10 + $0x34] sm:$0xf]
        %v1025 = vld [vmem:[%s10 + $0x38] sm:$0xf]
        %v1026 = vld [vmem:[%s10 + $0x3c] sm:$0xf]
        %v1043 = vunpack.c.l.b16 %v1011
        %v1044 = vunpack.c.l.b16 %v1012
        %v1045 = vunpack.c.l.b16 %v1013
        %v1046 = vunpack.c.l.b16 %v1014
        %v1047 = vunpack.c.l.b16 %v1015
        %v1048 = vunpack.c.l.b16 %v1016
        %v1049 = vunpack.c.l.b16 %v1017
        %v1050 = vunpack.c.l.b16 %v1018
        %v1051 = vunpack.c.l.b16 %v1019
        %v1052 = vunpack.c.l.b16 %v1020
        %v1053 = vunpack.c.l.b16 %v1021
        %v1054 = vunpack.c.l.b16 %v1022
        %v1055 = vunpack.c.l.b16 %v1023
        %v1056 = vunpack.c.l.b16 %v1024
        %v1057 = vunpack.c.l.b16 %v1025
        %v1058 = vunpack.c.l.b16 %v1026
        %v1059 = vpack.c.b16 %v1044, %v1043
        %v1060 = vpack.c.b16 %v1046, %v1045
        %v1061 = vpack.c.b16 %v1048, %v1047
        %v1062 = vpack.c.b16 %v1050, %v1049
        %v1063 = vpack.c.b16 %v1052, %v1051
        %v1064 = vpack.c.b16 %v1054, %v1053
        %v1065 = vpack.c.b16 %v1056, %v1055
        %v1066 = vpack.c.b16 %v1058, %v1057
        %1075 = vmatprep.subr.bf16.mxu0 0
        %1076 = vmatpush1.bf16.msra.mxu0 %v1066
        %1077 = vmatprep.subr.bf16.mxu0 0
        %1078 = vmatpush1.bf16.msra.mxu0 %v1065
        %1079 = vmatprep.subr.bf16.mxu0 0
        %1080 = vmatpush1.bf16.msra.mxu0 %v1064
        %1081 = vmatprep.subr.bf16.mxu0 0
        %1082 = vmatpush1.bf16.msra.mxu0 %v1063
        %1083 = vmatprep.subr.bf16.mxu0 0
        %1084 = vmatpush1.bf16.msra.mxu0 %v1062
        %1085 = vmatprep.subr.bf16.mxu0 0
        %1086 = vmatpush1.bf16.msra.mxu0 %v1061
        %1087 = vmatprep.subr.bf16.mxu0 0
        %1088 = vmatpush1.bf16.msra.mxu0 %v1060
        %1089 = vmatprep.subr.bf16.mxu0 0
        %1090 = vmatpush1.bf16.msra.mxu0 %v1059
        %1091 = vmatprep.subr.bf16.mxu0 0
        %1092 = vmatpush2.bf16.msra.mxu0 0
        %1093 = vmatprep.subr.bf16.mxu0 0
        %1094 = vmatpush2.bf16.msra.mxu0 0
        %1095 = vmatprep.subr.bf16.mxu0 0
        %1096 = vmatpush2.bf16.msra.mxu0 0
        %1097 = vmatprep.subr.bf16.mxu0 0
        %1098 = vmatpush2.bf16.msra.mxu0 0
        %1099 = vmatprep.subr.bf16.mxu0 0
        %1100 = vmatpush2.bf16.msra.mxu0 0
        %1101 = vmatprep.subr.bf16.mxu0 0
        %1102 = vmatpush2.bf16.msra.mxu0 0
        %1103 = vmatprep.subr.bf16.mxu0 0
        %1104 = vmatpush2.bf16.msra.mxu0 0
        %1105 = vmatprep.subr.bf16.mxu0 0
        %1106 = vmatpush2.bf16.msra.mxu0 0
        %1107 = vmatprep.mubr.bf16.mxu0 0
        %1108 = vmatmul.mubr.bf16.gmra.mxu0 %v1010
        %v1109 = vpop.f32.mrf.mxu0
        %v1110 = vadd.f32 0.0, %v1109
        %v1111 = vpop.f32.mrf.mxu0
        %v1112 = vpop.f32.mrf.mxu0
        %v1113 = vpop.f32.mrf.mxu0
        %1114 = vdwg.mxu0
        %v1115 = vadd.f32 %v916, %v1110
        %1116 = vst.msk [vmem:[%s405] sm:$0xff] %vm578, %v1115
        %s1117 = sand.u32 %s284, 1
        %s1118 = scalar_lea.sflag [#allocation5], %s1117
        %s1119 = sand.u32 %s284, 1
        %s1120 = smul.addr %s1119, 8
        %s1121 = scalar_lea.vmem [#allocation7], %s1120
        // Predicated region
        $region87: #{tpu_custom_call.1} parent=63 // pred_check
          %p1122 = pneg %p294
        $region88: #{tpu_custom_call.1} parent=63 // pred_check_branch
          %1124 = sbr.rel (%p1122) target = $region90
        $region89: #{tpu_custom_call.1} parent=63 // pred_region
          %s1126 = ssub.s32 128, 128
          %1127 = vsyncadd %s1118, %s1126
          %s1128 = sadd.s32 %s31, %s30
          %s1129 = smul.addr %s1128, 128
          %s1130 = scalar_lea.hbm %s11, %s1129
          %s1132 = sshll.u32 %s1121, 4
          %s1133 = int_to_ptr.vmem [resolvable:$true] %s1132
          %1135 = dma.vmem_to_hbm [thread:$0]  %s1133, 128, %s1130, %s1118
        $region90: #{tpu_custom_call.1} parent=63 // pred_fallthru
          _
      $region64: #{tpu_custom_call.1} parent=5 // pred_fallthru
        _
      %p1136 = scmp.le.s32.totalorder 2, %s21
      // Predicated region
      $region91: #{tpu_custom_call.1} parent=5 // pred_check
        %p1137 = pneg %p1136
      $region92: #{tpu_custom_call.1} parent=5 // pred_check_branch
        %1139 = sbr.rel (%p1137) target = $region94
      $region93: #{tpu_custom_call.1} parent=5 // pred_region
        %s1140 = ssub.s32 %s21, 2
        // Predicated region
        $region95: #{tpu_custom_call.1} parent=93 // pred_check
          %p1141 = pneg %p300
        $region96: #{tpu_custom_call.1} parent=93 // pred_check_branch
          %1143 = sbr.rel (%p1141) target = $region98
        $region97: #{tpu_custom_call.1} parent=93 // pred_region
          %s1144 = sand.u32 %s285, 1
          %s1145 = scalar_lea.sflag [#allocation5], %s1144
          %s1146 = sand.u32 %s285, 1
          %s1147 = smul.addr %s1146, 8
          %s1148 = scalar_lea.vmem [#allocation7], %s1147
          %1149 = dma.done %s1145, 128
        $region98: #{tpu_custom_call.1} parent=93 // pred_fallthru
          _
      $region94: #{tpu_custom_call.1} parent=5 // pred_fallthru
        _
    $region6: #{tpu_custom_call.1} parent=1 // loop_footer
      %s25 = sadd.s32 1, %s21
    $region7: #{tpu_custom_call.1} parent=1 // loop_footer_branch
      %20 = sbr.rel target = $region3
    $region8: #{tpu_custom_call.1} parent=1 // loop_exit
      _
    %1150 = vsyncpa [#allocation5], 1
    %s1151 = scalar_lea.sflag [#allocation5], 1
    %1152 = vsyncpa %s1151, 1
    %1153 = vsyncpa [#allocation6], 1
    %s1154 = scalar_lea.sflag [#allocation6], 1
    %1155 = vsyncpa %s1154, 1

</llo_original>
